<compile_context>
chip_gen: v7x
topology: tpu7x:2x2x1
jax: 0.10.0
libtpu: 0.0.40
codegen_flags: <defaults>
</compile_context>

<pallas_src>
import functools

import numpy as np
import jax
import jax.numpy as jnp
from jax.experimental import pallas as pl
from jax.experimental.pallas import tpu as pltpu


def _round_up_to_8(n: int) -> int:
    return ((n + 7) // 8) * 8


def _inverted_bottleneck_kernel(x_ref, w1_ref, b1_ref, w2_ref, b2_ref, m_ref,
                                o_ref, *, W, Nb, C):
    # x_ref : (Nb, Cp, HW)   Nb images, channel-padded, spatially flat
    # w1_ref: (HCp, 9*Cp)    conv1 weight, column = (kh*3 + kw)*Cp + ci
    # b1_ref: (HCp, 1)
    # w2_ref: (Cp, 9*HCp)    conv2 weight, column = (kh*3 + kw)*HCp + cj
    # b2_ref: (Cp, 1)
    # m_ref : (9, Nb*HW)     0/1 boundary masks (zero padding), tap-major
    # o_ref : (Nb, C, HW)
    HW = x_ref.shape[2]
    L = Nb * HW

    # Place the Nb images side-by-side along the lane axis.  HW = 256 is a
    # multiple of 128, so this is a vreg-aligned lane concat (no HBM transpose
    # and no in-kernel sublane relayout).
    if Nb == 1:
        x = x_ref[0]                                            # (Cp, L)
    else:
        x = jnp.concatenate([x_ref[n] for n in range(Nb)], axis=1)

    taps = [(oh, ow) for oh in (-1, 0, 1) for ow in (-1, 0, 1)]

    def im2col(a):
        # a: (rows, L) -> (9*rows, L), tap-major.  Each tap is an XLU lane
        # rotation plus a precomputed boundary mask; cross-image (and global)
        # wrap positions are exactly the masked ones, so the flat roll is safe.
        pieces = []
        for t, (oh, ow) in enumerate(taps):
            s = oh * W + ow
            if s == 0:
                pieces.append(a)            # center tap: shift 0, mask == 1
            else:
                rolled = pltpu.roll(a, shift=(-s) % L, axis=1)   # jnp.roll semantics
                pieces.append(rolled * m_ref[t:t + 1, :])
        return jnp.concatenate(pieces, axis=0)

    # ---- conv1: 3x3, C -> HC, bias, SiLU (one im2col matmul on the MXU) ----
    z = jnp.dot(w1_ref[...], im2col(x),
                preferred_element_type=jnp.float32,
                precision=jax.lax.Precision.HIGHEST)             # (HCp, L)
    z = z + b1_ref[...]
    z = z * jax.nn.sigmoid(z)                                    # SiLU (EUP)

    # ---- conv2: 3x3, HC -> C, bias (second im2col matmul) ----
    y = jnp.dot(w2_ref[...], im2col(z),
                preferred_element_type=jnp.float32,
                precision=jax.lax.Precision.HIGHEST)             # (Cp, L)
    y = (y + b2_ref[...]).astype(o_ref.dtype)

    # Un-fold the batch: lane-aligned static slices back into the NCHW block.
    for n in range(Nb):
        o_ref[n] = y[:C, n * HW:(n + 1) * HW]


@functools.partial(jax.jit, static_argnames=("batch_per_step",))
def inverted_bottleneck(x, conv1_w, conv1_b, conv2_w, conv2_b, *,
                        batch_per_step=None):
    """Pallas InvertedBottleneck forward. x: (N, C, H, W) float32 (NCHW).

    batch_per_step: images folded into one grid step.  None -> N (one big step,
    best on single-TC v5e/v6e).  On v7x pass N // 2 to keep a 2-wide "parallel"
    grid so both TensorCores are busy.
    """
    N, C, H, W = x.shape
    HC = conv1_w.shape[0]
    HW = H * W
    Cp = _round_up_to_8(C)
    HCp = _round_up_to_8(HC)

    Nb = N if batch_per_step is None else batch_per_step
    assert N % Nb == 0, (N, Nb)
    L = Nb * HW

    # Free reshape + tiny channel pad (no spatial padding, no activation
    # transpose): lane axis stays H*W, sublanes become 8-aligned channels.
    x_flat = x.reshape(N, C, HW).astype(jnp.float32)
    if Cp != C:
        x_flat = jnp.pad(x_flat, ((0, 0), (0, Cp - C), (0, 0)))

    # One-off parameter repack: OIHW -> (Cout_p, 9*Cin_p), col = (kh*3+kw)*Cin_p + ci.
    w1 = jnp.transpose(conv1_w, (0, 2, 3, 1)).astype(jnp.float32)       # (HC,3,3,C)
    w1 = jnp.pad(w1, ((0, HCp - HC), (0, 0), (0, 0), (0, Cp - C)))
    w1 = w1.reshape(HCp, 9 * Cp)
    b1 = jnp.pad(conv1_b.reshape(HC, 1).astype(jnp.float32), ((0, HCp - HC), (0, 0)))

    w2 = jnp.transpose(conv2_w, (0, 2, 3, 1)).astype(jnp.float32)       # (C,3,3,HC)
    w2 = jnp.pad(w2, ((0, Cp - C), (0, 0), (0, 0), (0, HCp - HC)))
    w2 = w2.reshape(Cp, 9 * HCp)
    b2 = jnp.pad(conv2_b.reshape(C, 1).astype(jnp.float32), ((0, Cp - C), (0, 0)))

    # Boundary masks, hoisted out of the kernel as a compile-time constant
    # (9, Nb*HW) fp32 array.  Lane index = n*HW + h*W + w.
    p = np.arange(L) % HW
    hh = p // W
    ww = p % W
    rows = []
    for oh in (-1, 0, 1):
        for ow in (-1, 0, 1):
            rows.append((hh + oh >= 0) & (hh + oh < H) &
                        (ww + ow >= 0) & (ww + ow < W))
    masks = jnp.asarray(np.stack(rows).astype(np.float32))              # (9, L)

    kernel = functools.partial(_inverted_bottleneck_kernel, W=W, Nb=Nb, C=C)
    out_flat = pl.pallas_call(
        kernel,
        out_shape=jax.ShapeDtypeStruct((N, C, HW), jnp.float32),
        grid=(N // Nb,),
        in_specs=[
            pl.BlockSpec((Nb, Cp, HW), lambda i: (i, 0, 0)),
            pl.BlockSpec((HCp, 9 * Cp), lambda i: (0, 0)),
            pl.BlockSpec((HCp, 1), lambda i: (0, 0)),
            pl.BlockSpec((Cp, 9 * HCp), lambda i: (0, 0)),
            pl.BlockSpec((Cp, 1), lambda i: (0, 0)),
            pl.BlockSpec((9, L), lambda i: (0, 0)),
        ],
        out_specs=pl.BlockSpec((Nb, C, HW), lambda i: (i, 0, 0)),
        compiler_params=pltpu.CompilerParams(
            dimension_semantics=("parallel",),
        ),
    )(x_flat, w1, b1, w2, b2, masks)

    return out_flat.reshape(N, C, H, W)


def inverted_bottleneck_reference(x, conv1_w, conv1_b, conv2_w, conv2_b):
    """Pure-JAX reference mirroring the PyTorch module (NCHW cross-correlation)."""
    z = jax.lax.conv_general_dilated(
        x, conv1_w, window_strides=(1, 1), padding=[(1, 1), (1, 1)],
        dimension_numbers=("NCHW", "OIHW", "NCHW"))
    z = z + conv1_b.reshape(1, -1, 1, 1)
    z = z * jax.nn.sigmoid(z)                                   # SiLU
    z = jax.lax.conv_general_dilated(
        z, conv2_w, window_strides=(1, 1), padding=[(1, 1), (1, 1)],
        dimension_numbers=("NCHW", "OIHW", "NCHW"))
    return z + conv2_b.reshape(1, -1, 1, 1)


if __name__ == "__main__":
    key = jax.random.PRNGKey(0)
    k_x, k_w1, k_b1, k_w2, k_b2 = jax.random.split(key, 5)

    N, C, H, W = 2, 4, 16, 16
    hidden_ratio = 4                      # InvertedBottleneck(num_channels=4, hidden_ratio=4)
    HC = hidden_ratio * C

    x = jax.random.normal(k_x, (N, C, H, W), dtype=jnp.float32)
    conv1_w = jax.random.normal(k_w1, (HC, C, 3, 3), dtype=jnp.float32) * 0.2
    conv1_b = jax.random.normal(k_b1, (HC,), dtype=jnp.float32) * 0.1
    conv2_w = jax.random.normal(k_w2, (C, HC, 3, 3), dtype=jnp.float32) * 0.2
    conv2_b = jax.random.normal(k_b2, (C,), dtype=jnp.float32) * 0.1

    out = jax.block_until_ready(
        inverted_bottleneck(x, conv1_w, conv1_b, conv2_w, conv2_b))
    ref = jax.block_until_ready(
        inverted_bottleneck_reference(x, conv1_w, conv1_b, conv2_w, conv2_b))

    assert out.shape == (N, C, H, W), out.shape
    max_err = float(jnp.max(jnp.abs(out - ref)))
    assert jnp.allclose(out, ref, atol=1e-4, rtol=1e-4), max_err

    print("KERNEL_OK")
</pallas_src>

<mosaic_0001>
module attributes {stable_mosaic.version = 11 : i64} {
  func.func @_inverted_bottleneck_kernel(%arg0: i32, %arg1: memref<2x8x256xf32, #tpu.memory_space<vmem>>, %arg2: memref<16x72xf32, #tpu.memory_space<vmem>>, %arg3: memref<16x1xf32, #tpu.memory_space<vmem>>, %arg4: memref<8x144xf32, #tpu.memory_space<vmem>>, %arg5: memref<8x1xf32, #tpu.memory_space<vmem>>, %arg6: memref<9x512xf32, #tpu.memory_space<vmem>>, %arg7: memref<2x4x256xf32, #tpu.memory_space<vmem>>) attributes {dimension_semantics = [#tpu.dimension_semantics<parallel>], iteration_bounds = array<i64: 1>, scalar_prefetch = 0 : i64, scratch_operands = 0 : i64, tpu.core_type = #tpu.core_type<tc>, window_params = [{transform_indices = @transform_0, window_bounds = array<i64: 2, 8, 256>}, {pipeline_mode = #tpu.pipeline_mode<synchronous>, transform_indices = @transform_1, window_bounds = array<i64: 16, 72>}, {pipeline_mode = #tpu.pipeline_mode<synchronous>, transform_indices = @transform_2, window_bounds = array<i64: 16, 1>}, {pipeline_mode = #tpu.pipeline_mode<synchronous>, transform_indices = @transform_3, window_bounds = array<i64: 8, 144>}, {pipeline_mode = #tpu.pipeline_mode<synchronous>, transform_indices = @transform_4, window_bounds = array<i64: 8, 1>}, {pipeline_mode = #tpu.pipeline_mode<synchronous>, transform_indices = @transform_5, window_bounds = array<i64: 9, 512>}, {transform_indices = @transform_6, window_bounds = array<i64: 2, 4, 256>}]} {
    %c0 = arith.constant 0 : index
    %c0_0 = arith.constant 0 : index
    %c0_1 = arith.constant 0 : index
    %0 = vector.load %arg1[%c0, %c0_0, %c0_1] : memref<2x8x256xf32, #tpu.memory_space<vmem>>, vector<1x8x256xf32>
    %1 = vector.shape_cast %0 : vector<1x8x256xf32> to vector<8x256xf32>
    %c1 = arith.constant 1 : index
    %c0_2 = arith.constant 0 : index
    %c0_3 = arith.constant 0 : index
    %2 = vector.load %arg1[%c1, %c0_2, %c0_3] : memref<2x8x256xf32, #tpu.memory_space<vmem>>, vector<1x8x256xf32>
    %3 = vector.shape_cast %2 : vector<1x8x256xf32> to vector<8x256xf32>
    %4 = tpu.concatenate %1, %3 in 1 : vector<8x256xf32>, vector<8x256xf32> -> vector<8x512xf32>
    %c0_4 = arith.constant 0 : index
    %c0_5 = arith.constant 0 : index
    %5 = vector.load %arg2[%c0_4, %c0_5] : memref<16x72xf32, #tpu.memory_space<vmem>>, vector<16x72xf32>
    %c17_i32 = arith.constant 17 : i32
    %6 = tpu.dynamic_rotate %4 by %c17_i32 dim 1 : vector<8x512xf32>, i32 -> vector<8x512xf32>
    %c0_6 = arith.constant 0 : index
    %c0_7 = arith.constant 0 : index
    %7 = vector.load %arg6[%c0_6, %c0_7] : memref<9x512xf32, #tpu.memory_space<vmem>>, vector<1x512xf32>
    %8 = vector.broadcast %7 : vector<1x512xf32> to vector<8x512xf32>
    %9 = arith.mulf %6, %8 : vector<8x512xf32>
    %c16_i32 = arith.constant 16 : i32
    %10 = tpu.dynamic_rotate %4 by %c16_i32 dim 1 : vector<8x512xf32>, i32 -> vector<8x512xf32>
    %c1_8 = arith.constant 1 : index
    %c0_9 = arith.constant 0 : index
    %11 = vector.load %arg6[%c1_8, %c0_9] : memref<9x512xf32, #tpu.memory_space<vmem>>, vector<1x512xf32>
    %12 = vector.broadcast %11 : vector<1x512xf32> to vector<8x512xf32>
    %13 = arith.mulf %10, %12 : vector<8x512xf32>
    %c15_i32 = arith.constant 15 : i32
    %14 = tpu.dynamic_rotate %4 by %c15_i32 dim 1 : vector<8x512xf32>, i32 -> vector<8x512xf32>
    %c2 = arith.constant 2 : index
    %c0_10 = arith.constant 0 : index
    %15 = vector.load %arg6[%c2, %c0_10] : memref<9x512xf32, #tpu.memory_space<vmem>>, vector<1x512xf32>
    %16 = vector.broadcast %15 : vector<1x512xf32> to vector<8x512xf32>
    %17 = arith.mulf %14, %16 : vector<8x512xf32>
    %c1_i32 = arith.constant 1 : i32
    %18 = tpu.dynamic_rotate %4 by %c1_i32 dim 1 : vector<8x512xf32>, i32 -> vector<8x512xf32>
    %c3 = arith.constant 3 : index
    %c0_11 = arith.constant 0 : index
    %19 = vector.load %arg6[%c3, %c0_11] : memref<9x512xf32, #tpu.memory_space<vmem>>, vector<1x512xf32>
    %20 = vector.broadcast %19 : vector<1x512xf32> to vector<8x512xf32>
    %21 = arith.mulf %18, %20 : vector<8x512xf32>
    %c511_i32 = arith.constant 511 : i32
    %22 = tpu.dynamic_rotate %4 by %c511_i32 dim 1 : vector<8x512xf32>, i32 -> vector<8x512xf32>
    %c5 = arith.constant 5 : index
    %c0_12 = arith.constant 0 : index
    %23 = vector.load %arg6[%c5, %c0_12] : memref<9x512xf32, #tpu.memory_space<vmem>>, vector<1x512xf32>
    %24 = vector.broadcast %23 : vector<1x512xf32> to vector<8x512xf32>
    %25 = arith.mulf %22, %24 : vector<8x512xf32>
    %c497_i32 = arith.constant 497 : i32
    %26 = tpu.dynamic_rotate %4 by %c497_i32 dim 1 : vector<8x512xf32>, i32 -> vector<8x512xf32>
    %c6 = arith.constant 6 : index
    %c0_13 = arith.constant 0 : index
    %27 = vector.load %arg6[%c6, %c0_13] : memref<9x512xf32, #tpu.memory_space<vmem>>, vector<1x512xf32>
    %28 = vector.broadcast %27 : vector<1x512xf32> to vector<8x512xf32>
    %29 = arith.mulf %26, %28 : vector<8x512xf32>
    %c496_i32 = arith.constant 496 : i32
    %30 = tpu.dynamic_rotate %4 by %c496_i32 dim 1 : vector<8x512xf32>, i32 -> vector<8x512xf32>
    %c7 = arith.constant 7 : index
    %c0_14 = arith.constant 0 : index
    %31 = vector.load %arg6[%c7, %c0_14] : memref<9x512xf32, #tpu.memory_space<vmem>>, vector<1x512xf32>
    %32 = vector.broadcast %31 : vector<1x512xf32> to vector<8x512xf32>
    %33 = arith.mulf %30, %32 : vector<8x512xf32>
    %c495_i32 = arith.constant 495 : i32
    %34 = tpu.dynamic_rotate %4 by %c495_i32 dim 1 : vector<8x512xf32>, i32 -> vector<8x512xf32>
    %c8 = arith.constant 8 : index
    %c0_15 = arith.constant 0 : index
    %35 = vector.load %arg6[%c8, %c0_15] : memref<9x512xf32, #tpu.memory_space<vmem>>, vector<1x512xf32>
    %36 = vector.broadcast %35 : vector<1x512xf32> to vector<8x512xf32>
    %37 = arith.mulf %34, %36 : vector<8x512xf32>
    %38 = tpu.concatenate %9, %13, %17, %21, %4, %25, %29, %33, %37 in 0 : vector<8x512xf32>, vector<8x512xf32>, vector<8x512xf32>, vector<8x512xf32>, vector<8x512xf32>, vector<8x512xf32>, vector<8x512xf32>, vector<8x512xf32>, vector<8x512xf32> -> vector<72x512xf32>
    %cst = arith.constant dense<0.000000e+00> : vector<16x512xf32>
    %39 = tpu.matmul %5, %38, %cst {dimension_numbers = #tpu.dot_dimension_numbers<[1], [0], [0], [1], [0, 0, 1, 1], [], []>, precision = #tpu.contract_precision<fp32>} : vector<16x72xf32>, vector<72x512xf32>, vector<16x512xf32> -> vector<16x512xf32>
    %c0_16 = arith.constant 0 : index
    %c0_17 = arith.constant 0 : index
    %40 = vector.load %arg3[%c0_16, %c0_17] : memref<16x1xf32, #tpu.memory_space<vmem>>, vector<16x1xf32>
    %41 = vector.broadcast %40 : vector<16x1xf32> to vector<16x512xf32>
    %42 = arith.addf %39, %41 : vector<16x512xf32>
    %43 = arith.negf %42 : vector<16x512xf32>
    %44 = math.exp %43 : vector<16x512xf32>
    %cst_18 = arith.constant 1.000000e+00 : f32
    %45 = vector.broadcast %cst_18 : f32 to vector<16x512xf32>
    %46 = arith.addf %45, %44 : vector<16x512xf32>
    %47 = arith.divf %45, %46 : vector<16x512xf32>
    %48 = arith.mulf %42, %47 : vector<16x512xf32>
    %c0_19 = arith.constant 0 : index
    %c0_20 = arith.constant 0 : index
    %49 = vector.load %arg4[%c0_19, %c0_20] : memref<8x144xf32, #tpu.memory_space<vmem>>, vector<8x144xf32>
    %c17_i32_21 = arith.constant 17 : i32
    %50 = tpu.dynamic_rotate %48 by %c17_i32_21 dim 1 : vector<16x512xf32>, i32 -> vector<16x512xf32>
    %c0_22 = arith.constant 0 : index
    %c0_23 = arith.constant 0 : index
    %51 = vector.load %arg6[%c0_22, %c0_23] : memref<9x512xf32, #tpu.memory_space<vmem>>, vector<1x512xf32>
    %52 = vector.broadcast %51 : vector<1x512xf32> to vector<16x512xf32>
    %53 = arith.mulf %50, %52 : vector<16x512xf32>
    %c16_i32_24 = arith.constant 16 : i32
    %54 = tpu.dynamic_rotate %48 by %c16_i32_24 dim 1 : vector<16x512xf32>, i32 -> vector<16x512xf32>
    %c1_25 = arith.constant 1 : index
    %c0_26 = arith.constant 0 : index
    %55 = vector.load %arg6[%c1_25, %c0_26] : memref<9x512xf32, #tpu.memory_space<vmem>>, vector<1x512xf32>
    %56 = vector.broadcast %55 : vector<1x512xf32> to vector<16x512xf32>
    %57 = arith.mulf %54, %56 : vector<16x512xf32>
    %c15_i32_27 = arith.constant 15 : i32
    %58 = tpu.dynamic_rotate %48 by %c15_i32_27 dim 1 : vector<16x512xf32>, i32 -> vector<16x512xf32>
    %c2_28 = arith.constant 2 : index
    %c0_29 = arith.constant 0 : index
    %59 = vector.load %arg6[%c2_28, %c0_29] : memref<9x512xf32, #tpu.memory_space<vmem>>, vector<1x512xf32>
    %60 = vector.broadcast %59 : vector<1x512xf32> to vector<16x512xf32>
    %61 = arith.mulf %58, %60 : vector<16x512xf32>
    %c1_i32_30 = arith.constant 1 : i32
    %62 = tpu.dynamic_rotate %48 by %c1_i32_30 dim 1 : vector<16x512xf32>, i32 -> vector<16x512xf32>
    %c3_31 = arith.constant 3 : index
    %c0_32 = arith.constant 0 : index
    %63 = vector.load %arg6[%c3_31, %c0_32] : memref<9x512xf32, #tpu.memory_space<vmem>>, vector<1x512xf32>
    %64 = vector.broadcast %63 : vector<1x512xf32> to vector<16x512xf32>
    %65 = arith.mulf %62, %64 : vector<16x512xf32>
    %c511_i32_33 = arith.constant 511 : i32
    %66 = tpu.dynamic_rotate %48 by %c511_i32_33 dim 1 : vector<16x512xf32>, i32 -> vector<16x512xf32>
    %c5_34 = arith.constant 5 : index
    %c0_35 = arith.constant 0 : index
    %67 = vector.load %arg6[%c5_34, %c0_35] : memref<9x512xf32, #tpu.memory_space<vmem>>, vector<1x512xf32>
    %68 = vector.broadcast %67 : vector<1x512xf32> to vector<16x512xf32>
    %69 = arith.mulf %66, %68 : vector<16x512xf32>
    %c497_i32_36 = arith.constant 497 : i32
    %70 = tpu.dynamic_rotate %48 by %c497_i32_36 dim 1 : vector<16x512xf32>, i32 -> vector<16x512xf32>
    %c6_37 = arith.constant 6 : index
    %c0_38 = arith.constant 0 : index
    %71 = vector.load %arg6[%c6_37, %c0_38] : memref<9x512xf32, #tpu.memory_space<vmem>>, vector<1x512xf32>
    %72 = vector.broadcast %71 : vector<1x512xf32> to vector<16x512xf32>
    %73 = arith.mulf %70, %72 : vector<16x512xf32>
    %c496_i32_39 = arith.constant 496 : i32
    %74 = tpu.dynamic_rotate %48 by %c496_i32_39 dim 1 : vector<16x512xf32>, i32 -> vector<16x512xf32>
    %c7_40 = arith.constant 7 : index
    %c0_41 = arith.constant 0 : index
    %75 = vector.load %arg6[%c7_40, %c0_41] : memref<9x512xf32, #tpu.memory_space<vmem>>, vector<1x512xf32>
    %76 = vector.broadcast %75 : vector<1x512xf32> to vector<16x512xf32>
    %77 = arith.mulf %74, %76 : vector<16x512xf32>
    %c495_i32_42 = arith.constant 495 : i32
    %78 = tpu.dynamic_rotate %48 by %c495_i32_42 dim 1 : vector<16x512xf32>, i32 -> vector<16x512xf32>
    %c8_43 = arith.constant 8 : index
    %c0_44 = arith.constant 0 : index
    %79 = vector.load %arg6[%c8_43, %c0_44] : memref<9x512xf32, #tpu.memory_space<vmem>>, vector<1x512xf32>
    %80 = vector.broadcast %79 : vector<1x512xf32> to vector<16x512xf32>
    %81 = arith.mulf %78, %80 : vector<16x512xf32>
    %82 = tpu.concatenate %53, %57, %61, %65, %48, %69, %73, %77, %81 in 0 : vector<16x512xf32>, vector<16x512xf32>, vector<16x512xf32>, vector<16x512xf32>, vector<16x512xf32>, vector<16x512xf32>, vector<16x512xf32>, vector<16x512xf32>, vector<16x512xf32> -> vector<144x512xf32>
    %cst_45 = arith.constant dense<0.000000e+00> : vector<8x512xf32>
    %83 = tpu.matmul %49, %82, %cst_45 {dimension_numbers = #tpu.dot_dimension_numbers<[1], [0], [0], [1], [0, 0, 1, 1], [], []>, precision = #tpu.contract_precision<fp32>} : vector<8x144xf32>, vector<144x512xf32>, vector<8x512xf32> -> vector<8x512xf32>
    %c0_46 = arith.constant 0 : index
    %c0_47 = arith.constant 0 : index
    %84 = vector.load %arg5[%c0_46, %c0_47] : memref<8x1xf32, #tpu.memory_space<vmem>>, vector<8x1xf32>
    %85 = vector.broadcast %84 : vector<8x1xf32> to vector<8x512xf32>
    %86 = arith.addf %83, %85 : vector<8x512xf32>
    %87 = vector.extract_strided_slice %86 {offsets = [0, 0], sizes = [4, 256], strides = [1, 1]} : vector<8x512xf32> to vector<4x256xf32>
    %c0_48 = arith.constant 0 : index
    %c0_49 = arith.constant 0 : index
    %c0_50 = arith.constant 0 : index
    %88 = vector.load %arg7[%c0_48, %c0_49, %c0_50] : memref<2x4x256xf32, #tpu.memory_space<vmem>>, vector<1x4x256xf32>
    %89 = vector.shape_cast %88 : vector<1x4x256xf32> to vector<4x256xf32>
    %90 = vector.shape_cast %87 : vector<4x256xf32> to vector<1x4x256xf32>
    tpu.vector_store %arg7[%c0_48, %c0_49, %c0_50], %90 {strides = array<i32>} : memref<2x4x256xf32, #tpu.memory_space<vmem>>, vector<1x4x256xf32>,
    %91 = vector.extract_strided_slice %86 {offsets = [0, 256], sizes = [4, 256], strides = [1, 1]} : vector<8x512xf32> to vector<4x256xf32>
    %c1_51 = arith.constant 1 : index
    %c0_52 = arith.constant 0 : index
    %c0_53 = arith.constant 0 : index
    %92 = vector.load %arg7[%c1_51, %c0_52, %c0_53] : memref<2x4x256xf32, #tpu.memory_space<vmem>>, vector<1x4x256xf32>
    %93 = vector.shape_cast %92 : vector<1x4x256xf32> to vector<4x256xf32>
    %94 = vector.shape_cast %91 : vector<4x256xf32> to vector<1x4x256xf32>
    tpu.vector_store %arg7[%c1_51, %c0_52, %c0_53], %94 {strides = array<i32>} : memref<2x4x256xf32, #tpu.memory_space<vmem>>, vector<1x4x256xf32>,
    return
  }
  func.func @transform_0(%arg0: i32) -> (i32, i32, i32) {
    %c0_i32 = arith.constant 0 : i32
    %c0_i32_0 = arith.constant 0 : i32
    %c0_i32_1 = arith.constant 0 : i32
    return %arg0, %c0_i32, %c0_i32_0 : i32, i32, i32
  }
  func.func @transform_1(%arg0: i32) -> (i32, i32) {
    %c0_i32 = arith.constant 0 : i32
    %c0_i32_0 = arith.constant 0 : i32
    %c0_i32_1 = arith.constant 0 : i32
    return %c0_i32, %c0_i32_0 : i32, i32
  }
  func.func @transform_2(%arg0: i32) -> (i32, i32) {
    %c0_i32 = arith.constant 0 : i32
    %c0_i32_0 = arith.constant 0 : i32
    %c0_i32_1 = arith.constant 0 : i32
    return %c0_i32, %c0_i32_0 : i32, i32
  }
  func.func @transform_3(%arg0: i32) -> (i32, i32) {
    %c0_i32 = arith.constant 0 : i32
    %c0_i32_0 = arith.constant 0 : i32
    %c0_i32_1 = arith.constant 0 : i32
    return %c0_i32, %c0_i32_0 : i32, i32
  }
  func.func @transform_4(%arg0: i32) -> (i32, i32) {
    %c0_i32 = arith.constant 0 : i32
    %c0_i32_0 = arith.constant 0 : i32
    %c0_i32_1 = arith.constant 0 : i32
    return %c0_i32, %c0_i32_0 : i32, i32
  }
  func.func @transform_5(%arg0: i32) -> (i32, i32) {
    %c0_i32 = arith.constant 0 : i32
    %c0_i32_0 = arith.constant 0 : i32
    %c0_i32_1 = arith.constant 0 : i32
    return %c0_i32, %c0_i32_0 : i32, i32
  }
  func.func @transform_6(%arg0: i32) -> (i32, i32, i32) {
    %c0_i32 = arith.constant 0 : i32
    %c0_i32_0 = arith.constant 0 : i32
    %c0_i32_1 = arith.constant 0 : i32
    return %arg0, %c0_i32, %c0_i32_0 : i32, i32, i32
  }
}

</mosaic_0001>

<llo_original>
// kernel: inverted_bottleneck.1
$region0: #{inverted_bottleneck.1}
  #allocation0 [shape = 'u32[]', space=smem, size = 0x4, offset = 0x4, fixed_abs, tag = 'smem constant byte address 0x4 - core index']
  #allocation1 [shape = 'u32[144,128]{1,0:T(1,128)}', space=vmem, size = 0x12000, scoped, tag = 'internal scratch']
  %s0 = inlined_call_operand.vmem [shape: f32[2,8,256], index: 0, kind: input, shape index: {}]
  %s1 = inlined_call_operand.vmem [shape: f32[16,72], index: 1, kind: input, shape index: {}]
  %s2 = inlined_call_operand.vmem [shape: f32[16,1], index: 2, kind: input, shape index: {}]
  %s3 = inlined_call_operand.vmem [shape: f32[8,144], index: 3, kind: input, shape index: {}]
  %s4 = inlined_call_operand.vmem [shape: f32[8,1], index: 4, kind: input, shape index: {}]
  %s5 = inlined_call_operand.vmem [shape: f32[9,512], index: 5, kind: input, shape index: {}]
  %s6 = inlined_call_operand.vmem [shape: f32[2,4,256], index: 6, kind: output, shape index: {}]
  %s7 = sld [smem:[#allocation0]]
  $region34: #{inverted_bottleneck.1} parent=0
    _
  %s9 = ssub.s32 1, %s7
  %s10 = scalar_select 0, %s9, %s7
  // Predicated region
  $region2: #{inverted_bottleneck.1} parent=0 // pred_check
    _
  $region3: #{inverted_bottleneck.1} parent=0 // pred_check_branch
    %12 = sbr.rel (0) target = $region5
  $region4: #{inverted_bottleneck.1} parent=0 // pred_region
    _
  $region5: #{inverted_bottleneck.1} parent=0 // pred_fallthru
    _
  // Predicated region
  $region6: #{inverted_bottleneck.1} parent=0 // pred_check
    _
  $region7: #{inverted_bottleneck.1} parent=0 // pred_check_branch
    %14 = sbr.rel (0) target = $region9
  $region8: #{inverted_bottleneck.1} parent=0 // pred_region
    _
  $region9: #{inverted_bottleneck.1} parent=0 // pred_fallthru
    _
  // Predicated region
  $region10: #{inverted_bottleneck.1} parent=0 // pred_check
    _
  $region11: #{inverted_bottleneck.1} parent=0 // pred_check_branch
    %16 = sbr.rel (0) target = $region13
  $region12: #{inverted_bottleneck.1} parent=0 // pred_region
    _
  $region13: #{inverted_bottleneck.1} parent=0 // pred_fallthru
    _
  // Predicated region
  $region14: #{inverted_bottleneck.1} parent=0 // pred_check
    _
  $region15: #{inverted_bottleneck.1} parent=0 // pred_check_branch
    %18 = sbr.rel (0) target = $region17
  $region16: #{inverted_bottleneck.1} parent=0 // pred_region
    _
  $region17: #{inverted_bottleneck.1} parent=0 // pred_fallthru
    _
  // Predicated region
  $region18: #{inverted_bottleneck.1} parent=0 // pred_check
    _
  $region19: #{inverted_bottleneck.1} parent=0 // pred_check_branch
    %20 = sbr.rel (0) target = $region21
  $region20: #{inverted_bottleneck.1} parent=0 // pred_region
    _
  $region21: #{inverted_bottleneck.1} parent=0 // pred_fallthru
    _
  // Predicated region
  $region22: #{inverted_bottleneck.1} parent=0 // pred_check
    _
  $region23: #{inverted_bottleneck.1} parent=0 // pred_check_branch
    %22 = sbr.rel (0) target = $region25
  $region24: #{inverted_bottleneck.1} parent=0 // pred_region
    _
  $region25: #{inverted_bottleneck.1} parent=0 // pred_fallthru
    _
  %v23 = vld [vmem:[%s0] sm:$0xff]
  %v24 = vld [vmem:[%s0 + $0x8] sm:$0xff]
  %s25 = scalar_lea.vmem %s0, 16
  %v26 = vld [vmem:[%s25] sm:$0xff]
  %v27 = vld [vmem:[%s25 + $0x8] sm:$0xff]
  %v28 = vld [vmem:[%s1] sm:$0xff]
  %v29 = vld [vmem:[%s1 + $0x8] sm:$0xff]
  %30 = vrot.lane.b32.xlu0 %v23, 17
  %v31 = vpop.permute.xlu0 %30
  %32 = vrot.lane.b32.xlu0 %v24, 17
  %v33 = vpop.permute.xlu0 %32
  %34 = vrot.lane.b32.xlu0 %v26, 17
  %v35 = vpop.permute.xlu0 %34
  %36 = vrot.lane.b32.xlu0 %v27, 17
  %v37 = vpop.permute.xlu0 %36
  %v38 = vlaneseq
  %v39 = vand.u32 %v38, 127
  %vm40 = vcmp.lt.s32.totalorder %v39, 17
  %v41 = vsel %vm40, %v35, %v37
  %v42 = vsel %vm40, %v33, %v35
  %v43 = vsel %vm40, %v31, %v33
  %v44 = vsel %vm40, %v37, %v31
  %v45 = vld [vmem:[%s5] ss:$8 sm:$0xf]
  %v47 = vlaneseq
  %v48 = vshrl.u32 %v47, 7
  %v49 = vsub.s32 0, %v48
  %v50 = vrot.slane %v45, %v49
  %v51 = vlaneseq
  %v52 = vshrl.u32 %v51, 7
  %v53 = vsub.s32 1, %v52
  %v54 = vrot.slane %v45, %v53
  %v55 = vlaneseq
  %v56 = vshrl.u32 %v55, 7
  %v57 = vsub.s32 2, %v56
  %v58 = vrot.slane %v45, %v57
  %v59 = vlaneseq
  %v60 = vshrl.u32 %v59, 7
  %v61 = vsub.s32 3, %v60
  %v62 = vrot.slane %v45, %v61
  %v67 = vmul.f32 %v44, %v50
  %v68 = vmul.f32 %v43, %v54
  %v69 = vmul.f32 %v42, %v58
  %v70 = vmul.f32 %v41, %v62
  %71 = vrot.lane.b32.xlu0 %v23, 16
  %v72 = vpop.permute.xlu0 %71
  %73 = vrot.lane.b32.xlu0 %v24, 16
  %v74 = vpop.permute.xlu0 %73
  %75 = vrot.lane.b32.xlu0 %v26, 16
  %v76 = vpop.permute.xlu0 %75
  %77 = vrot.lane.b32.xlu0 %v27, 16
  %v78 = vpop.permute.xlu0 %77
  %vm79 = vcmp.lt.s32.totalorder %v39, 16
  %v80 = vsel %vm79, %v76, %v78
  %v81 = vsel %vm79, %v74, %v76
  %v82 = vsel %vm79, %v72, %v74
  %v83 = vsel %vm79, %v78, %v72
  %s84 = scalar_lea.vmem %s5, 1
  %v85 = vld [vmem:[%s84] ss:$8 sm:$0xf]
  %v87 = vlaneseq
  %v88 = vshrl.u32 %v87, 7
  %v89 = vsub.s32 0, %v88
  %v90 = vrot.slane %v85, %v89
  %v91 = vlaneseq
  %v92 = vshrl.u32 %v91, 7
  %v93 = vsub.s32 1, %v92
  %v94 = vrot.slane %v85, %v93
  %v95 = vlaneseq
  %v96 = vshrl.u32 %v95, 7
  %v97 = vsub.s32 2, %v96
  %v98 = vrot.slane %v85, %v97
  %v99 = vlaneseq
  %v100 = vshrl.u32 %v99, 7
  %v101 = vsub.s32 3, %v100
  %v102 = vrot.slane %v85, %v101
  %v107 = vmul.f32 %v83, %v90
  %v108 = vmul.f32 %v82, %v94
  %v109 = vmul.f32 %v81, %v98
  %v110 = vmul.f32 %v80, %v102
  %111 = vrot.lane.b32.xlu0 %v23, 15
  %v112 = vpop.permute.xlu0 %111
  %113 = vrot.lane.b32.xlu0 %v24, 15
  %v114 = vpop.permute.xlu0 %113
  %115 = vrot.lane.b32.xlu0 %v26, 15
  %v116 = vpop.permute.xlu0 %115
  %117 = vrot.lane.b32.xlu0 %v27, 15
  %v118 = vpop.permute.xlu0 %117
  %vm119 = vcmp.lt.s32.totalorder %v39, 15
  %v120 = vsel %vm119, %v116, %v118
  %v121 = vsel %vm119, %v114, %v116
  %v122 = vsel %vm119, %v112, %v114
  %v123 = vsel %vm119, %v118, %v112
  %s124 = scalar_lea.vmem %s5, 2
  %v125 = vld [vmem:[%s124] ss:$8 sm:$0xf]
  %v127 = vlaneseq
  %v128 = vshrl.u32 %v127, 7
  %v129 = vsub.s32 0, %v128
  %v130 = vrot.slane %v125, %v129
  %v131 = vlaneseq
  %v132 = vshrl.u32 %v131, 7
  %v133 = vsub.s32 1, %v132
  %v134 = vrot.slane %v125, %v133
  %v135 = vlaneseq
  %v136 = vshrl.u32 %v135, 7
  %v137 = vsub.s32 2, %v136
  %v138 = vrot.slane %v125, %v137
  %v139 = vlaneseq
  %v140 = vshrl.u32 %v139, 7
  %v141 = vsub.s32 3, %v140
  %v142 = vrot.slane %v125, %v141
  %v147 = vmul.f32 %v123, %v130
  %v148 = vmul.f32 %v122, %v134
  %v149 = vmul.f32 %v121, %v138
  %v150 = vmul.f32 %v120, %v142
  %151 = vrot.lane.b32.xlu0 %v23, 1
  %v152 = vpop.permute.xlu0 %151
  %153 = vrot.lane.b32.xlu0 %v24, 1
  %v154 = vpop.permute.xlu0 %153
  %155 = vrot.lane.b32.xlu0 %v26, 1
  %v156 = vpop.permute.xlu0 %155
  %157 = vrot.lane.b32.xlu0 %v27, 1
  %v158 = vpop.permute.xlu0 %157
  %vm159 = vcmp.lt.s32.totalorder %v39, 1
  %v160 = vsel %vm159, %v156, %v158
  %v161 = vsel %vm159, %v154, %v156
  %v162 = vsel %vm159, %v152, %v154
  %v163 = vsel %vm159, %v158, %v152
  %s164 = scalar_lea.vmem %s5, 3
  %v165 = vld [vmem:[%s164] ss:$8 sm:$0xf]
  %v167 = vlaneseq
  %v168 = vshrl.u32 %v167, 7
  %v169 = vsub.s32 0, %v168
  %v170 = vrot.slane %v165, %v169
  %v171 = vlaneseq
  %v172 = vshrl.u32 %v171, 7
  %v173 = vsub.s32 1, %v172
  %v174 = vrot.slane %v165, %v173
  %v175 = vlaneseq
  %v176 = vshrl.u32 %v175, 7
  %v177 = vsub.s32 2, %v176
  %v178 = vrot.slane %v165, %v177
  %v179 = vlaneseq
  %v180 = vshrl.u32 %v179, 7
  %v181 = vsub.s32 3, %v180
  %v182 = vrot.slane %v165, %v181
  %v187 = vmul.f32 %v163, %v170
  %v188 = vmul.f32 %v162, %v174
  %v189 = vmul.f32 %v161, %v178
  %v190 = vmul.f32 %v160, %v182
  %191 = vrot.lane.b32.xlu0 %v23, 127
  %v192 = vpop.permute.xlu0 %191
  %193 = vrot.lane.b32.xlu0 %v24, 127
  %v194 = vpop.permute.xlu0 %193
  %195 = vrot.lane.b32.xlu0 %v26, 127
  %v196 = vpop.permute.xlu0 %195
  %197 = vrot.lane.b32.xlu0 %v27, 127
  %v198 = vpop.permute.xlu0 %197
  %vm199 = vcmp.lt.s32.totalorder %v39, 127
  %v200 = vsel %vm199, %v196, %v198
  %v201 = vsel %vm199, %v194, %v196
  %v202 = vsel %vm199, %v192, %v194
  %v203 = vsel %vm199, %v198, %v192
  %s204 = scalar_lea.vmem %s5, 5
  %v205 = vld [vmem:[%s204] ss:$8 sm:$0xf]
  %v207 = vlaneseq
  %v208 = vshrl.u32 %v207, 7
  %v209 = vsub.s32 0, %v208
  %v210 = vrot.slane %v205, %v209
  %v211 = vlaneseq
  %v212 = vshrl.u32 %v211, 7
  %v213 = vsub.s32 1, %v212
  %v214 = vrot.slane %v205, %v213
  %v215 = vlaneseq
  %v216 = vshrl.u32 %v215, 7
  %v217 = vsub.s32 2, %v216
  %v218 = vrot.slane %v205, %v217
  %v219 = vlaneseq
  %v220 = vshrl.u32 %v219, 7
  %v221 = vsub.s32 3, %v220
  %v222 = vrot.slane %v205, %v221
  %v227 = vmul.f32 %v202, %v210
  %v228 = vmul.f32 %v201, %v214
  %v229 = vmul.f32 %v200, %v218
  %v230 = vmul.f32 %v203, %v222
  %231 = vrot.lane.b32.xlu0 %v23, 113
  %v232 = vpop.permute.xlu0 %231
  %233 = vrot.lane.b32.xlu0 %v24, 113
  %v234 = vpop.permute.xlu0 %233
  %235 = vrot.lane.b32.xlu0 %v26, 113
  %v236 = vpop.permute.xlu0 %235
  %237 = vrot.lane.b32.xlu0 %v27, 113
  %v238 = vpop.permute.xlu0 %237
  %vm239 = vcmp.lt.s32.totalorder %v39, 113
  %v240 = vsel %vm239, %v236, %v238
  %v241 = vsel %vm239, %v234, %v236
  %v242 = vsel %vm239, %v232, %v234
  %v243 = vsel %vm239, %v238, %v232
  %s244 = scalar_lea.vmem %s5, 6
  %v245 = vld [vmem:[%s244] ss:$8 sm:$0xf]
  %v247 = vlaneseq
  %v248 = vshrl.u32 %v247, 7
  %v249 = vsub.s32 0, %v248
  %v250 = vrot.slane %v245, %v249
  %v251 = vlaneseq
  %v252 = vshrl.u32 %v251, 7
  %v253 = vsub.s32 1, %v252
  %v254 = vrot.slane %v245, %v253
  %v255 = vlaneseq
  %v256 = vshrl.u32 %v255, 7
  %v257 = vsub.s32 2, %v256
  %v258 = vrot.slane %v245, %v257
  %v259 = vlaneseq
  %v260 = vshrl.u32 %v259, 7
  %v261 = vsub.s32 3, %v260
  %v262 = vrot.slane %v245, %v261
  %v267 = vmul.f32 %v242, %v250
  %v268 = vmul.f32 %v241, %v254
  %v269 = vmul.f32 %v240, %v258
  %v270 = vmul.f32 %v243, %v262
  %271 = vrot.lane.b32.xlu0 %v23, 112
  %v272 = vpop.permute.xlu0 %271
  %273 = vrot.lane.b32.xlu0 %v24, 112
  %v274 = vpop.permute.xlu0 %273
  %275 = vrot.lane.b32.xlu0 %v26, 112
  %v276 = vpop.permute.xlu0 %275
  %277 = vrot.lane.b32.xlu0 %v27, 112
  %v278 = vpop.permute.xlu0 %277
  %vm279 = vcmp.lt.s32.totalorder %v39, 112
  %v280 = vsel %vm279, %v276, %v278
  %v281 = vsel %vm279, %v274, %v276
  %v282 = vsel %vm279, %v272, %v274
  %v283 = vsel %vm279, %v278, %v272
  %s284 = scalar_lea.vmem %s5, 7
  %v285 = vld [vmem:[%s284] ss:$8 sm:$0xf]
  %v287 = vlaneseq
  %v288 = vshrl.u32 %v287, 7
  %v289 = vsub.s32 0, %v288
  %v290 = vrot.slane %v285, %v289
  %v291 = vlaneseq
  %v292 = vshrl.u32 %v291, 7
  %v293 = vsub.s32 1, %v292
  %v294 = vrot.slane %v285, %v293
  %v295 = vlaneseq
  %v296 = vshrl.u32 %v295, 7
  %v297 = vsub.s32 2, %v296
  %v298 = vrot.slane %v285, %v297
  %v299 = vlaneseq
  %v300 = vshrl.u32 %v299, 7
  %v301 = vsub.s32 3, %v300
  %v302 = vrot.slane %v285, %v301
  %v307 = vmul.f32 %v282, %v290
  %v308 = vmul.f32 %v281, %v294
  %v309 = vmul.f32 %v280, %v298
  %v310 = vmul.f32 %v283, %v302
  %311 = vrot.lane.b32.xlu0 %v23, 111
  %v312 = vpop.permute.xlu0 %311
  %313 = vrot.lane.b32.xlu0 %v24, 111
  %v314 = vpop.permute.xlu0 %313
  %315 = vrot.lane.b32.xlu0 %v26, 111
  %v316 = vpop.permute.xlu0 %315
  %317 = vrot.lane.b32.xlu0 %v27, 111
  %v318 = vpop.permute.xlu0 %317
  %vm319 = vcmp.lt.s32.totalorder %v39, 111
  %v320 = vsel %vm319, %v316, %v318
  %v321 = vsel %vm319, %v314, %v316
  %v322 = vsel %vm319, %v312, %v314
  %v323 = vsel %vm319, %v318, %v312
  %s324 = scalar_lea.vmem %s5, 32
  %v325 = vld [vmem:[%s324] ss:$8 sm:$0xf]
  %v327 = vlaneseq
  %v328 = vshrl.u32 %v327, 7
  %v329 = vsub.s32 0, %v328
  %v330 = vrot.slane %v325, %v329
  %v331 = vlaneseq
  %v332 = vshrl.u32 %v331, 7
  %v333 = vsub.s32 1, %v332
  %v334 = vrot.slane %v325, %v333
  %v335 = vlaneseq
  %v336 = vshrl.u32 %v335, 7
  %v337 = vsub.s32 2, %v336
  %v338 = vrot.slane %v325, %v337
  %v339 = vlaneseq
  %v340 = vshrl.u32 %v339, 7
  %v341 = vsub.s32 3, %v340
  %v342 = vrot.slane %v325, %v341
  %v347 = vmul.f32 %v322, %v330
  %v348 = vmul.f32 %v321, %v334
  %v349 = vmul.f32 %v320, %v338
  %v350 = vmul.f32 %v323, %v342
  %v351 = vld [vmem:[%s2] sm:$0xff]
  %v352 = vld [vmem:[%s2 + $0x8] sm:$0xff]
  %354 = vset.pattern.permute.xlu0 0
  %355 = vperm.xlu0 %354, %v351
  %v356 = vpop.permute.xlu0 %355
  %359 = vset.pattern.permute.xlu0 0
  %360 = vperm.xlu0 %359, %v352
  %v361 = vpop.permute.xlu0 %360
  %vm363 = vcmask 588800
  %v365 = vsel %vm363, %v28, 0
  %v368 = vsel %vm363, %v29, 0
  %v370 = vand.u32 %v68, 4294901760
  %371 = vmatprep.subr.mxu0 %v370
  %v372 = vand.u32 %v67, 4294901760
  %373 = vmatpush1.msra.mxu0 %v372
  %v374 = vand.u32 %v108, 4294901760
  %375 = vmatprep.subr.mxu0 %v374
  %v376 = vand.u32 %v107, 4294901760
  %377 = vmatpush1.msra.mxu0 %v376
  %v378 = vand.u32 %v148, 4294901760
  %379 = vmatprep.subr.mxu0 %v378
  %v380 = vand.u32 %v147, 4294901760
  %381 = vmatpush1.msra.mxu0 %v380
  %v382 = vand.u32 %v188, 4294901760
  %383 = vmatprep.subr.mxu0 %v382
  %v384 = vand.u32 %v187, 4294901760
  %385 = vmatpush1.msra.mxu0 %v384
  %v386 = vand.u32 %v24, 4294901760
  %387 = vmatprep.subr.mxu0 %v386
  %v388 = vand.u32 %v23, 4294901760
  %389 = vmatpush1.msra.mxu0 %v388
  %v390 = vand.u32 %v228, 4294901760
  %391 = vmatprep.subr.mxu0 %v390
  %v392 = vand.u32 %v227, 4294901760
  %393 = vmatpush1.msra.mxu0 %v392
  %v394 = vand.u32 %v268, 4294901760
  %395 = vmatprep.subr.mxu0 %v394
  %v396 = vand.u32 %v267, 4294901760
  %397 = vmatpush1.msra.mxu0 %v396
  %v398 = vand.u32 %v308, 4294901760
  %399 = vmatprep.subr.mxu0 %v398
  %v400 = vand.u32 %v307, 4294901760
  %401 = vmatpush1.msra.mxu0 %v400
  %v402 = vand.u32 %v348, 4294901760
  %403 = vmatprep.subr.mxu0 %v402
  %v404 = vand.u32 %v347, 4294901760
  %405 = vmatpush1.msra.mxu0 %v404
  %406 = vmatprep.subr.mxu0 0.0
  %407 = vmatpush1.msra.mxu0 0.0
  %408 = vmatprep.subr.mxu0 0.0
  %409 = vmatpush1.msra.mxu0 0.0
  %410 = vmatprep.subr.mxu0 0.0
  %411 = vmatpush1.msra.mxu0 0.0
  %412 = vmatprep.subr.mxu0 0.0
  %413 = vmatpush1.msra.mxu0 0.0
  %414 = vmatprep.subr.mxu0 0.0
  %415 = vmatpush1.msra.mxu0 0.0
  %416 = vmatprep.subr.mxu0 0.0
  %417 = vmatpush1.msra.mxu0 0.0
  %418 = vmatprep.subr.mxu0 0.0
  %419 = vmatpush1.msra.mxu0 0.0
  %420 = vmatprep.subr.mxu0 0.0
  %421 = vmatpush1.msra.mxu0 0.0
  %422 = vmatprep.subr.mxu0 0.0
  %423 = vmatpush1.msra.mxu0 0.0
  %424 = vmatprep.subr.mxu0 0.0
  %425 = vmatpush1.msra.mxu0 0.0
  %426 = vmatprep.subr.mxu0 0.0
  %427 = vmatpush1.msra.mxu0 0.0
  %428 = vmatprep.subr.mxu0 0.0
  %429 = vmatpush1.msra.mxu0 0.0
  %430 = vmatprep.subr.mxu0 0.0
  %431 = vmatpush1.msra.mxu0 0.0
  %432 = vmatprep.subr.mxu0 0.0
  %433 = vmatpush1.msra.mxu0 0.0
  %434 = vmatprep.subr.mxu0 0.0
  %435 = vmatpush1.msra.mxu0 0.0
  %436 = vmatprep.subr.mxu0 0.0
  %437 = vmatpush1.msra.mxu0 0.0
  %438 = vmatprep.subr.mxu0 0.0
  %439 = vmatpush1.msra.mxu0 0.0
  %440 = vmatprep.subr.mxu0 0.0
  %441 = vmatpush1.msra.mxu0 0.0
  %442 = vmatprep.subr.mxu0 0.0
  %443 = vmatpush1.msra.mxu0 0.0
  %444 = vmatprep.subr.mxu0 0.0
  %445 = vmatpush1.msra.mxu0 0.0
  %446 = vmatprep.subr.mxu0 0.0
  %447 = vmatpush1.msra.mxu0 0.0
  %448 = vmatprep.subr.mxu0 0.0
  %449 = vmatpush1.msra.mxu0 0.0
  %450 = vmatprep.subr.mxu0 0.0
  %451 = vmatpush1.msra.mxu0 0.0
  %452 = vmatprep.mubr.f32.mxu0 0.0
  %v453 = vand.u32 %v365, 4294901760
  %v454 = vsub.f32 %v365, %v453
  %v455 = vand.u32 %v454, 4294901760
  %v456 = vsub.f32 %v454, %v455
  %v457 = vand.u32 %v456, 4294901760
  %458 = vmatmul.mubr.f32.gmra.mrb[0].mxu0 %v457
  %v459 = vpop.f32.mrb[0].mxu0
  %v460 = vadd.f32 %v356, %v459
  %v461 = vpop.f32.mrb[0].mxu0
  %v462 = vadd.f32 %v356, %v461
  %463 = vmatprep.mubr.f32.mxu0 0.0
  %v464 = vand.u32 %v368, 4294901760
  %v465 = vsub.f32 %v368, %v464
  %v466 = vand.u32 %v465, 4294901760
  %v467 = vsub.f32 %v465, %v466
  %v468 = vand.u32 %v467, 4294901760
  %469 = vmatmul.mubr.f32.gmra.mrb[0].mxu0 %v468
  %v470 = vpop.f32.mrb[0].mxu0
  %v471 = vadd.f32 %v361, %v470
  %v472 = vpop.f32.mrb[0].mxu0
  %v473 = vadd.f32 %v361, %v472
  %474 = vdwg.mxu0
  %v475 = vand.u32 %v68, 4294901760
  %v476 = vsub.f32 %v68, %v475
  %v477 = vand.u32 %v476, 4294901760
  %v478 = vsub.f32 %v476, %v477
  %v479 = vand.u32 %v478, 4294901760
  %480 = vmatprep.subr.mxu0 %v479
  %v481 = vand.u32 %v67, 4294901760
  %v482 = vsub.f32 %v67, %v481
  %v483 = vand.u32 %v482, 4294901760
  %v484 = vsub.f32 %v482, %v483
  %v485 = vand.u32 %v484, 4294901760
  %486 = vmatpush1.msra.mxu0 %v485
  %v487 = vand.u32 %v108, 4294901760
  %v488 = vsub.f32 %v108, %v487
  %v489 = vand.u32 %v488, 4294901760
  %v490 = vsub.f32 %v488, %v489
  %v491 = vand.u32 %v490, 4294901760
  %492 = vmatprep.subr.mxu0 %v491
  %v493 = vand.u32 %v107, 4294901760
  %v494 = vsub.f32 %v107, %v493
  %v495 = vand.u32 %v494, 4294901760
  %v496 = vsub.f32 %v494, %v495
  %v497 = vand.u32 %v496, 4294901760
  %498 = vmatpush1.msra.mxu0 %v497
  %v499 = vand.u32 %v148, 4294901760
  %v500 = vsub.f32 %v148, %v499
  %v501 = vand.u32 %v500, 4294901760
  %v502 = vsub.f32 %v500, %v501
  %v503 = vand.u32 %v502, 4294901760
  %504 = vmatprep.subr.mxu0 %v503
  %v505 = vand.u32 %v147, 4294901760
  %v506 = vsub.f32 %v147, %v505
  %v507 = vand.u32 %v506, 4294901760
  %v508 = vsub.f32 %v506, %v507
  %v509 = vand.u32 %v508, 4294901760
  %510 = vmatpush1.msra.mxu0 %v509
  %v511 = vand.u32 %v188, 4294901760
  %v512 = vsub.f32 %v188, %v511
  %v513 = vand.u32 %v512, 4294901760
  %v514 = vsub.f32 %v512, %v513
  %v515 = vand.u32 %v514, 4294901760
  %516 = vmatprep.subr.mxu0 %v515
  %v517 = vand.u32 %v187, 4294901760
  %v518 = vsub.f32 %v187, %v517
  %v519 = vand.u32 %v518, 4294901760
  %v520 = vsub.f32 %v518, %v519
  %v521 = vand.u32 %v520, 4294901760
  %522 = vmatpush1.msra.mxu0 %v521
  %v523 = vand.u32 %v24, 4294901760
  %v524 = vsub.f32 %v24, %v523
  %v525 = vand.u32 %v524, 4294901760
  %v526 = vsub.f32 %v524, %v525
  %v527 = vand.u32 %v526, 4294901760
  %528 = vmatprep.subr.mxu0 %v527
  %v529 = vand.u32 %v23, 4294901760
  %v530 = vsub.f32 %v23, %v529
  %v531 = vand.u32 %v530, 4294901760
  %v532 = vsub.f32 %v530, %v531
  %v533 = vand.u32 %v532, 4294901760
  %534 = vmatpush1.msra.mxu0 %v533
  %v535 = vand.u32 %v228, 4294901760
  %v536 = vsub.f32 %v228, %v535
  %v537 = vand.u32 %v536, 4294901760
  %v538 = vsub.f32 %v536, %v537
  %v539 = vand.u32 %v538, 4294901760
  %540 = vmatprep.subr.mxu0 %v539
  %v541 = vand.u32 %v227, 4294901760
  %v542 = vsub.f32 %v227, %v541
  %v543 = vand.u32 %v542, 4294901760
  %v544 = vsub.f32 %v542, %v543
  %v545 = vand.u32 %v544, 4294901760
  %546 = vmatpush1.msra.mxu0 %v545
  %v547 = vand.u32 %v268, 4294901760
  %v548 = vsub.f32 %v268, %v547
  %v549 = vand.u32 %v548, 4294901760
  %v550 = vsub.f32 %v548, %v549
  %v551 = vand.u32 %v550, 4294901760
  %552 = vmatprep.subr.mxu0 %v551
  %v553 = vand.u32 %v267, 4294901760
  %v554 = vsub.f32 %v267, %v553
  %v555 = vand.u32 %v554, 4294901760
  %v556 = vsub.f32 %v554, %v555
  %v557 = vand.u32 %v556, 4294901760
  %558 = vmatpush1.msra.mxu0 %v557
  %v559 = vand.u32 %v308, 4294901760
  %v560 = vsub.f32 %v308, %v559
  %v561 = vand.u32 %v560, 4294901760
  %v562 = vsub.f32 %v560, %v561
  %v563 = vand.u32 %v562, 4294901760
  %564 = vmatprep.subr.mxu0 %v563
  %v565 = vand.u32 %v307, 4294901760
  %v566 = vsub.f32 %v307, %v565
  %v567 = vand.u32 %v566, 4294901760
  %v568 = vsub.f32 %v566, %v567
  %v569 = vand.u32 %v568, 4294901760
  %570 = vmatpush1.msra.mxu0 %v569
  %v571 = vand.u32 %v348, 4294901760
  %v572 = vsub.f32 %v348, %v571
  %v573 = vand.u32 %v572, 4294901760
  %v574 = vsub.f32 %v572, %v573
  %v575 = vand.u32 %v574, 4294901760
  %576 = vmatprep.subr.mxu0 %v575
  %v577 = vand.u32 %v347, 4294901760
  %v578 = vsub.f32 %v347, %v577
  %v579 = vand.u32 %v578, 4294901760
  %v580 = vsub.f32 %v578, %v579
  %v581 = vand.u32 %v580, 4294901760
  %582 = vmatpush1.msra.mxu0 %v581
  %583 = vmatprep.subr.mxu0 0.0
  %584 = vmatpush1.msra.mxu0 0.0
  %585 = vmatprep.subr.mxu0 0.0
  %586 = vmatpush1.msra.mxu0 0.0
  %587 = vmatprep.subr.mxu0 0.0
  %588 = vmatpush1.msra.mxu0 0.0
  %589 = vmatprep.subr.mxu0 0.0
  %590 = vmatpush1.msra.mxu0 0.0
  %591 = vmatprep.subr.mxu0 0.0
  %592 = vmatpush1.msra.mxu0 0.0
  %593 = vmatprep.subr.mxu0 0.0
  %594 = vmatpush1.msra.mxu0 0.0
  %595 = vmatprep.subr.mxu0 0.0
  %596 = vmatpush1.msra.mxu0 0.0
  %597 = vmatprep.subr.mxu0 0.0
  %598 = vmatpush1.msra.mxu0 0.0
  %599 = vmatprep.subr.mxu0 0.0
  %600 = vmatpush1.msra.mxu0 0.0
  %601 = vmatprep.subr.mxu0 0.0
  %602 = vmatpush1.msra.mxu0 0.0
  %603 = vmatprep.subr.mxu0 0.0
  %604 = vmatpush1.msra.mxu0 0.0
  %605 = vmatprep.subr.mxu0 0.0
  %606 = vmatpush1.msra.mxu0 0.0
  %607 = vmatprep.subr.mxu0 0.0
  %608 = vmatpush1.msra.mxu0 0.0
  %609 = vmatprep.subr.mxu0 0.0
  %610 = vmatpush1.msra.mxu0 0.0
  %611 = vmatprep.subr.mxu0 0.0
  %612 = vmatpush1.msra.mxu0 0.0
  %613 = vmatprep.subr.mxu0 0.0
  %614 = vmatpush1.msra.mxu0 0.0
  %615 = vmatprep.subr.mxu0 0.0
  %616 = vmatpush1.msra.mxu0 0.0
  %617 = vmatprep.subr.mxu0 0.0
  %618 = vmatpush1.msra.mxu0 0.0
  %619 = vmatprep.subr.mxu0 0.0
  %620 = vmatpush1.msra.mxu0 0.0
  %621 = vmatprep.subr.mxu0 0.0
  %622 = vmatpush1.msra.mxu0 0.0
  %623 = vmatprep.subr.mxu0 0.0
  %624 = vmatpush1.msra.mxu0 0.0
  %625 = vmatprep.subr.mxu0 0.0
  %626 = vmatpush1.msra.mxu0 0.0
  %627 = vmatprep.subr.mxu0 0.0
  %628 = vmatpush1.msra.mxu0 0.0
  %629 = vmatprep.mubr.f32.mxu0 0.0
  %v630 = vand.u32 %v365, 4294901760
  %631 = vmatmul.mubr.f32.gmra.mrb[0].mxu0 %v630
  %v632 = vpop.f32.mrb[0].mxu0
  %v633 = vadd.f32 %v460, %v632
  %v634 = vpop.f32.mrb[0].mxu0
  %v635 = vadd.f32 %v462, %v634
  %636 = vmatprep.mubr.f32.mxu0 0.0
  %v637 = vand.u32 %v368, 4294901760
  %638 = vmatmul.mubr.f32.gmra.mrb[0].mxu0 %v637
  %v639 = vpop.f32.mrb[0].mxu0
  %v640 = vadd.f32 %v471, %v639
  %v641 = vpop.f32.mrb[0].mxu0
  %v642 = vadd.f32 %v473, %v641
  %643 = vdwg.mxu0
  %v644 = vand.u32 %v68, 4294901760
  %v645 = vsub.f32 %v68, %v644
  %646 = vmatprep.subr.mxu0 %v645
  %v647 = vand.u32 %v67, 4294901760
  %v648 = vsub.f32 %v67, %v647
  %649 = vmatpush1.msra.mxu0 %v648
  %v650 = vand.u32 %v108, 4294901760
  %v651 = vsub.f32 %v108, %v650
  %652 = vmatprep.subr.mxu0 %v651
  %v653 = vand.u32 %v107, 4294901760
  %v654 = vsub.f32 %v107, %v653
  %655 = vmatpush1.msra.mxu0 %v654
  %v656 = vand.u32 %v148, 4294901760
  %v657 = vsub.f32 %v148, %v656
  %658 = vmatprep.subr.mxu0 %v657
  %v659 = vand.u32 %v147, 4294901760
  %v660 = vsub.f32 %v147, %v659
  %661 = vmatpush1.msra.mxu0 %v660
  %v662 = vand.u32 %v188, 4294901760
  %v663 = vsub.f32 %v188, %v662
  %664 = vmatprep.subr.mxu0 %v663
  %v665 = vand.u32 %v187, 4294901760
  %v666 = vsub.f32 %v187, %v665
  %667 = vmatpush1.msra.mxu0 %v666
  %v668 = vand.u32 %v24, 4294901760
  %v669 = vsub.f32 %v24, %v668
  %670 = vmatprep.subr.mxu0 %v669
  %v671 = vand.u32 %v23, 4294901760
  %v672 = vsub.f32 %v23, %v671
  %673 = vmatpush1.msra.mxu0 %v672
  %v674 = vand.u32 %v228, 4294901760
  %v675 = vsub.f32 %v228, %v674
  %676 = vmatprep.subr.mxu0 %v675
  %v677 = vand.u32 %v227, 4294901760
  %v678 = vsub.f32 %v227, %v677
  %679 = vmatpush1.msra.mxu0 %v678
  %v680 = vand.u32 %v268, 4294901760
  %v681 = vsub.f32 %v268, %v680
  %682 = vmatprep.subr.mxu0 %v681
  %v683 = vand.u32 %v267, 4294901760
  %v684 = vsub.f32 %v267, %v683
  %685 = vmatpush1.msra.mxu0 %v684
  %v686 = vand.u32 %v308, 4294901760
  %v687 = vsub.f32 %v308, %v686
  %688 = vmatprep.subr.mxu0 %v687
  %v689 = vand.u32 %v307, 4294901760
  %v690 = vsub.f32 %v307, %v689
  %691 = vmatpush1.msra.mxu0 %v690
  %v692 = vand.u32 %v348, 4294901760
  %v693 = vsub.f32 %v348, %v692
  %694 = vmatprep.subr.mxu0 %v693
  %v695 = vand.u32 %v347, 4294901760
  %v696 = vsub.f32 %v347, %v695
  %697 = vmatpush1.msra.mxu0 %v696
  %698 = vmatprep.subr.mxu0 0.0
  %699 = vmatpush1.msra.mxu0 0.0
  %700 = vmatprep.subr.mxu0 0.0
  %701 = vmatpush1.msra.mxu0 0.0
  %702 = vmatprep.subr.mxu0 0.0
  %703 = vmatpush1.msra.mxu0 0.0
  %704 = vmatprep.subr.mxu0 0.0
  %705 = vmatpush1.msra.mxu0 0.0
  %706 = vmatprep.subr.mxu0 0.0
  %707 = vmatpush1.msra.mxu0 0.0
  %708 = vmatprep.subr.mxu0 0.0
  %709 = vmatpush1.msra.mxu0 0.0
  %710 = vmatprep.subr.mxu0 0.0
  %711 = vmatpush1.msra.mxu0 0.0
  %712 = vmatprep.subr.mxu0 0.0
  %713 = vmatpush1.msra.mxu0 0.0
  %714 = vmatprep.subr.mxu0 0.0
  %715 = vmatpush1.msra.mxu0 0.0
  %716 = vmatprep.subr.mxu0 0.0
  %717 = vmatpush1.msra.mxu0 0.0
  %718 = vmatprep.subr.mxu0 0.0
  %719 = vmatpush1.msra.mxu0 0.0
  %720 = vmatprep.subr.mxu0 0.0
  %721 = vmatpush1.msra.mxu0 0.0
  %722 = vmatprep.subr.mxu0 0.0
  %723 = vmatpush1.msra.mxu0 0.0
  %724 = vmatprep.subr.mxu0 0.0
  %725 = vmatpush1.msra.mxu0 0.0
  %726 = vmatprep.subr.mxu0 0.0
  %727 = vmatpush1.msra.mxu0 0.0
  %728 = vmatprep.subr.mxu0 0.0
  %729 = vmatpush1.msra.mxu0 0.0
  %730 = vmatprep.subr.mxu0 0.0
  %731 = vmatpush1.msra.mxu0 0.0
  %732 = vmatprep.subr.mxu0 0.0
  %733 = vmatpush1.msra.mxu0 0.0
  %734 = vmatprep.subr.mxu0 0.0
  %735 = vmatpush1.msra.mxu0 0.0
  %736 = vmatprep.subr.mxu0 0.0
  %737 = vmatpush1.msra.mxu0 0.0
  %738 = vmatprep.subr.mxu0 0.0
  %739 = vmatpush1.msra.mxu0 0.0
  %740 = vmatprep.subr.mxu0 0.0
  %741 = vmatpush1.msra.mxu0 0.0
  %742 = vmatprep.subr.mxu0 0.0
  %743 = vmatpush1.msra.mxu0 0.0
  %744 = vmatprep.mubr.f32.mxu0 0.0
  %v745 = vand.u32 %v365, 4294901760
  %v746 = vsub.f32 %v365, %v745
  %747 = vmatmul.mubr.f32.gmra.mrb[0].mxu0 %v746
  %v748 = vpop.f32.mrb[0].mxu0
  %v749 = vadd.f32 %v633, %v748
  %v750 = vpop.f32.mrb[0].mxu0
  %v751 = vadd.f32 %v635, %v750
  %752 = vmatprep.mubr.f32.mxu0 0.0
  %v753 = vand.u32 %v368, 4294901760
  %v754 = vsub.f32 %v368, %v753
  %755 = vmatmul.mubr.f32.gmra.mrb[0].mxu0 %v754
  %v756 = vpop.f32.mrb[0].mxu0
  %v757 = vadd.f32 %v640, %v756
  %v758 = vpop.f32.mrb[0].mxu0
  %v759 = vadd.f32 %v642, %v758
  %760 = vdwg.mxu0
  %v761 = vand.u32 %v68, 4294901760
  %762 = vmatprep.subr.mxu0 %v761
  %v763 = vand.u32 %v67, 4294901760
  %764 = vmatpush1.msra.mxu0 %v763
  %v765 = vand.u32 %v108, 4294901760
  %766 = vmatprep.subr.mxu0 %v765
  %v767 = vand.u32 %v107, 4294901760
  %768 = vmatpush1.msra.mxu0 %v767
  %v769 = vand.u32 %v148, 4294901760
  %770 = vmatprep.subr.mxu0 %v769
  %v771 = vand.u32 %v147, 4294901760
  %772 = vmatpush1.msra.mxu0 %v771
  %v773 = vand.u32 %v188, 4294901760
  %774 = vmatprep.subr.mxu0 %v773
  %v775 = vand.u32 %v187, 4294901760
  %776 = vmatpush1.msra.mxu0 %v775
  %v777 = vand.u32 %v24, 4294901760
  %778 = vmatprep.subr.mxu0 %v777
  %v779 = vand.u32 %v23, 4294901760
  %780 = vmatpush1.msra.mxu0 %v779
  %v781 = vand.u32 %v228, 4294901760
  %782 = vmatprep.subr.mxu0 %v781
  %v783 = vand.u32 %v227, 4294901760
  %784 = vmatpush1.msra.mxu0 %v783
  %v785 = vand.u32 %v268, 4294901760
  %786 = vmatprep.subr.mxu0 %v785
  %v787 = vand.u32 %v267, 4294901760
  %788 = vmatpush1.msra.mxu0 %v787
  %v789 = vand.u32 %v308, 4294901760
  %790 = vmatprep.subr.mxu0 %v789
  %v791 = vand.u32 %v307, 4294901760
  %792 = vmatpush1.msra.mxu0 %v791
  %v793 = vand.u32 %v348, 4294901760
  %794 = vmatprep.subr.mxu0 %v793
  %v795 = vand.u32 %v347, 4294901760
  %796 = vmatpush1.msra.mxu0 %v795
  %797 = vmatprep.subr.mxu0 0.0
  %798 = vmatpush1.msra.mxu0 0.0
  %799 = vmatprep.subr.mxu0 0.0
  %800 = vmatpush1.msra.mxu0 0.0
  %801 = vmatprep.subr.mxu0 0.0
  %802 = vmatpush1.msra.mxu0 0.0
  %803 = vmatprep.subr.mxu0 0.0
  %804 = vmatpush1.msra.mxu0 0.0
  %805 = vmatprep.subr.mxu0 0.0
  %806 = vmatpush1.msra.mxu0 0.0
  %807 = vmatprep.subr.mxu0 0.0
  %808 = vmatpush1.msra.mxu0 0.0
  %809 = vmatprep.subr.mxu0 0.0
  %810 = vmatpush1.msra.mxu0 0.0
  %811 = vmatprep.subr.mxu0 0.0
  %812 = vmatpush1.msra.mxu0 0.0
  %813 = vmatprep.subr.mxu0 0.0
  %814 = vmatpush1.msra.mxu0 0.0
  %815 = vmatprep.subr.mxu0 0.0
  %816 = vmatpush1.msra.mxu0 0.0
  %817 = vmatprep.subr.mxu0 0.0
  %818 = vmatpush1.msra.mxu0 0.0
  %819 = vmatprep.subr.mxu0 0.0
  %820 = vmatpush1.msra.mxu0 0.0
  %821 = vmatprep.subr.mxu0 0.0
  %822 = vmatpush1.msra.mxu0 0.0
  %823 = vmatprep.subr.mxu0 0.0
  %824 = vmatpush1.msra.mxu0 0.0
  %825 = vmatprep.subr.mxu0 0.0
  %826 = vmatpush1.msra.mxu0 0.0
  %827 = vmatprep.subr.mxu0 0.0
  %828 = vmatpush1.msra.mxu0 0.0
  %829 = vmatprep.subr.mxu0 0.0
  %830 = vmatpush1.msra.mxu0 0.0
  %831 = vmatprep.subr.mxu0 0.0
  %832 = vmatpush1.msra.mxu0 0.0
  %833 = vmatprep.subr.mxu0 0.0
  %834 = vmatpush1.msra.mxu0 0.0
  %835 = vmatprep.subr.mxu0 0.0
  %836 = vmatpush1.msra.mxu0 0.0
  %837 = vmatprep.subr.mxu0 0.0
  %838 = vmatpush1.msra.mxu0 0.0
  %839 = vmatprep.subr.mxu0 0.0
  %840 = vmatpush1.msra.mxu0 0.0
  %841 = vmatprep.subr.mxu0 0.0
  %842 = vmatpush1.msra.mxu0 0.0
  %843 = vmatprep.mubr.f32.mxu0 0.0
  %v844 = vand.u32 %v365, 4294901760
  %v845 = vsub.f32 %v365, %v844
  %v846 = vand.u32 %v845, 4294901760
  %847 = vmatmul.mubr.f32.gmra.mrb[0].mxu0 %v846
  %v848 = vpop.f32.mrb[0].mxu0
  %v849 = vadd.f32 %v749, %v848
  %v850 = vpop.f32.mrb[0].mxu0
  %v851 = vadd.f32 %v751, %v850
  %852 = vmatprep.mubr.f32.mxu0 0.0
  %v853 = vand.u32 %v368, 4294901760
  %v854 = vsub.f32 %v368, %v853
  %v855 = vand.u32 %v854, 4294901760
  %856 = vmatmul.mubr.f32.gmra.mrb[0].mxu0 %v855
  %v857 = vpop.f32.mrb[0].mxu0
  %v858 = vadd.f32 %v757, %v857
  %v859 = vpop.f32.mrb[0].mxu0
  %v860 = vadd.f32 %v759, %v859
  %861 = vdwg.mxu0
  %v862 = vand.u32 %v68, 4294901760
  %v863 = vsub.f32 %v68, %v862
  %v864 = vand.u32 %v863, 4294901760
  %865 = vmatprep.subr.mxu0 %v864
  %v866 = vand.u32 %v67, 4294901760
  %v867 = vsub.f32 %v67, %v866
  %v868 = vand.u32 %v867, 4294901760
  %869 = vmatpush1.msra.mxu0 %v868
  %v870 = vand.u32 %v108, 4294901760
  %v871 = vsub.f32 %v108, %v870
  %v872 = vand.u32 %v871, 4294901760
  %873 = vmatprep.subr.mxu0 %v872
  %v874 = vand.u32 %v107, 4294901760
  %v875 = vsub.f32 %v107, %v874
  %v876 = vand.u32 %v875, 4294901760
  %877 = vmatpush1.msra.mxu0 %v876
  %v878 = vand.u32 %v148, 4294901760
  %v879 = vsub.f32 %v148, %v878
  %v880 = vand.u32 %v879, 4294901760
  %881 = vmatprep.subr.mxu0 %v880
  %v882 = vand.u32 %v147, 4294901760
  %v883 = vsub.f32 %v147, %v882
  %v884 = vand.u32 %v883, 4294901760
  %885 = vmatpush1.msra.mxu0 %v884
  %v886 = vand.u32 %v188, 4294901760
  %v887 = vsub.f32 %v188, %v886
  %v888 = vand.u32 %v887, 4294901760
  %889 = vmatprep.subr.mxu0 %v888
  %v890 = vand.u32 %v187, 4294901760
  %v891 = vsub.f32 %v187, %v890
  %v892 = vand.u32 %v891, 4294901760
  %893 = vmatpush1.msra.mxu0 %v892
  %v894 = vand.u32 %v24, 4294901760
  %v895 = vsub.f32 %v24, %v894
  %v896 = vand.u32 %v895, 4294901760
  %897 = vmatprep.subr.mxu0 %v896
  %v898 = vand.u32 %v23, 4294901760
  %v899 = vsub.f32 %v23, %v898
  %v900 = vand.u32 %v899, 4294901760
  %901 = vmatpush1.msra.mxu0 %v900
  %v902 = vand.u32 %v228, 4294901760
  %v903 = vsub.f32 %v228, %v902
  %v904 = vand.u32 %v903, 4294901760
  %905 = vmatprep.subr.mxu0 %v904
  %v906 = vand.u32 %v227, 4294901760
  %v907 = vsub.f32 %v227, %v906
  %v908 = vand.u32 %v907, 4294901760
  %909 = vmatpush1.msra.mxu0 %v908
  %v910 = vand.u32 %v268, 4294901760
  %v911 = vsub.f32 %v268, %v910
  %v912 = vand.u32 %v911, 4294901760
  %913 = vmatprep.subr.mxu0 %v912
  %v914 = vand.u32 %v267, 4294901760
  %v915 = vsub.f32 %v267, %v914
  %v916 = vand.u32 %v915, 4294901760
  %917 = vmatpush1.msra.mxu0 %v916
  %v918 = vand.u32 %v308, 4294901760
  %v919 = vsub.f32 %v308, %v918
  %v920 = vand.u32 %v919, 4294901760
  %921 = vmatprep.subr.mxu0 %v920
  %v922 = vand.u32 %v307, 4294901760
  %v923 = vsub.f32 %v307, %v922
  %v924 = vand.u32 %v923, 4294901760
  %925 = vmatpush1.msra.mxu0 %v924
  %v926 = vand.u32 %v348, 4294901760
  %v927 = vsub.f32 %v348, %v926
  %v928 = vand.u32 %v927, 4294901760
  %929 = vmatprep.subr.mxu0 %v928
  %v930 = vand.u32 %v347, 4294901760
  %v931 = vsub.f32 %v347, %v930
  %v932 = vand.u32 %v931, 4294901760
  %933 = vmatpush1.msra.mxu0 %v932
  %934 = vmatprep.subr.mxu0 0.0
  %935 = vmatpush1.msra.mxu0 0.0
  %936 = vmatprep.subr.mxu0 0.0
  %937 = vmatpush1.msra.mxu0 0.0
  %938 = vmatprep.subr.mxu0 0.0
  %939 = vmatpush1.msra.mxu0 0.0
  %940 = vmatprep.subr.mxu0 0.0
  %941 = vmatpush1.msra.mxu0 0.0
  %942 = vmatprep.subr.mxu0 0.0
  %943 = vmatpush1.msra.mxu0 0.0
  %944 = vmatprep.subr.mxu0 0.0
  %945 = vmatpush1.msra.mxu0 0.0
  %946 = vmatprep.subr.mxu0 0.0
  %947 = vmatpush1.msra.mxu0 0.0
  %948 = vmatprep.subr.mxu0 0.0
  %949 = vmatpush1.msra.mxu0 0.0
  %950 = vmatprep.subr.mxu0 0.0
  %951 = vmatpush1.msra.mxu0 0.0
  %952 = vmatprep.subr.mxu0 0.0
  %953 = vmatpush1.msra.mxu0 0.0
  %954 = vmatprep.subr.mxu0 0.0
  %955 = vmatpush1.msra.mxu0 0.0
  %956 = vmatprep.subr.mxu0 0.0
  %957 = vmatpush1.msra.mxu0 0.0
  %958 = vmatprep.subr.mxu0 0.0
  %959 = vmatpush1.msra.mxu0 0.0
  %960 = vmatprep.subr.mxu0 0.0
  %961 = vmatpush1.msra.mxu0 0.0
  %962 = vmatprep.subr.mxu0 0.0
  %963 = vmatpush1.msra.mxu0 0.0
  %964 = vmatprep.subr.mxu0 0.0
  %965 = vmatpush1.msra.mxu0 0.0
  %966 = vmatprep.subr.mxu0 0.0
  %967 = vmatpush1.msra.mxu0 0.0
  %968 = vmatprep.subr.mxu0 0.0
  %969 = vmatpush1.msra.mxu0 0.0
  %970 = vmatprep.subr.mxu0 0.0
  %971 = vmatpush1.msra.mxu0 0.0
  %972 = vmatprep.subr.mxu0 0.0
  %973 = vmatpush1.msra.mxu0 0.0
  %974 = vmatprep.subr.mxu0 0.0
  %975 = vmatpush1.msra.mxu0 0.0
  %976 = vmatprep.subr.mxu0 0.0
  %977 = vmatpush1.msra.mxu0 0.0
  %978 = vmatprep.subr.mxu0 0.0
  %979 = vmatpush1.msra.mxu0 0.0
  %980 = vmatprep.mubr.f32.mxu0 0.0
  %v981 = vand.u32 %v365, 4294901760
  %982 = vmatmul.mubr.f32.gmra.mrb[0].mxu0 %v981
  %v983 = vpop.f32.mrb[0].mxu0
  %v984 = vadd.f32 %v849, %v983
  %v985 = vpop.f32.mrb[0].mxu0
  %v986 = vadd.f32 %v851, %v985
  %987 = vmatprep.mubr.f32.mxu0 0.0
  %v988 = vand.u32 %v368, 4294901760
  %989 = vmatmul.mubr.f32.gmra.mrb[0].mxu0 %v988
  %v990 = vpop.f32.mrb[0].mxu0
  %v991 = vadd.f32 %v858, %v990
  %v992 = vpop.f32.mrb[0].mxu0
  %v993 = vadd.f32 %v860, %v992
  %994 = vdwg.mxu0
  %v995 = vand.u32 %v68, 4294901760
  %996 = vmatprep.subr.mxu0 %v995
  %v997 = vand.u32 %v67, 4294901760
  %998 = vmatpush1.msra.mxu0 %v997
  %v999 = vand.u32 %v108, 4294901760
  %1000 = vmatprep.subr.mxu0 %v999
  %v1001 = vand.u32 %v107, 4294901760
  %1002 = vmatpush1.msra.mxu0 %v1001
  %v1003 = vand.u32 %v148, 4294901760
  %1004 = vmatprep.subr.mxu0 %v1003
  %v1005 = vand.u32 %v147, 4294901760
  %1006 = vmatpush1.msra.mxu0 %v1005
  %v1007 = vand.u32 %v188, 4294901760
  %1008 = vmatprep.subr.mxu0 %v1007
  %v1009 = vand.u32 %v187, 4294901760
  %1010 = vmatpush1.msra.mxu0 %v1009
  %v1011 = vand.u32 %v24, 4294901760
  %1012 = vmatprep.subr.mxu0 %v1011
  %v1013 = vand.u32 %v23, 4294901760
  %1014 = vmatpush1.msra.mxu0 %v1013
  %v1015 = vand.u32 %v228, 4294901760
  %1016 = vmatprep.subr.mxu0 %v1015
  %v1017 = vand.u32 %v227, 4294901760
  %1018 = vmatpush1.msra.mxu0 %v1017
  %v1019 = vand.u32 %v268, 4294901760
  %1020 = vmatprep.subr.mxu0 %v1019
  %v1021 = vand.u32 %v267, 4294901760
  %1022 = vmatpush1.msra.mxu0 %v1021
  %v1023 = vand.u32 %v308, 4294901760
  %1024 = vmatprep.subr.mxu0 %v1023
  %v1025 = vand.u32 %v307, 4294901760
  %1026 = vmatpush1.msra.mxu0 %v1025
  %v1027 = vand.u32 %v348, 4294901760
  %1028 = vmatprep.subr.mxu0 %v1027
  %v1029 = vand.u32 %v347, 4294901760
  %1030 = vmatpush1.msra.mxu0 %v1029
  %1031 = vmatprep.subr.mxu0 0.0
  %1032 = vmatpush1.msra.mxu0 0.0
  %1033 = vmatprep.subr.mxu0 0.0
  %1034 = vmatpush1.msra.mxu0 0.0
  %1035 = vmatprep.subr.mxu0 0.0
  %1036 = vmatpush1.msra.mxu0 0.0
  %1037 = vmatprep.subr.mxu0 0.0
  %1038 = vmatpush1.msra.mxu0 0.0
  %1039 = vmatprep.subr.mxu0 0.0
  %1040 = vmatpush1.msra.mxu0 0.0
  %1041 = vmatprep.subr.mxu0 0.0
  %1042 = vmatpush1.msra.mxu0 0.0
  %1043 = vmatprep.subr.mxu0 0.0
  %1044 = vmatpush1.msra.mxu0 0.0
  %1045 = vmatprep.subr.mxu0 0.0
  %1046 = vmatpush1.msra.mxu0 0.0
  %1047 = vmatprep.subr.mxu0 0.0
  %1048 = vmatpush1.msra.mxu0 0.0
  %1049 = vmatprep.subr.mxu0 0.0
  %1050 = vmatpush1.msra.mxu0 0.0
  %1051 = vmatprep.subr.mxu0 0.0
  %1052 = vmatpush1.msra.mxu0 0.0
  %1053 = vmatprep.subr.mxu0 0.0
  %1054 = vmatpush1.msra.mxu0 0.0
  %1055 = vmatprep.subr.mxu0 0.0
  %1056 = vmatpush1.msra.mxu0 0.0
  %1057 = vmatprep.subr.mxu0 0.0
  %1058 = vmatpush1.msra.mxu0 0.0
  %1059 = vmatprep.subr.mxu0 0.0
  %1060 = vmatpush1.msra.mxu0 0.0
  %1061 = vmatprep.subr.mxu0 0.0
  %1062 = vmatpush1.msra.mxu0 0.0
  %1063 = vmatprep.subr.mxu0 0.0
  %1064 = vmatpush1.msra.mxu0 0.0
  %1065 = vmatprep.subr.mxu0 0.0
  %1066 = vmatpush1.msra.mxu0 0.0
  %1067 = vmatprep.subr.mxu0 0.0
  %1068 = vmatpush1.msra.mxu0 0.0
  %1069 = vmatprep.subr.mxu0 0.0
  %1070 = vmatpush1.msra.mxu0 0.0
  %1071 = vmatprep.subr.mxu0 0.0
  %1072 = vmatpush1.msra.mxu0 0.0
  %1073 = vmatprep.subr.mxu0 0.0
  %1074 = vmatpush1.msra.mxu0 0.0
  %1075 = vmatprep.subr.mxu0 0.0
  %1076 = vmatpush1.msra.mxu0 0.0
  %1077 = vmatprep.mubr.f32.mxu0 0.0
  %v1078 = vand.u32 %v365, 4294901760
  %1079 = vmatmul.mubr.f32.gmra.mrb[0].mxu0 %v1078
  %v1080 = vpop.f32.mrb[0].mxu0
  %v1081 = vadd.f32 %v984, %v1080
  %v1082 = vpop.f32.mrb[0].mxu0
  %v1083 = vadd.f32 %v986, %v1082
  %1084 = vmatprep.mubr.f32.mxu0 0.0
  %v1085 = vand.u32 %v368, 4294901760
  %1086 = vmatmul.mubr.f32.gmra.mrb[0].mxu0 %v1085
  %v1087 = vpop.f32.mrb[0].mxu0
  %v1088 = vadd.f32 %v991, %v1087
  %v1089 = vpop.f32.mrb[0].mxu0
  %v1090 = vadd.f32 %v993, %v1089
  %1091 = vdwg.mxu0
  %v1092 = vand.u32 %v70, 4294901760
  %1093 = vmatprep.subr.mxu0 %v1092
  %v1094 = vand.u32 %v69, 4294901760
  %1095 = vmatpush1.msra.mxu0 %v1094
  %v1096 = vand.u32 %v110, 4294901760
  %1097 = vmatprep.subr.mxu0 %v1096
  %v1098 = vand.u32 %v109, 4294901760
  %1099 = vmatpush1.msra.mxu0 %v1098
  %v1100 = vand.u32 %v150, 4294901760
  %1101 = vmatprep.subr.mxu0 %v1100
  %v1102 = vand.u32 %v149, 4294901760
  %1103 = vmatpush1.msra.mxu0 %v1102
  %v1104 = vand.u32 %v190, 4294901760
  %1105 = vmatprep.subr.mxu0 %v1104
  %v1106 = vand.u32 %v189, 4294901760
  %1107 = vmatpush1.msra.mxu0 %v1106
  %v1108 = vand.u32 %v27, 4294901760
  %1109 = vmatprep.subr.mxu0 %v1108
  %v1110 = vand.u32 %v26, 4294901760
  %1111 = vmatpush1.msra.mxu0 %v1110
  %v1112 = vand.u32 %v230, 4294901760
  %1113 = vmatprep.subr.mxu0 %v1112
  %v1114 = vand.u32 %v229, 4294901760
  %1115 = vmatpush1.msra.mxu0 %v1114
  %v1116 = vand.u32 %v270, 4294901760
  %1117 = vmatprep.subr.mxu0 %v1116
  %v1118 = vand.u32 %v269, 4294901760
  %1119 = vmatpush1.msra.mxu0 %v1118
  %v1120 = vand.u32 %v310, 4294901760
  %1121 = vmatprep.subr.mxu0 %v1120
  %v1122 = vand.u32 %v309, 4294901760
  %1123 = vmatpush1.msra.mxu0 %v1122
  %v1124 = vand.u32 %v350, 4294901760
  %1125 = vmatprep.subr.mxu0 %v1124
  %v1126 = vand.u32 %v349, 4294901760
  %1127 = vmatpush1.msra.mxu0 %v1126
  %1128 = vmatprep.subr.mxu0 0.0
  %1129 = vmatpush1.msra.mxu0 0.0
  %1130 = vmatprep.subr.mxu0 0.0
  %1131 = vmatpush1.msra.mxu0 0.0
  %1132 = vmatprep.subr.mxu0 0.0
  %1133 = vmatpush1.msra.mxu0 0.0
  %1134 = vmatprep.subr.mxu0 0.0
  %1135 = vmatpush1.msra.mxu0 0.0
  %1136 = vmatprep.subr.mxu0 0.0
  %1137 = vmatpush1.msra.mxu0 0.0
  %1138 = vmatprep.subr.mxu0 0.0
  %1139 = vmatpush1.msra.mxu0 0.0
  %1140 = vmatprep.subr.mxu0 0.0
  %1141 = vmatpush1.msra.mxu0 0.0
  %1142 = vmatprep.subr.mxu0 0.0
  %1143 = vmatpush1.msra.mxu0 0.0
  %1144 = vmatprep.subr.mxu0 0.0
  %1145 = vmatpush1.msra.mxu0 0.0
  %1146 = vmatprep.subr.mxu0 0.0
  %1147 = vmatpush1.msra.mxu0 0.0
  %1148 = vmatprep.subr.mxu0 0.0
  %1149 = vmatpush1.msra.mxu0 0.0
  %1150 = vmatprep.subr.mxu0 0.0
  %1151 = vmatpush1.msra.mxu0 0.0
  %1152 = vmatprep.subr.mxu0 0.0
  %1153 = vmatpush1.msra.mxu0 0.0
  %1154 = vmatprep.subr.mxu0 0.0
  %1155 = vmatpush1.msra.mxu0 0.0
  %1156 = vmatprep.subr.mxu0 0.0
  %1157 = vmatpush1.msra.mxu0 0.0
  %1158 = vmatprep.subr.mxu0 0.0
  %1159 = vmatpush1.msra.mxu0 0.0
  %1160 = vmatprep.subr.mxu0 0.0
  %1161 = vmatpush1.msra.mxu0 0.0
  %1162 = vmatprep.subr.mxu0 0.0
  %1163 = vmatpush1.msra.mxu0 0.0
  %1164 = vmatprep.subr.mxu0 0.0
  %1165 = vmatpush1.msra.mxu0 0.0
  %1166 = vmatprep.subr.mxu0 0.0
  %1167 = vmatpush1.msra.mxu0 0.0
  %1168 = vmatprep.subr.mxu0 0.0
  %1169 = vmatpush1.msra.mxu0 0.0
  %1170 = vmatprep.subr.mxu0 0.0
  %1171 = vmatpush1.msra.mxu0 0.0
  %1172 = vmatprep.subr.mxu0 0.0
  %1173 = vmatpush1.msra.mxu0 0.0
  %1174 = vmatprep.mubr.f32.mxu0 0.0
  %v1175 = vand.u32 %v365, 4294901760
  %v1176 = vsub.f32 %v365, %v1175
  %v1177 = vand.u32 %v1176, 4294901760
  %v1178 = vsub.f32 %v1176, %v1177
  %v1179 = vand.u32 %v1178, 4294901760
  %1180 = vmatmul.mubr.f32.gmra.mrb[0].mxu0 %v1179
  %v1181 = vpop.f32.mrb[0].mxu0
  %v1182 = vadd.f32 %v356, %v1181
  %v1183 = vpop.f32.mrb[0].mxu0
  %v1184 = vadd.f32 %v356, %v1183
  %1185 = vmatprep.mubr.f32.mxu0 0.0
  %v1186 = vand.u32 %v368, 4294901760
  %v1187 = vsub.f32 %v368, %v1186
  %v1188 = vand.u32 %v1187, 4294901760
  %v1189 = vsub.f32 %v1187, %v1188
  %v1190 = vand.u32 %v1189, 4294901760
  %1191 = vmatmul.mubr.f32.gmra.mrb[0].mxu0 %v1190
  %v1192 = vpop.f32.mrb[0].mxu0
  %v1193 = vadd.f32 %v361, %v1192
  %v1194 = vpop.f32.mrb[0].mxu0
  %v1195 = vadd.f32 %v361, %v1194
  %1196 = vdwg.mxu0
  %v1197 = vand.u32 %v70, 4294901760
  %v1198 = vsub.f32 %v70, %v1197
  %v1199 = vand.u32 %v1198, 4294901760
  %v1200 = vsub.f32 %v1198, %v1199
  %v1201 = vand.u32 %v1200, 4294901760
  %1202 = vmatprep.subr.mxu0 %v1201
  %v1203 = vand.u32 %v69, 4294901760
  %v1204 = vsub.f32 %v69, %v1203
  %v1205 = vand.u32 %v1204, 4294901760
  %v1206 = vsub.f32 %v1204, %v1205
  %v1207 = vand.u32 %v1206, 4294901760
  %1208 = vmatpush1.msra.mxu0 %v1207
  %v1209 = vand.u32 %v110, 4294901760
  %v1210 = vsub.f32 %v110, %v1209
  %v1211 = vand.u32 %v1210, 4294901760
  %v1212 = vsub.f32 %v1210, %v1211
  %v1213 = vand.u32 %v1212, 4294901760
  %1214 = vmatprep.subr.mxu0 %v1213
  %v1215 = vand.u32 %v109, 4294901760
  %v1216 = vsub.f32 %v109, %v1215
  %v1217 = vand.u32 %v1216, 4294901760
  %v1218 = vsub.f32 %v1216, %v1217
  %v1219 = vand.u32 %v1218, 4294901760
  %1220 = vmatpush1.msra.mxu0 %v1219
  %v1221 = vand.u32 %v150, 4294901760
  %v1222 = vsub.f32 %v150, %v1221
  %v1223 = vand.u32 %v1222, 4294901760
  %v1224 = vsub.f32 %v1222, %v1223
  %v1225 = vand.u32 %v1224, 4294901760
  %1226 = vmatprep.subr.mxu0 %v1225
  %v1227 = vand.u32 %v149, 4294901760
  %v1228 = vsub.f32 %v149, %v1227
  %v1229 = vand.u32 %v1228, 4294901760
  %v1230 = vsub.f32 %v1228, %v1229
  %v1231 = vand.u32 %v1230, 4294901760
  %1232 = vmatpush1.msra.mxu0 %v1231
  %v1233 = vand.u32 %v190, 4294901760
  %v1234 = vsub.f32 %v190, %v1233
  %v1235 = vand.u32 %v1234, 4294901760
  %v1236 = vsub.f32 %v1234, %v1235
  %v1237 = vand.u32 %v1236, 4294901760
  %1238 = vmatprep.subr.mxu0 %v1237
  %v1239 = vand.u32 %v189, 4294901760
  %v1240 = vsub.f32 %v189, %v1239
  %v1241 = vand.u32 %v1240, 4294901760
  %v1242 = vsub.f32 %v1240, %v1241
  %v1243 = vand.u32 %v1242, 4294901760
  %1244 = vmatpush1.msra.mxu0 %v1243
  %v1245 = vand.u32 %v27, 4294901760
  %v1246 = vsub.f32 %v27, %v1245
  %v1247 = vand.u32 %v1246, 4294901760
  %v1248 = vsub.f32 %v1246, %v1247
  %v1249 = vand.u32 %v1248, 4294901760
  %1250 = vmatprep.subr.mxu0 %v1249
  %v1251 = vand.u32 %v26, 4294901760
  %v1252 = vsub.f32 %v26, %v1251
  %v1253 = vand.u32 %v1252, 4294901760
  %v1254 = vsub.f32 %v1252, %v1253
  %v1255 = vand.u32 %v1254, 4294901760
  %1256 = vmatpush1.msra.mxu0 %v1255
  %v1257 = vand.u32 %v230, 4294901760
  %v1258 = vsub.f32 %v230, %v1257
  %v1259 = vand.u32 %v1258, 4294901760
  %v1260 = vsub.f32 %v1258, %v1259
  %v1261 = vand.u32 %v1260, 4294901760
  %1262 = vmatprep.subr.mxu0 %v1261
  %v1263 = vand.u32 %v229, 4294901760
  %v1264 = vsub.f32 %v229, %v1263
  %v1265 = vand.u32 %v1264, 4294901760
  %v1266 = vsub.f32 %v1264, %v1265
  %v1267 = vand.u32 %v1266, 4294901760
  %1268 = vmatpush1.msra.mxu0 %v1267
  %v1269 = vand.u32 %v270, 4294901760
  %v1270 = vsub.f32 %v270, %v1269
  %v1271 = vand.u32 %v1270, 4294901760
  %v1272 = vsub.f32 %v1270, %v1271
  %v1273 = vand.u32 %v1272, 4294901760
  %1274 = vmatprep.subr.mxu0 %v1273
  %v1275 = vand.u32 %v269, 4294901760
  %v1276 = vsub.f32 %v269, %v1275
  %v1277 = vand.u32 %v1276, 4294901760
  %v1278 = vsub.f32 %v1276, %v1277
  %v1279 = vand.u32 %v1278, 4294901760
  %1280 = vmatpush1.msra.mxu0 %v1279
  %v1281 = vand.u32 %v310, 4294901760
  %v1282 = vsub.f32 %v310, %v1281
  %v1283 = vand.u32 %v1282, 4294901760
  %v1284 = vsub.f32 %v1282, %v1283
  %v1285 = vand.u32 %v1284, 4294901760
  %1286 = vmatprep.subr.mxu0 %v1285
  %v1287 = vand.u32 %v309, 4294901760
  %v1288 = vsub.f32 %v309, %v1287
  %v1289 = vand.u32 %v1288, 4294901760
  %v1290 = vsub.f32 %v1288, %v1289
  %v1291 = vand.u32 %v1290, 4294901760
  %1292 = vmatpush1.msra.mxu0 %v1291
  %v1293 = vand.u32 %v350, 4294901760
  %v1294 = vsub.f32 %v350, %v1293
  %v1295 = vand.u32 %v1294, 4294901760
  %v1296 = vsub.f32 %v1294, %v1295
  %v1297 = vand.u32 %v1296, 4294901760
  %1298 = vmatprep.subr.mxu0 %v1297
  %v1299 = vand.u32 %v349, 4294901760
  %v1300 = vsub.f32 %v349, %v1299
  %v1301 = vand.u32 %v1300, 4294901760
  %v1302 = vsub.f32 %v1300, %v1301
  %v1303 = vand.u32 %v1302, 4294901760
  %1304 = vmatpush1.msra.mxu0 %v1303
  %1305 = vmatprep.subr.mxu0 0.0
  %1306 = vmatpush1.msra.mxu0 0.0
  %1307 = vmatprep.subr.mxu0 0.0
  %1308 = vmatpush1.msra.mxu0 0.0
  %1309 = vmatprep.subr.mxu0 0.0
  %1310 = vmatpush1.msra.mxu0 0.0
  %1311 = vmatprep.subr.mxu0 0.0
  %1312 = vmatpush1.msra.mxu0 0.0
  %1313 = vmatprep.subr.mxu0 0.0
  %1314 = vmatpush1.msra.mxu0 0.0
  %1315 = vmatprep.subr.mxu0 0.0
  %1316 = vmatpush1.msra.mxu0 0.0
  %1317 = vmatprep.subr.mxu0 0.0
  %1318 = vmatpush1.msra.mxu0 0.0
  %1319 = vmatprep.subr.mxu0 0.0
  %1320 = vmatpush1.msra.mxu0 0.0
  %1321 = vmatprep.subr.mxu0 0.0
  %1322 = vmatpush1.msra.mxu0 0.0
  %1323 = vmatprep.subr.mxu0 0.0
  %1324 = vmatpush1.msra.mxu0 0.0
  %1325 = vmatprep.subr.mxu0 0.0
  %1326 = vmatpush1.msra.mxu0 0.0
  %1327 = vmatprep.subr.mxu0 0.0
  %1328 = vmatpush1.msra.mxu0 0.0
  %1329 = vmatprep.subr.mxu0 0.0
  %1330 = vmatpush1.msra.mxu0 0.0
  %1331 = vmatprep.subr.mxu0 0.0
  %1332 = vmatpush1.msra.mxu0 0.0
  %1333 = vmatprep.subr.mxu0 0.0
  %1334 = vmatpush1.msra.mxu0 0.0
  %1335 = vmatprep.subr.mxu0 0.0
  %1336 = vmatpush1.msra.mxu0 0.0
  %1337 = vmatprep.subr.mxu0 0.0
  %1338 = vmatpush1.msra.mxu0 0.0
  %1339 = vmatprep.subr.mxu0 0.0
  %1340 = vmatpush1.msra.mxu0 0.0
  %1341 = vmatprep.subr.mxu0 0.0
  %1342 = vmatpush1.msra.mxu0 0.0
  %1343 = vmatprep.subr.mxu0 0.0
  %1344 = vmatpush1.msra.mxu0 0.0
  %1345 = vmatprep.subr.mxu0 0.0
  %1346 = vmatpush1.msra.mxu0 0.0
  %1347 = vmatprep.subr.mxu0 0.0
  %1348 = vmatpush1.msra.mxu0 0.0
  %1349 = vmatprep.subr.mxu0 0.0
  %1350 = vmatpush1.msra.mxu0 0.0
  %1351 = vmatprep.mubr.f32.mxu0 0.0
  %v1352 = vand.u32 %v365, 4294901760
  %1353 = vmatmul.mubr.f32.gmra.mrb[0].mxu0 %v1352
  %v1354 = vpop.f32.mrb[0].mxu0
  %v1355 = vadd.f32 %v1182, %v1354
  %v1356 = vpop.f32.mrb[0].mxu0
  %v1357 = vadd.f32 %v1184, %v1356
  %1358 = vmatprep.mubr.f32.mxu0 0.0
  %v1359 = vand.u32 %v368, 4294901760
  %1360 = vmatmul.mubr.f32.gmra.mrb[0].mxu0 %v1359
  %v1361 = vpop.f32.mrb[0].mxu0
  %v1362 = vadd.f32 %v1193, %v1361
  %v1363 = vpop.f32.mrb[0].mxu0
  %v1364 = vadd.f32 %v1195, %v1363
  %1365 = vdwg.mxu0
  %v1366 = vand.u32 %v70, 4294901760
  %v1367 = vsub.f32 %v70, %v1366
  %1368 = vmatprep.subr.mxu0 %v1367
  %v1369 = vand.u32 %v69, 4294901760
  %v1370 = vsub.f32 %v69, %v1369
  %1371 = vmatpush1.msra.mxu0 %v1370
  %v1372 = vand.u32 %v110, 4294901760
  %v1373 = vsub.f32 %v110, %v1372
  %1374 = vmatprep.subr.mxu0 %v1373
  %v1375 = vand.u32 %v109, 4294901760
  %v1376 = vsub.f32 %v109, %v1375
  %1377 = vmatpush1.msra.mxu0 %v1376
  %v1378 = vand.u32 %v150, 4294901760
  %v1379 = vsub.f32 %v150, %v1378
  %1380 = vmatprep.subr.mxu0 %v1379
  %v1381 = vand.u32 %v149, 4294901760
  %v1382 = vsub.f32 %v149, %v1381
  %1383 = vmatpush1.msra.mxu0 %v1382
  %v1384 = vand.u32 %v190, 4294901760
  %v1385 = vsub.f32 %v190, %v1384
  %1386 = vmatprep.subr.mxu0 %v1385
  %v1387 = vand.u32 %v189, 4294901760
  %v1388 = vsub.f32 %v189, %v1387
  %1389 = vmatpush1.msra.mxu0 %v1388
  %v1390 = vand.u32 %v27, 4294901760
  %v1391 = vsub.f32 %v27, %v1390
  %1392 = vmatprep.subr.mxu0 %v1391
  %v1393 = vand.u32 %v26, 4294901760
  %v1394 = vsub.f32 %v26, %v1393
  %1395 = vmatpush1.msra.mxu0 %v1394
  %v1396 = vand.u32 %v230, 4294901760
  %v1397 = vsub.f32 %v230, %v1396
  %1398 = vmatprep.subr.mxu0 %v1397
  %v1399 = vand.u32 %v229, 4294901760
  %v1400 = vsub.f32 %v229, %v1399
  %1401 = vmatpush1.msra.mxu0 %v1400
  %v1402 = vand.u32 %v270, 4294901760
  %v1403 = vsub.f32 %v270, %v1402
  %1404 = vmatprep.subr.mxu0 %v1403
  %v1405 = vand.u32 %v269, 4294901760
  %v1406 = vsub.f32 %v269, %v1405
  %1407 = vmatpush1.msra.mxu0 %v1406
  %v1408 = vand.u32 %v310, 4294901760
  %v1409 = vsub.f32 %v310, %v1408
  %1410 = vmatprep.subr.mxu0 %v1409
  %v1411 = vand.u32 %v309, 4294901760
  %v1412 = vsub.f32 %v309, %v1411
  %1413 = vmatpush1.msra.mxu0 %v1412
  %v1414 = vand.u32 %v350, 4294901760
  %v1415 = vsub.f32 %v350, %v1414
  %1416 = vmatprep.subr.mxu0 %v1415
  %v1417 = vand.u32 %v349, 4294901760
  %v1418 = vsub.f32 %v349, %v1417
  %1419 = vmatpush1.msra.mxu0 %v1418
  %1420 = vmatprep.subr.mxu0 0.0
  %1421 = vmatpush1.msra.mxu0 0.0
  %1422 = vmatprep.subr.mxu0 0.0
  %1423 = vmatpush1.msra.mxu0 0.0
  %1424 = vmatprep.subr.mxu0 0.0
  %1425 = vmatpush1.msra.mxu0 0.0
  %1426 = vmatprep.subr.mxu0 0.0
  %1427 = vmatpush1.msra.mxu0 0.0
  %1428 = vmatprep.subr.mxu0 0.0
  %1429 = vmatpush1.msra.mxu0 0.0
  %1430 = vmatprep.subr.mxu0 0.0
  %1431 = vmatpush1.msra.mxu0 0.0
  %1432 = vmatprep.subr.mxu0 0.0
  %1433 = vmatpush1.msra.mxu0 0.0
  %1434 = vmatprep.subr.mxu0 0.0
  %1435 = vmatpush1.msra.mxu0 0.0
  %1436 = vmatprep.subr.mxu0 0.0
  %1437 = vmatpush1.msra.mxu0 0.0
  %1438 = vmatprep.subr.mxu0 0.0
  %1439 = vmatpush1.msra.mxu0 0.0
  %1440 = vmatprep.subr.mxu0 0.0
  %1441 = vmatpush1.msra.mxu0 0.0
  %1442 = vmatprep.subr.mxu0 0.0
  %1443 = vmatpush1.msra.mxu0 0.0
  %1444 = vmatprep.subr.mxu0 0.0
  %1445 = vmatpush1.msra.mxu0 0.0
  %1446 = vmatprep.subr.mxu0 0.0
  %1447 = vmatpush1.msra.mxu0 0.0
  %1448 = vmatprep.subr.mxu0 0.0
  %1449 = vmatpush1.msra.mxu0 0.0
  %1450 = vmatprep.subr.mxu0 0.0
  %1451 = vmatpush1.msra.mxu0 0.0
  %1452 = vmatprep.subr.mxu0 0.0
  %1453 = vmatpush1.msra.mxu0 0.0
  %1454 = vmatprep.subr.mxu0 0.0
  %1455 = vmatpush1.msra.mxu0 0.0
  %1456 = vmatprep.subr.mxu0 0.0
  %1457 = vmatpush1.msra.mxu0 0.0
  %1458 = vmatprep.subr.mxu0 0.0
  %1459 = vmatpush1.msra.mxu0 0.0
  %1460 = vmatprep.subr.mxu0 0.0
  %1461 = vmatpush1.msra.mxu0 0.0
  %1462 = vmatprep.subr.mxu0 0.0
  %1463 = vmatpush1.msra.mxu0 0.0
  %1464 = vmatprep.subr.mxu0 0.0
  %1465 = vmatpush1.msra.mxu0 0.0
  %1466 = vmatprep.mubr.f32.mxu0 0.0
  %v1467 = vand.u32 %v365, 4294901760
  %v1468 = vsub.f32 %v365, %v1467
  %1469 = vmatmul.mubr.f32.gmra.mrb[0].mxu0 %v1468
  %v1470 = vpop.f32.mrb[0].mxu0
  %v1471 = vadd.f32 %v1355, %v1470
  %v1472 = vpop.f32.mrb[0].mxu0
  %v1473 = vadd.f32 %v1357, %v1472
  %1474 = vmatprep.mubr.f32.mxu0 0.0
  %v1475 = vand.u32 %v368, 4294901760
  %v1476 = vsub.f32 %v368, %v1475
  %1477 = vmatmul.mubr.f32.gmra.mrb[0].mxu0 %v1476
  %v1478 = vpop.f32.mrb[0].mxu0
  %v1479 = vadd.f32 %v1362, %v1478
  %v1480 = vpop.f32.mrb[0].mxu0
  %v1481 = vadd.f32 %v1364, %v1480
  %1482 = vdwg.mxu0
  %v1483 = vand.u32 %v70, 4294901760
  %1484 = vmatprep.subr.mxu0 %v1483
  %v1485 = vand.u32 %v69, 4294901760
  %1486 = vmatpush1.msra.mxu0 %v1485
  %v1487 = vand.u32 %v110, 4294901760
  %1488 = vmatprep.subr.mxu0 %v1487
  %v1489 = vand.u32 %v109, 4294901760
  %1490 = vmatpush1.msra.mxu0 %v1489
  %v1491 = vand.u32 %v150, 4294901760
  %1492 = vmatprep.subr.mxu0 %v1491
  %v1493 = vand.u32 %v149, 4294901760
  %1494 = vmatpush1.msra.mxu0 %v1493
  %v1495 = vand.u32 %v190, 4294901760
  %1496 = vmatprep.subr.mxu0 %v1495
  %v1497 = vand.u32 %v189, 4294901760
  %1498 = vmatpush1.msra.mxu0 %v1497
  %v1499 = vand.u32 %v27, 4294901760
  %1500 = vmatprep.subr.mxu0 %v1499
  %v1501 = vand.u32 %v26, 4294901760
  %1502 = vmatpush1.msra.mxu0 %v1501
  %v1503 = vand.u32 %v230, 4294901760
  %1504 = vmatprep.subr.mxu0 %v1503
  %v1505 = vand.u32 %v229, 4294901760
  %1506 = vmatpush1.msra.mxu0 %v1505
  %v1507 = vand.u32 %v270, 4294901760
  %1508 = vmatprep.subr.mxu0 %v1507
  %v1509 = vand.u32 %v269, 4294901760
  %1510 = vmatpush1.msra.mxu0 %v1509
  %v1511 = vand.u32 %v310, 4294901760
  %1512 = vmatprep.subr.mxu0 %v1511
  %v1513 = vand.u32 %v309, 4294901760
  %1514 = vmatpush1.msra.mxu0 %v1513
  %v1515 = vand.u32 %v350, 4294901760
  %1516 = vmatprep.subr.mxu0 %v1515
  %v1517 = vand.u32 %v349, 4294901760
  %1518 = vmatpush1.msra.mxu0 %v1517
  %1519 = vmatprep.subr.mxu0 0.0
  %1520 = vmatpush1.msra.mxu0 0.0
  %1521 = vmatprep.subr.mxu0 0.0
  %1522 = vmatpush1.msra.mxu0 0.0
  %1523 = vmatprep.subr.mxu0 0.0
  %1524 = vmatpush1.msra.mxu0 0.0
  %1525 = vmatprep.subr.mxu0 0.0
  %1526 = vmatpush1.msra.mxu0 0.0
  %1527 = vmatprep.subr.mxu0 0.0
  %1528 = vmatpush1.msra.mxu0 0.0
  %1529 = vmatprep.subr.mxu0 0.0
  %1530 = vmatpush1.msra.mxu0 0.0
  %1531 = vmatprep.subr.mxu0 0.0
  %1532 = vmatpush1.msra.mxu0 0.0
  %1533 = vmatprep.subr.mxu0 0.0
  %1534 = vmatpush1.msra.mxu0 0.0
  %1535 = vmatprep.subr.mxu0 0.0
  %1536 = vmatpush1.msra.mxu0 0.0
  %1537 = vmatprep.subr.mxu0 0.0
  %1538 = vmatpush1.msra.mxu0 0.0
  %1539 = vmatprep.subr.mxu0 0.0
  %1540 = vmatpush1.msra.mxu0 0.0
  %1541 = vmatprep.subr.mxu0 0.0
  %1542 = vmatpush1.msra.mxu0 0.0
  %1543 = vmatprep.subr.mxu0 0.0
  %1544 = vmatpush1.msra.mxu0 0.0
  %1545 = vmatprep.subr.mxu0 0.0
  %1546 = vmatpush1.msra.mxu0 0.0
  %1547 = vmatprep.subr.mxu0 0.0
  %1548 = vmatpush1.msra.mxu0 0.0
  %1549 = vmatprep.subr.mxu0 0.0
  %1550 = vmatpush1.msra.mxu0 0.0
  %1551 = vmatprep.subr.mxu0 0.0
  %1552 = vmatpush1.msra.mxu0 0.0
  %1553 = vmatprep.subr.mxu0 0.0
  %1554 = vmatpush1.msra.mxu0 0.0
  %1555 = vmatprep.subr.mxu0 0.0
  %1556 = vmatpush1.msra.mxu0 0.0
  %1557 = vmatprep.subr.mxu0 0.0
  %1558 = vmatpush1.msra.mxu0 0.0
  %1559 = vmatprep.subr.mxu0 0.0
  %1560 = vmatpush1.msra.mxu0 0.0
  %1561 = vmatprep.subr.mxu0 0.0
  %1562 = vmatpush1.msra.mxu0 0.0
  %1563 = vmatprep.subr.mxu0 0.0
  %1564 = vmatpush1.msra.mxu0 0.0
  %1565 = vmatprep.mubr.f32.mxu0 0.0
  %v1566 = vand.u32 %v365, 4294901760
  %v1567 = vsub.f32 %v365, %v1566
  %v1568 = vand.u32 %v1567, 4294901760
  %1569 = vmatmul.mubr.f32.gmra.mrb[0].mxu0 %v1568
  %v1570 = vpop.f32.mrb[0].mxu0
  %v1571 = vadd.f32 %v1471, %v1570
  %v1572 = vpop.f32.mrb[0].mxu0
  %v1573 = vadd.f32 %v1473, %v1572
  %1574 = vmatprep.mubr.f32.mxu0 0.0
  %v1575 = vand.u32 %v368, 4294901760
  %v1576 = vsub.f32 %v368, %v1575
  %v1577 = vand.u32 %v1576, 4294901760
  %1578 = vmatmul.mubr.f32.gmra.mrb[0].mxu0 %v1577
  %v1579 = vpop.f32.mrb[0].mxu0
  %v1580 = vadd.f32 %v1479, %v1579
  %v1581 = vpop.f32.mrb[0].mxu0
  %v1582 = vadd.f32 %v1481, %v1581
  %1583 = vdwg.mxu0
  %v1584 = vand.u32 %v70, 4294901760
  %v1585 = vsub.f32 %v70, %v1584
  %v1586 = vand.u32 %v1585, 4294901760
  %1587 = vmatprep.subr.mxu0 %v1586
  %v1588 = vand.u32 %v69, 4294901760
  %v1589 = vsub.f32 %v69, %v1588
  %v1590 = vand.u32 %v1589, 4294901760
  %1591 = vmatpush1.msra.mxu0 %v1590
  %v1592 = vand.u32 %v110, 4294901760
  %v1593 = vsub.f32 %v110, %v1592
  %v1594 = vand.u32 %v1593, 4294901760
  %1595 = vmatprep.subr.mxu0 %v1594
  %v1596 = vand.u32 %v109, 4294901760
  %v1597 = vsub.f32 %v109, %v1596
  %v1598 = vand.u32 %v1597, 4294901760
  %1599 = vmatpush1.msra.mxu0 %v1598
  %v1600 = vand.u32 %v150, 4294901760
  %v1601 = vsub.f32 %v150, %v1600
  %v1602 = vand.u32 %v1601, 4294901760
  %1603 = vmatprep.subr.mxu0 %v1602
  %v1604 = vand.u32 %v149, 4294901760
  %v1605 = vsub.f32 %v149, %v1604
  %v1606 = vand.u32 %v1605, 4294901760
  %1607 = vmatpush1.msra.mxu0 %v1606
  %v1608 = vand.u32 %v190, 4294901760
  %v1609 = vsub.f32 %v190, %v1608
  %v1610 = vand.u32 %v1609, 4294901760
  %1611 = vmatprep.subr.mxu0 %v1610
  %v1612 = vand.u32 %v189, 4294901760
  %v1613 = vsub.f32 %v189, %v1612
  %v1614 = vand.u32 %v1613, 4294901760
  %1615 = vmatpush1.msra.mxu0 %v1614
  %v1616 = vand.u32 %v27, 4294901760
  %v1617 = vsub.f32 %v27, %v1616
  %v1618 = vand.u32 %v1617, 4294901760
  %1619 = vmatprep.subr.mxu0 %v1618
  %v1620 = vand.u32 %v26, 4294901760
  %v1621 = vsub.f32 %v26, %v1620
  %v1622 = vand.u32 %v1621, 4294901760
  %1623 = vmatpush1.msra.mxu0 %v1622
  %v1624 = vand.u32 %v230, 4294901760
  %v1625 = vsub.f32 %v230, %v1624
  %v1626 = vand.u32 %v1625, 4294901760
  %1627 = vmatprep.subr.mxu0 %v1626
  %v1628 = vand.u32 %v229, 4294901760
  %v1629 = vsub.f32 %v229, %v1628
  %v1630 = vand.u32 %v1629, 4294901760
  %1631 = vmatpush1.msra.mxu0 %v1630
  %v1632 = vand.u32 %v270, 4294901760
  %v1633 = vsub.f32 %v270, %v1632
  %v1634 = vand.u32 %v1633, 4294901760
  %1635 = vmatprep.subr.mxu0 %v1634
  %v1636 = vand.u32 %v269, 4294901760
  %v1637 = vsub.f32 %v269, %v1636
  %v1638 = vand.u32 %v1637, 4294901760
  %1639 = vmatpush1.msra.mxu0 %v1638
  %v1640 = vand.u32 %v310, 4294901760
  %v1641 = vsub.f32 %v310, %v1640
  %v1642 = vand.u32 %v1641, 4294901760
  %1643 = vmatprep.subr.mxu0 %v1642
  %v1644 = vand.u32 %v309, 4294901760
  %v1645 = vsub.f32 %v309, %v1644
  %v1646 = vand.u32 %v1645, 4294901760
  %1647 = vmatpush1.msra.mxu0 %v1646
  %v1648 = vand.u32 %v350, 4294901760
  %v1649 = vsub.f32 %v350, %v1648
  %v1650 = vand.u32 %v1649, 4294901760
  %1651 = vmatprep.subr.mxu0 %v1650
  %v1652 = vand.u32 %v349, 4294901760
  %v1653 = vsub.f32 %v349, %v1652
  %v1654 = vand.u32 %v1653, 4294901760
  %1655 = vmatpush1.msra.mxu0 %v1654
  %1656 = vmatprep.subr.mxu0 0.0
  %1657 = vmatpush1.msra.mxu0 0.0
  %1658 = vmatprep.subr.mxu0 0.0
  %1659 = vmatpush1.msra.mxu0 0.0
  %1660 = vmatprep.subr.mxu0 0.0
  %1661 = vmatpush1.msra.mxu0 0.0
  %1662 = vmatprep.subr.mxu0 0.0
  %1663 = vmatpush1.msra.mxu0 0.0
  %1664 = vmatprep.subr.mxu0 0.0
  %1665 = vmatpush1.msra.mxu0 0.0
  %1666 = vmatprep.subr.mxu0 0.0
  %1667 = vmatpush1.msra.mxu0 0.0
  %1668 = vmatprep.subr.mxu0 0.0
  %1669 = vmatpush1.msra.mxu0 0.0
  %1670 = vmatprep.subr.mxu0 0.0
  %1671 = vmatpush1.msra.mxu0 0.0
  %1672 = vmatprep.subr.mxu0 0.0
  %1673 = vmatpush1.msra.mxu0 0.0
  %1674 = vmatprep.subr.mxu0 0.0
  %1675 = vmatpush1.msra.mxu0 0.0
  %1676 = vmatprep.subr.mxu0 0.0
  %1677 = vmatpush1.msra.mxu0 0.0
  %1678 = vmatprep.subr.mxu0 0.0
  %1679 = vmatpush1.msra.mxu0 0.0
  %1680 = vmatprep.subr.mxu0 0.0
  %1681 = vmatpush1.msra.mxu0 0.0
  %1682 = vmatprep.subr.mxu0 0.0
  %1683 = vmatpush1.msra.mxu0 0.0
  %1684 = vmatprep.subr.mxu0 0.0
  %1685 = vmatpush1.msra.mxu0 0.0
  %1686 = vmatprep.subr.mxu0 0.0
  %1687 = vmatpush1.msra.mxu0 0.0
  %1688 = vmatprep.subr.mxu0 0.0
  %1689 = vmatpush1.msra.mxu0 0.0
  %1690 = vmatprep.subr.mxu0 0.0
  %1691 = vmatpush1.msra.mxu0 0.0
  %1692 = vmatprep.subr.mxu0 0.0
  %1693 = vmatpush1.msra.mxu0 0.0
  %1694 = vmatprep.subr.mxu0 0.0
  %1695 = vmatpush1.msra.mxu0 0.0
  %1696 = vmatprep.subr.mxu0 0.0
  %1697 = vmatpush1.msra.mxu0 0.0
  %1698 = vmatprep.subr.mxu0 0.0
  %1699 = vmatpush1.msra.mxu0 0.0
  %1700 = vmatprep.subr.mxu0 0.0
  %1701 = vmatpush1.msra.mxu0 0.0
  %1702 = vmatprep.mubr.f32.mxu0 0.0
  %v1703 = vand.u32 %v365, 4294901760
  %1704 = vmatmul.mubr.f32.gmra.mrb[0].mxu0 %v1703
  %v1705 = vpop.f32.mrb[0].mxu0
  %v1706 = vadd.f32 %v1571, %v1705
  %v1707 = vpop.f32.mrb[0].mxu0
  %v1708 = vadd.f32 %v1573, %v1707
  %1709 = vmatprep.mubr.f32.mxu0 0.0
  %v1710 = vand.u32 %v368, 4294901760
  %1711 = vmatmul.mubr.f32.gmra.mrb[0].mxu0 %v1710
  %v1712 = vpop.f32.mrb[0].mxu0
  %v1713 = vadd.f32 %v1580, %v1712
  %v1714 = vpop.f32.mrb[0].mxu0
  %v1715 = vadd.f32 %v1582, %v1714
  %1716 = vdwg.mxu0
  %v1717 = vand.u32 %v70, 4294901760
  %1718 = vmatprep.subr.mxu0 %v1717
  %v1719 = vand.u32 %v69, 4294901760
  %1720 = vmatpush1.msra.mxu0 %v1719
  %v1721 = vand.u32 %v110, 4294901760
  %1722 = vmatprep.subr.mxu0 %v1721
  %v1723 = vand.u32 %v109, 4294901760
  %1724 = vmatpush1.msra.mxu0 %v1723
  %v1725 = vand.u32 %v150, 4294901760
  %1726 = vmatprep.subr.mxu0 %v1725
  %v1727 = vand.u32 %v149, 4294901760
  %1728 = vmatpush1.msra.mxu0 %v1727
  %v1729 = vand.u32 %v190, 4294901760
  %1730 = vmatprep.subr.mxu0 %v1729
  %v1731 = vand.u32 %v189, 4294901760
  %1732 = vmatpush1.msra.mxu0 %v1731
  %v1733 = vand.u32 %v27, 4294901760
  %1734 = vmatprep.subr.mxu0 %v1733
  %v1735 = vand.u32 %v26, 4294901760
  %1736 = vmatpush1.msra.mxu0 %v1735
  %v1737 = vand.u32 %v230, 4294901760
  %1738 = vmatprep.subr.mxu0 %v1737
  %v1739 = vand.u32 %v229, 4294901760
  %1740 = vmatpush1.msra.mxu0 %v1739
  %v1741 = vand.u32 %v270, 4294901760
  %1742 = vmatprep.subr.mxu0 %v1741
  %v1743 = vand.u32 %v269, 4294901760
  %1744 = vmatpush1.msra.mxu0 %v1743
  %v1745 = vand.u32 %v310, 4294901760
  %1746 = vmatprep.subr.mxu0 %v1745
  %v1747 = vand.u32 %v309, 4294901760
  %1748 = vmatpush1.msra.mxu0 %v1747
  %v1749 = vand.u32 %v350, 4294901760
  %1750 = vmatprep.subr.mxu0 %v1749
  %v1751 = vand.u32 %v349, 4294901760
  %1752 = vmatpush1.msra.mxu0 %v1751
  %1753 = vmatprep.subr.mxu0 0.0
  %1754 = vmatpush1.msra.mxu0 0.0
  %1755 = vmatprep.subr.mxu0 0.0
  %1756 = vmatpush1.msra.mxu0 0.0
  %1757 = vmatprep.subr.mxu0 0.0
  %1758 = vmatpush1.msra.mxu0 0.0
  %1759 = vmatprep.subr.mxu0 0.0
  %1760 = vmatpush1.msra.mxu0 0.0
  %1761 = vmatprep.subr.mxu0 0.0
  %1762 = vmatpush1.msra.mxu0 0.0
  %1763 = vmatprep.subr.mxu0 0.0
  %1764 = vmatpush1.msra.mxu0 0.0
  %1765 = vmatprep.subr.mxu0 0.0
  %1766 = vmatpush1.msra.mxu0 0.0
  %1767 = vmatprep.subr.mxu0 0.0
  %1768 = vmatpush1.msra.mxu0 0.0
  %1769 = vmatprep.subr.mxu0 0.0
  %1770 = vmatpush1.msra.mxu0 0.0
  %1771 = vmatprep.subr.mxu0 0.0
  %1772 = vmatpush1.msra.mxu0 0.0
  %1773 = vmatprep.subr.mxu0 0.0
  %1774 = vmatpush1.msra.mxu0 0.0
  %1775 = vmatprep.subr.mxu0 0.0
  %1776 = vmatpush1.msra.mxu0 0.0
  %1777 = vmatprep.subr.mxu0 0.0
  %1778 = vmatpush1.msra.mxu0 0.0
  %1779 = vmatprep.subr.mxu0 0.0
  %1780 = vmatpush1.msra.mxu0 0.0
  %1781 = vmatprep.subr.mxu0 0.0
  %1782 = vmatpush1.msra.mxu0 0.0
  %1783 = vmatprep.subr.mxu0 0.0
  %1784 = vmatpush1.msra.mxu0 0.0
  %1785 = vmatprep.subr.mxu0 0.0
  %1786 = vmatpush1.msra.mxu0 0.0
  %1787 = vmatprep.subr.mxu0 0.0
  %1788 = vmatpush1.msra.mxu0 0.0
  %1789 = vmatprep.subr.mxu0 0.0
  %1790 = vmatpush1.msra.mxu0 0.0
  %1791 = vmatprep.subr.mxu0 0.0
  %1792 = vmatpush1.msra.mxu0 0.0
  %1793 = vmatprep.subr.mxu0 0.0
  %1794 = vmatpush1.msra.mxu0 0.0
  %1795 = vmatprep.subr.mxu0 0.0
  %1796 = vmatpush1.msra.mxu0 0.0
  %1797 = vmatprep.subr.mxu0 0.0
  %1798 = vmatpush1.msra.mxu0 0.0
  %1799 = vmatprep.mubr.f32.mxu0 0.0
  %v1800 = vand.u32 %v365, 4294901760
  %1801 = vmatmul.mubr.f32.gmra.mrb[0].mxu0 %v1800
  %v1802 = vpop.f32.mrb[0].mxu0
  %v1803 = vadd.f32 %v1706, %v1802
  %v1804 = vpop.f32.mrb[0].mxu0
  %v1805 = vadd.f32 %v1708, %v1804
  %1806 = vmatprep.mubr.f32.mxu0 0.0
  %v1807 = vand.u32 %v368, 4294901760
  %1808 = vmatmul.mubr.f32.gmra.mrb[0].mxu0 %v1807
  %v1809 = vpop.f32.mrb[0].mxu0
  %v1810 = vadd.f32 %v1713, %v1809
  %v1811 = vpop.f32.mrb[0].mxu0
  %v1812 = vadd.f32 %v1715, %v1811
  %1813 = vdwg.mxu0
  %v1814 = vxor.u32 %v1081, 2147483648
  %v1815 = vxor.u32 %v1083, 2147483648
  %v1816 = vxor.u32 %v1803, 2147483648
  %v1817 = vxor.u32 %v1805, 2147483648
  %v1818 = vxor.u32 %v1088, 2147483648
  %v1819 = vxor.u32 %v1090, 2147483648
  %v1820 = vxor.u32 %v1810, 2147483648
  %v1821 = vxor.u32 %v1812, 2147483648
  %v1822 = vmul.f32 %v1814, 1.442695
  %v1823 = vpow.pop %v1822
  %v1824 = vmul.f32 %v1815, 1.442695
  %v1825 = vpow.pop %v1824
  %v1826 = vmul.f32 %v1816, 1.442695
  %v1827 = vpow.pop %v1826
  %v1828 = vmul.f32 %v1817, 1.442695
  %v1829 = vpow.pop %v1828
  %v1830 = vmul.f32 %v1818, 1.442695
  %v1831 = vpow.pop %v1830
  %v1832 = vmul.f32 %v1819, 1.442695
  %v1833 = vpow.pop %v1832
  %v1834 = vmul.f32 %v1820, 1.442695
  %v1835 = vpow.pop %v1834
  %v1836 = vmul.f32 %v1821, 1.442695
  %v1837 = vpow.pop %v1836
  %v1838 = vadd.f32 %v1823, 1.0
  %v1839 = vadd.f32 %v1825, 1.0
  %v1840 = vadd.f32 %v1827, 1.0
  %v1841 = vadd.f32 %v1829, 1.0
  %v1842 = vadd.f32 %v1831, 1.0
  %v1843 = vadd.f32 %v1833, 1.0
  %v1844 = vadd.f32 %v1835, 1.0
  %v1845 = vadd.f32 %v1837, 1.0
  %v1846 = vrcp.pop %v1838
  %v1847 = vmul.f32 1.0, %v1846
  %v1848 = vrcp.pop %v1839
  %v1849 = vmul.f32 1.0, %v1848
  %v1850 = vrcp.pop %v1840
  %v1851 = vmul.f32 1.0, %v1850
  %v1852 = vrcp.pop %v1841
  %v1853 = vmul.f32 1.0, %v1852
  %v1854 = vrcp.pop %v1842
  %v1855 = vmul.f32 1.0, %v1854
  %v1856 = vrcp.pop %v1843
  %v1857 = vmul.f32 1.0, %v1856
  %v1858 = vrcp.pop %v1844
  %v1859 = vmul.f32 1.0, %v1858
  %v1860 = vrcp.pop %v1845
  %v1861 = vmul.f32 1.0, %v1860
  %v1862 = vmul.f32 %v1081, %v1847
  %v1863 = vmul.f32 %v1083, %v1849
  %v1864 = vmul.f32 %v1803, %v1851
  %v1865 = vmul.f32 %v1805, %v1853
  %v1866 = vmul.f32 %v1088, %v1855
  %v1867 = vmul.f32 %v1090, %v1857
  %v1868 = vmul.f32 %v1810, %v1859
  %v1869 = vmul.f32 %v1812, %v1861
  %v1870 = vld [vmem:[%s3] sm:$0xff]
  %v1871 = vld [vmem:[%s3 + $0x8] sm:$0xff]
  %1872 = vrot.lane.b32.xlu0 %v1862, 17
  %v1873 = vpop.permute.xlu0 %1872
  %1874 = vrot.lane.b32.xlu0 %v1866, 17
  %v1875 = vpop.permute.xlu0 %1874
  %1876 = vrot.lane.b32.xlu0 %v1863, 17
  %v1877 = vpop.permute.xlu0 %1876
  %1878 = vrot.lane.b32.xlu0 %v1867, 17
  %v1879 = vpop.permute.xlu0 %1878
  %1880 = vrot.lane.b32.xlu0 %v1864, 17
  %v1881 = vpop.permute.xlu0 %1880
  %1882 = vrot.lane.b32.xlu0 %v1868, 17
  %v1883 = vpop.permute.xlu0 %1882
  %1884 = vrot.lane.b32.xlu0 %v1865, 17
  %v1885 = vpop.permute.xlu0 %1884
  %1886 = vrot.lane.b32.xlu0 %v1869, 17
  %v1887 = vpop.permute.xlu0 %1886
  %v1888 = vsel %vm40, %v1881, %v1885
  %v1889 = vsel %vm40, %v1883, %v1887
  %v1890 = vsel %vm40, %v1877, %v1881
  %v1891 = vsel %vm40, %v1879, %v1883
  %v1892 = vsel %vm40, %v1873, %v1877
  %v1893 = vsel %vm40, %v1875, %v1879
  %v1894 = vsel %vm40, %v1885, %v1873
  %v1895 = vsel %vm40, %v1887, %v1875
  %v1896 = vmul.f32 %v1894, %v50
  %v1897 = vmul.f32 %v1892, %v54
  %v1898 = vmul.f32 %v1890, %v58
  %v1899 = vmul.f32 %v1888, %v62
  %v1900 = vmul.f32 %v1895, %v50
  %v1901 = vmul.f32 %v1893, %v54
  %v1902 = vmul.f32 %v1891, %v58
  %v1903 = vmul.f32 %v1889, %v62
  %1904 = vrot.lane.b32.xlu0 %v1862, 16
  %v1905 = vpop.permute.xlu0 %1904
  %1906 = vrot.lane.b32.xlu0 %v1866, 16
  %v1907 = vpop.permute.xlu0 %1906
  %1908 = vrot.lane.b32.xlu0 %v1863, 16
  %v1909 = vpop.permute.xlu0 %1908
  %1910 = vrot.lane.b32.xlu0 %v1867, 16
  %v1911 = vpop.permute.xlu0 %1910
  %1912 = vrot.lane.b32.xlu0 %v1864, 16
  %v1913 = vpop.permute.xlu0 %1912
  %1914 = vrot.lane.b32.xlu0 %v1868, 16
  %v1915 = vpop.permute.xlu0 %1914
  %1916 = vrot.lane.b32.xlu0 %v1865, 16
  %v1917 = vpop.permute.xlu0 %1916
  %1918 = vrot.lane.b32.xlu0 %v1869, 16
  %v1919 = vpop.permute.xlu0 %1918
  %v1920 = vsel %vm79, %v1913, %v1917
  %v1921 = vsel %vm79, %v1915, %v1919
  %v1922 = vsel %vm79, %v1909, %v1913
  %v1923 = vsel %vm79, %v1911, %v1915
  %v1924 = vsel %vm79, %v1905, %v1909
  %v1925 = vsel %vm79, %v1907, %v1911
  %v1926 = vsel %vm79, %v1917, %v1905
  %v1927 = vsel %vm79, %v1919, %v1907
  %v1928 = vmul.f32 %v1926, %v90
  %v1929 = vmul.f32 %v1924, %v94
  %v1930 = vmul.f32 %v1922, %v98
  %v1931 = vmul.f32 %v1920, %v102
  %v1932 = vmul.f32 %v1927, %v90
  %v1933 = vmul.f32 %v1925, %v94
  %v1934 = vmul.f32 %v1923, %v98
  %v1935 = vmul.f32 %v1921, %v102
  %1936 = vrot.lane.b32.xlu0 %v1862, 15
  %v1937 = vpop.permute.xlu0 %1936
  %1938 = vrot.lane.b32.xlu0 %v1866, 15
  %v1939 = vpop.permute.xlu0 %1938
  %1940 = vrot.lane.b32.xlu0 %v1863, 15
  %v1941 = vpop.permute.xlu0 %1940
  %1942 = vrot.lane.b32.xlu0 %v1867, 15
  %v1943 = vpop.permute.xlu0 %1942
  %1944 = vrot.lane.b32.xlu0 %v1864, 15
  %v1945 = vpop.permute.xlu0 %1944
  %1946 = vrot.lane.b32.xlu0 %v1868, 15
  %v1947 = vpop.permute.xlu0 %1946
  %1948 = vrot.lane.b32.xlu0 %v1865, 15
  %v1949 = vpop.permute.xlu0 %1948
  %1950 = vrot.lane.b32.xlu0 %v1869, 15
  %v1951 = vpop.permute.xlu0 %1950
  %v1952 = vsel %vm119, %v1945, %v1949
  %v1953 = vsel %vm119, %v1947, %v1951
  %v1954 = vsel %vm119, %v1941, %v1945
  %v1955 = vsel %vm119, %v1943, %v1947
  %v1956 = vsel %vm119, %v1937, %v1941
  %v1957 = vsel %vm119, %v1939, %v1943
  %v1958 = vsel %vm119, %v1949, %v1937
  %v1959 = vsel %vm119, %v1951, %v1939
  %v1960 = vmul.f32 %v1958, %v130
  %v1961 = vmul.f32 %v1956, %v134
  %v1962 = vmul.f32 %v1954, %v138
  %v1963 = vmul.f32 %v1952, %v142
  %v1964 = vmul.f32 %v1959, %v130
  %v1965 = vmul.f32 %v1957, %v134
  %v1966 = vmul.f32 %v1955, %v138
  %v1967 = vmul.f32 %v1953, %v142
  %1968 = vrot.lane.b32.xlu0 %v1862, 1
  %v1969 = vpop.permute.xlu0 %1968
  %1970 = vrot.lane.b32.xlu0 %v1866, 1
  %v1971 = vpop.permute.xlu0 %1970
  %1972 = vrot.lane.b32.xlu0 %v1863, 1
  %v1973 = vpop.permute.xlu0 %1972
  %1974 = vrot.lane.b32.xlu0 %v1867, 1
  %v1975 = vpop.permute.xlu0 %1974
  %1976 = vrot.lane.b32.xlu0 %v1864, 1
  %v1977 = vpop.permute.xlu0 %1976
  %1978 = vrot.lane.b32.xlu0 %v1868, 1
  %v1979 = vpop.permute.xlu0 %1978
  %1980 = vrot.lane.b32.xlu0 %v1865, 1
  %v1981 = vpop.permute.xlu0 %1980
  %1982 = vrot.lane.b32.xlu0 %v1869, 1
  %v1983 = vpop.permute.xlu0 %1982
  %v1984 = vsel %vm159, %v1977, %v1981
  %v1985 = vsel %vm159, %v1979, %v1983
  %v1986 = vsel %vm159, %v1973, %v1977
  %v1987 = vsel %vm159, %v1975, %v1979
  %v1988 = vsel %vm159, %v1969, %v1973
  %v1989 = vsel %vm159, %v1971, %v1975
  %v1990 = vsel %vm159, %v1981, %v1969
  %v1991 = vsel %vm159, %v1983, %v1971
  %v1992 = vmul.f32 %v1990, %v170
  %v1993 = vmul.f32 %v1988, %v174
  %v1994 = vmul.f32 %v1986, %v178
  %v1995 = vmul.f32 %v1984, %v182
  %v1996 = vmul.f32 %v1991, %v170
  %v1997 = vmul.f32 %v1989, %v174
  %v1998 = vmul.f32 %v1987, %v178
  %v1999 = vmul.f32 %v1985, %v182
  %2000 = vrot.lane.b32.xlu0 %v1862, 127
  %v2001 = vpop.permute.xlu0 %2000
  %2002 = vrot.lane.b32.xlu0 %v1866, 127
  %v2003 = vpop.permute.xlu0 %2002
  %2004 = vrot.lane.b32.xlu0 %v1863, 127
  %v2005 = vpop.permute.xlu0 %2004
  %2006 = vrot.lane.b32.xlu0 %v1867, 127
  %v2007 = vpop.permute.xlu0 %2006
  %2008 = vrot.lane.b32.xlu0 %v1864, 127
  %v2009 = vpop.permute.xlu0 %2008
  %2010 = vrot.lane.b32.xlu0 %v1868, 127
  %v2011 = vpop.permute.xlu0 %2010
  %2012 = vrot.lane.b32.xlu0 %v1865, 127
  %v2013 = vpop.permute.xlu0 %2012
  %2014 = vrot.lane.b32.xlu0 %v1869, 127
  %v2015 = vpop.permute.xlu0 %2014
  %v2016 = vsel %vm199, %v2009, %v2013
  %v2017 = vsel %vm199, %v2011, %v2015
  %v2018 = vsel %vm199, %v2005, %v2009
  %v2019 = vsel %vm199, %v2007, %v2011
  %v2020 = vsel %vm199, %v2001, %v2005
  %v2021 = vsel %vm199, %v2003, %v2007
  %v2022 = vsel %vm199, %v2013, %v2001
  %v2023 = vsel %vm199, %v2015, %v2003
  %v2024 = vmul.f32 %v2020, %v210
  %v2025 = vmul.f32 %v2018, %v214
  %v2026 = vmul.f32 %v2016, %v218
  %v2027 = vmul.f32 %v2022, %v222
  %v2028 = vmul.f32 %v2021, %v210
  %v2029 = vmul.f32 %v2019, %v214
  %v2030 = vmul.f32 %v2017, %v218
  %v2031 = vmul.f32 %v2023, %v222
  %2032 = vrot.lane.b32.xlu0 %v1862, 113
  %v2033 = vpop.permute.xlu0 %2032
  %2034 = vrot.lane.b32.xlu0 %v1866, 113
  %v2035 = vpop.permute.xlu0 %2034
  %2036 = vrot.lane.b32.xlu0 %v1863, 113
  %v2037 = vpop.permute.xlu0 %2036
  %2038 = vrot.lane.b32.xlu0 %v1867, 113
  %v2039 = vpop.permute.xlu0 %2038
  %2040 = vrot.lane.b32.xlu0 %v1864, 113
  %v2041 = vpop.permute.xlu0 %2040
  %2042 = vrot.lane.b32.xlu0 %v1868, 113
  %v2043 = vpop.permute.xlu0 %2042
  %2044 = vrot.lane.b32.xlu0 %v1865, 113
  %v2045 = vpop.permute.xlu0 %2044
  %2046 = vrot.lane.b32.xlu0 %v1869, 113
  %v2047 = vpop.permute.xlu0 %2046
  %v2048 = vsel %vm239, %v2041, %v2045
  %v2049 = vsel %vm239, %v2043, %v2047
  %v2050 = vsel %vm239, %v2037, %v2041
  %v2051 = vsel %vm239, %v2039, %v2043
  %v2052 = vsel %vm239, %v2033, %v2037
  %v2053 = vsel %vm239, %v2035, %v2039
  %v2054 = vsel %vm239, %v2045, %v2033
  %v2055 = vsel %vm239, %v2047, %v2035
  %v2056 = vmul.f32 %v2052, %v250
  %v2057 = vmul.f32 %v2050, %v254
  %v2058 = vmul.f32 %v2048, %v258
  %v2059 = vmul.f32 %v2054, %v262
  %v2060 = vmul.f32 %v2053, %v250
  %v2061 = vmul.f32 %v2051, %v254
  %v2062 = vmul.f32 %v2049, %v258
  %v2063 = vmul.f32 %v2055, %v262
  %2064 = vrot.lane.b32.xlu0 %v1862, 112
  %v2065 = vpop.permute.xlu0 %2064
  %2066 = vrot.lane.b32.xlu0 %v1866, 112
  %v2067 = vpop.permute.xlu0 %2066
  %2068 = vrot.lane.b32.xlu0 %v1863, 112
  %v2069 = vpop.permute.xlu0 %2068
  %2070 = vrot.lane.b32.xlu0 %v1867, 112
  %v2071 = vpop.permute.xlu0 %2070
  %2072 = vrot.lane.b32.xlu0 %v1864, 112
  %v2073 = vpop.permute.xlu0 %2072
  %2074 = vrot.lane.b32.xlu0 %v1868, 112
  %v2075 = vpop.permute.xlu0 %2074
  %2076 = vrot.lane.b32.xlu0 %v1865, 112
  %v2077 = vpop.permute.xlu0 %2076
  %2078 = vrot.lane.b32.xlu0 %v1869, 112
  %v2079 = vpop.permute.xlu0 %2078
  %v2080 = vsel %vm279, %v2073, %v2077
  %v2081 = vsel %vm279, %v2075, %v2079
  %v2082 = vsel %vm279, %v2069, %v2073
  %v2083 = vsel %vm279, %v2071, %v2075
  %v2084 = vsel %vm279, %v2065, %v2069
  %v2085 = vsel %vm279, %v2067, %v2071
  %v2086 = vsel %vm279, %v2077, %v2065
  %v2087 = vsel %vm279, %v2079, %v2067
  %v2088 = vmul.f32 %v2084, %v290
  %v2089 = vmul.f32 %v2082, %v294
  %v2090 = vmul.f32 %v2080, %v298
  %v2091 = vmul.f32 %v2086, %v302
  %v2092 = vmul.f32 %v2085, %v290
  %v2093 = vmul.f32 %v2083, %v294
  %v2094 = vmul.f32 %v2081, %v298
  %v2095 = vmul.f32 %v2087, %v302
  %2096 = vrot.lane.b32.xlu0 %v1862, 111
  %v2097 = vpop.permute.xlu0 %2096
  %2098 = vrot.lane.b32.xlu0 %v1866, 111
  %v2099 = vpop.permute.xlu0 %2098
  %2100 = vrot.lane.b32.xlu0 %v1863, 111
  %v2101 = vpop.permute.xlu0 %2100
  %2102 = vrot.lane.b32.xlu0 %v1867, 111
  %v2103 = vpop.permute.xlu0 %2102
  %2104 = vrot.lane.b32.xlu0 %v1864, 111
  %v2105 = vpop.permute.xlu0 %2104
  %2106 = vrot.lane.b32.xlu0 %v1868, 111
  %v2107 = vpop.permute.xlu0 %2106
  %2108 = vrot.lane.b32.xlu0 %v1865, 111
  %v2109 = vpop.permute.xlu0 %2108
  %2110 = vrot.lane.b32.xlu0 %v1869, 111
  %v2111 = vpop.permute.xlu0 %2110
  %v2112 = vsel %vm319, %v2105, %v2109
  %v2113 = vsel %vm319, %v2107, %v2111
  %v2114 = vsel %vm319, %v2101, %v2105
  %v2115 = vsel %vm319, %v2103, %v2107
  %v2116 = vsel %vm319, %v2097, %v2101
  %v2117 = vsel %vm319, %v2099, %v2103
  %v2118 = vsel %vm319, %v2109, %v2097
  %v2119 = vsel %vm319, %v2111, %v2099
  %v2120 = vmul.f32 %v2116, %v330
  %v2121 = vmul.f32 %v2114, %v334
  %v2122 = vmul.f32 %v2112, %v338
  %v2123 = vmul.f32 %v2118, %v342
  %v2124 = vmul.f32 %v2117, %v330
  %v2125 = vmul.f32 %v2115, %v334
  %v2126 = vmul.f32 %v2113, %v338
  %v2127 = vmul.f32 %v2119, %v342
  %v2128 = vld [vmem:[%s4] sm:$0xff]
  %2130 = vset.pattern.permute.xlu0 0
  %2131 = vperm.xlu0 %2130, %v2128
  %v2132 = vpop.permute.xlu0 %2131
  %vm2134 = vcmask 130048
  %v2136 = vsel %vm2134, %v1871, 0
  %v2138 = vand.u32 %v1897, 4294901760
  %2139 = vmatprep.subr.mxu0 %v2138
  %v2140 = vand.u32 %v1896, 4294901760
  %2141 = vmatpush1.msra.mxu0 %v2140
  %v2142 = vand.u32 %v1901, 4294901760
  %2143 = vmatprep.subr.mxu0 %v2142
  %v2144 = vand.u32 %v1900, 4294901760
  %2145 = vmatpush1.msra.mxu0 %v2144
  %v2146 = vand.u32 %v1929, 4294901760
  %2147 = vmatprep.subr.mxu0 %v2146
  %v2148 = vand.u32 %v1928, 4294901760
  %2149 = vmatpush1.msra.mxu0 %v2148
  %v2150 = vand.u32 %v1933, 4294901760
  %2151 = vmatprep.subr.mxu0 %v2150
  %v2152 = vand.u32 %v1932, 4294901760
  %2153 = vmatpush1.msra.mxu0 %v2152
  %v2154 = vand.u32 %v1961, 4294901760
  %2155 = vmatprep.subr.mxu0 %v2154
  %v2156 = vand.u32 %v1960, 4294901760
  %2157 = vmatpush1.msra.mxu0 %v2156
  %v2158 = vand.u32 %v1965, 4294901760
  %2159 = vmatprep.subr.mxu0 %v2158
  %v2160 = vand.u32 %v1964, 4294901760
  %2161 = vmatpush1.msra.mxu0 %v2160
  %v2162 = vand.u32 %v1993, 4294901760
  %2163 = vmatprep.subr.mxu0 %v2162
  %v2164 = vand.u32 %v1992, 4294901760
  %2165 = vmatpush1.msra.mxu0 %v2164
  %v2166 = vand.u32 %v1997, 4294901760
  %2167 = vmatprep.subr.mxu0 %v2166
  %v2168 = vand.u32 %v1996, 4294901760
  %2169 = vmatpush1.msra.mxu0 %v2168
  %v2170 = vand.u32 %v1863, 4294901760
  %2171 = vmatprep.subr.mxu0 %v2170
  %v2172 = vand.u32 %v1862, 4294901760
  %2173 = vmatpush1.msra.mxu0 %v2172
  %v2174 = vand.u32 %v1867, 4294901760
  %2175 = vmatprep.subr.mxu0 %v2174
  %v2176 = vand.u32 %v1866, 4294901760
  %2177 = vmatpush1.msra.mxu0 %v2176
  %v2178 = vand.u32 %v2025, 4294901760
  %2179 = vmatprep.subr.mxu0 %v2178
  %v2180 = vand.u32 %v2024, 4294901760
  %2181 = vmatpush1.msra.mxu0 %v2180
  %v2182 = vand.u32 %v2029, 4294901760
  %2183 = vmatprep.subr.mxu0 %v2182
  %v2184 = vand.u32 %v2028, 4294901760
  %2185 = vmatpush1.msra.mxu0 %v2184
  %v2186 = vand.u32 %v2057, 4294901760
  %2187 = vmatprep.subr.mxu0 %v2186
  %v2188 = vand.u32 %v2056, 4294901760
  %2189 = vmatpush1.msra.mxu0 %v2188
  %v2190 = vand.u32 %v2061, 4294901760
  %2191 = vmatprep.subr.mxu0 %v2190
  %v2192 = vand.u32 %v2060, 4294901760
  %2193 = vmatpush1.msra.mxu0 %v2192
  %v2194 = vand.u32 %v2089, 4294901760
  %2195 = vmatprep.subr.mxu0 %v2194
  %v2196 = vand.u32 %v2088, 4294901760
  %2197 = vmatpush1.msra.mxu0 %v2196
  %v2198 = vand.u32 %v2093, 4294901760
  %2199 = vmatprep.subr.mxu0 %v2198
  %v2200 = vand.u32 %v2092, 4294901760
  %2201 = vmatpush1.msra.mxu0 %v2200
  %v2202 = vand.u32 %v2121, 4294901760
  %2203 = vmatprep.subr.mxu0 %v2202
  %v2204 = vand.u32 %v2120, 4294901760
  %2205 = vmatpush1.msra.mxu0 %v2204
  %v2206 = vand.u32 %v2125, 4294901760
  %2207 = vmatprep.subr.mxu0 %v2206
  %v2208 = vand.u32 %v2124, 4294901760
  %2209 = vmatpush1.msra.mxu0 %v2208
  %2210 = vmatprep.subr.mxu0 0.0
  %2211 = vmatpush1.msra.mxu0 0.0
  %2212 = vmatprep.subr.mxu0 0.0
  %2213 = vmatpush1.msra.mxu0 0.0
  %2214 = vmatprep.subr.mxu0 0.0
  %2215 = vmatpush1.msra.mxu0 0.0
  %2216 = vmatprep.subr.mxu0 0.0
  %2217 = vmatpush1.msra.mxu0 0.0
  %2218 = vmatprep.subr.mxu0 0.0
  %2219 = vmatpush1.msra.mxu0 0.0
  %2220 = vmatprep.subr.mxu0 0.0
  %2221 = vmatpush1.msra.mxu0 0.0
  %2222 = vmatprep.subr.mxu0 0.0
  %2223 = vmatpush1.msra.mxu0 0.0
  %2224 = vmatprep.subr.mxu0 0.0
  %2225 = vmatpush1.msra.mxu0 0.0
  %2226 = vmatprep.subr.mxu0 0.0
  %2227 = vmatpush1.msra.mxu0 0.0
  %2228 = vmatprep.subr.mxu0 0.0
  %2229 = vmatpush1.msra.mxu0 0.0
  %2230 = vmatprep.subr.mxu0 0.0
  %2231 = vmatpush1.msra.mxu0 0.0
  %2232 = vmatprep.subr.mxu0 0.0
  %2233 = vmatpush1.msra.mxu0 0.0
  %2234 = vmatprep.subr.mxu0 0.0
  %2235 = vmatpush1.msra.mxu0 0.0
  %2236 = vmatprep.subr.mxu0 0.0
  %2237 = vmatpush1.msra.mxu0 0.0
  %v2238 = vand.u32 %v2136, 4294901760
  %v2239 = vsub.f32 %v2136, %v2238
  %v2240 = vand.u32 %v2239, 4294901760
  %v2241 = vsub.f32 %v2239, %v2240
  %v2242 = vand.u32 %v2241, 4294901760
  %2243 = vmatprep.mubr.f32.mxu0 %v2242
  %v2244 = vand.u32 %v1870, 4294901760
  %v2245 = vsub.f32 %v1870, %v2244
  %v2246 = vand.u32 %v2245, 4294901760
  %v2247 = vsub.f32 %v2245, %v2246
  %v2248 = vand.u32 %v2247, 4294901760
  %2249 = vmatmul.mubr.f32.gmra.mrb[0].mxu0 %v2248
  %v2250 = vpop.f32.mrb[0].mxu0
  %v2251 = vadd.f32 %v2132, %v2250
  %v2252 = vpop.f32.mrb[0].mxu0
  %v2253 = vadd.f32 %v2132, %v2252
  %2254 = vdwg.mxu0
  %v2255 = vand.u32 %v1897, 4294901760
  %v2256 = vsub.f32 %v1897, %v2255
  %v2257 = vand.u32 %v2256, 4294901760
  %v2258 = vsub.f32 %v2256, %v2257
  %v2259 = vand.u32 %v2258, 4294901760
  %2260 = vmatprep.subr.mxu0 %v2259
  %v2261 = vand.u32 %v1896, 4294901760
  %v2262 = vsub.f32 %v1896, %v2261
  %v2263 = vand.u32 %v2262, 4294901760
  %v2264 = vsub.f32 %v2262, %v2263
  %v2265 = vand.u32 %v2264, 4294901760
  %2266 = vmatpush1.msra.mxu0 %v2265
  %v2267 = vand.u32 %v1901, 4294901760
  %v2268 = vsub.f32 %v1901, %v2267
  %v2269 = vand.u32 %v2268, 4294901760
  %v2270 = vsub.f32 %v2268, %v2269
  %v2271 = vand.u32 %v2270, 4294901760
  %2272 = vmatprep.subr.mxu0 %v2271
  %v2273 = vand.u32 %v1900, 4294901760
  %v2274 = vsub.f32 %v1900, %v2273
  %v2275 = vand.u32 %v2274, 4294901760
  %v2276 = vsub.f32 %v2274, %v2275
  %v2277 = vand.u32 %v2276, 4294901760
  %2278 = vmatpush1.msra.mxu0 %v2277
  %v2279 = vand.u32 %v1929, 4294901760
  %v2280 = vsub.f32 %v1929, %v2279
  %v2281 = vand.u32 %v2280, 4294901760
  %v2282 = vsub.f32 %v2280, %v2281
  %v2283 = vand.u32 %v2282, 4294901760
  %2284 = vmatprep.subr.mxu0 %v2283
  %v2285 = vand.u32 %v1928, 4294901760
  %v2286 = vsub.f32 %v1928, %v2285
  %v2287 = vand.u32 %v2286, 4294901760
  %v2288 = vsub.f32 %v2286, %v2287
  %v2289 = vand.u32 %v2288, 4294901760
  %2290 = vmatpush1.msra.mxu0 %v2289
  %v2291 = vand.u32 %v1933, 4294901760
  %v2292 = vsub.f32 %v1933, %v2291
  %v2293 = vand.u32 %v2292, 4294901760
  %v2294 = vsub.f32 %v2292, %v2293
  %v2295 = vand.u32 %v2294, 4294901760
  %2296 = vmatprep.subr.mxu0 %v2295
  %v2297 = vand.u32 %v1932, 4294901760
  %v2298 = vsub.f32 %v1932, %v2297
  %v2299 = vand.u32 %v2298, 4294901760
  %v2300 = vsub.f32 %v2298, %v2299
  %v2301 = vand.u32 %v2300, 4294901760
  %2302 = vmatpush1.msra.mxu0 %v2301
  %v2303 = vand.u32 %v1961, 4294901760
  %v2304 = vsub.f32 %v1961, %v2303
  %v2305 = vand.u32 %v2304, 4294901760
  %v2306 = vsub.f32 %v2304, %v2305
  %v2307 = vand.u32 %v2306, 4294901760
  %2308 = vmatprep.subr.mxu0 %v2307
  %v2309 = vand.u32 %v1960, 4294901760
  %v2310 = vsub.f32 %v1960, %v2309
  %v2311 = vand.u32 %v2310, 4294901760
  %v2312 = vsub.f32 %v2310, %v2311
  %v2313 = vand.u32 %v2312, 4294901760
  %2314 = vmatpush1.msra.mxu0 %v2313
  %v2315 = vand.u32 %v1965, 4294901760
  %v2316 = vsub.f32 %v1965, %v2315
  %v2317 = vand.u32 %v2316, 4294901760
  %v2318 = vsub.f32 %v2316, %v2317
  %v2319 = vand.u32 %v2318, 4294901760
  %2320 = vmatprep.subr.mxu0 %v2319
  %v2321 = vand.u32 %v1964, 4294901760
  %v2322 = vsub.f32 %v1964, %v2321
  %v2323 = vand.u32 %v2322, 4294901760
  %v2324 = vsub.f32 %v2322, %v2323
  %v2325 = vand.u32 %v2324, 4294901760
  %2326 = vmatpush1.msra.mxu0 %v2325
  %v2327 = vand.u32 %v1993, 4294901760
  %v2328 = vsub.f32 %v1993, %v2327
  %v2329 = vand.u32 %v2328, 4294901760
  %v2330 = vsub.f32 %v2328, %v2329
  %v2331 = vand.u32 %v2330, 4294901760
  %2332 = vmatprep.subr.mxu0 %v2331
  %v2333 = vand.u32 %v1992, 4294901760
  %v2334 = vsub.f32 %v1992, %v2333
  %v2335 = vand.u32 %v2334, 4294901760
  %v2336 = vsub.f32 %v2334, %v2335
  %v2337 = vand.u32 %v2336, 4294901760
  %2338 = vmatpush1.msra.mxu0 %v2337
  %v2339 = vand.u32 %v1997, 4294901760
  %v2340 = vsub.f32 %v1997, %v2339
  %v2341 = vand.u32 %v2340, 4294901760
  %v2342 = vsub.f32 %v2340, %v2341
  %v2343 = vand.u32 %v2342, 4294901760
  %2344 = vmatprep.subr.mxu0 %v2343
  %v2345 = vand.u32 %v1996, 4294901760
  %v2346 = vsub.f32 %v1996, %v2345
  %v2347 = vand.u32 %v2346, 4294901760
  %v2348 = vsub.f32 %v2346, %v2347
  %v2349 = vand.u32 %v2348, 4294901760
  %2350 = vmatpush1.msra.mxu0 %v2349
  %v2351 = vand.u32 %v1863, 4294901760
  %v2352 = vsub.f32 %v1863, %v2351
  %v2353 = vand.u32 %v2352, 4294901760
  %v2354 = vsub.f32 %v2352, %v2353
  %v2355 = vand.u32 %v2354, 4294901760
  %2356 = vmatprep.subr.mxu0 %v2355
  %v2357 = vand.u32 %v1862, 4294901760
  %v2358 = vsub.f32 %v1862, %v2357
  %v2359 = vand.u32 %v2358, 4294901760
  %v2360 = vsub.f32 %v2358, %v2359
  %v2361 = vand.u32 %v2360, 4294901760
  %2362 = vmatpush1.msra.mxu0 %v2361
  %v2363 = vand.u32 %v1867, 4294901760
  %v2364 = vsub.f32 %v1867, %v2363
  %v2365 = vand.u32 %v2364, 4294901760
  %v2366 = vsub.f32 %v2364, %v2365
  %v2367 = vand.u32 %v2366, 4294901760
  %2368 = vmatprep.subr.mxu0 %v2367
  %v2369 = vand.u32 %v1866, 4294901760
  %v2370 = vsub.f32 %v1866, %v2369
  %v2371 = vand.u32 %v2370, 4294901760
  %v2372 = vsub.f32 %v2370, %v2371
  %v2373 = vand.u32 %v2372, 4294901760
  %2374 = vmatpush1.msra.mxu0 %v2373
  %v2375 = vand.u32 %v2025, 4294901760
  %v2376 = vsub.f32 %v2025, %v2375
  %v2377 = vand.u32 %v2376, 4294901760
  %v2378 = vsub.f32 %v2376, %v2377
  %v2379 = vand.u32 %v2378, 4294901760
  %2380 = vmatprep.subr.mxu0 %v2379
  %v2381 = vand.u32 %v2024, 4294901760
  %v2382 = vsub.f32 %v2024, %v2381
  %v2383 = vand.u32 %v2382, 4294901760
  %v2384 = vsub.f32 %v2382, %v2383
  %v2385 = vand.u32 %v2384, 4294901760
  %2386 = vmatpush1.msra.mxu0 %v2385
  %v2387 = vand.u32 %v2029, 4294901760
  %v2388 = vsub.f32 %v2029, %v2387
  %v2389 = vand.u32 %v2388, 4294901760
  %v2390 = vsub.f32 %v2388, %v2389
  %v2391 = vand.u32 %v2390, 4294901760
  %2392 = vmatprep.subr.mxu0 %v2391
  %v2393 = vand.u32 %v2028, 4294901760
  %v2394 = vsub.f32 %v2028, %v2393
  %v2395 = vand.u32 %v2394, 4294901760
  %v2396 = vsub.f32 %v2394, %v2395
  %v2397 = vand.u32 %v2396, 4294901760
  %2398 = vmatpush1.msra.mxu0 %v2397
  %v2399 = vand.u32 %v2057, 4294901760
  %v2400 = vsub.f32 %v2057, %v2399
  %v2401 = vand.u32 %v2400, 4294901760
  %v2402 = vsub.f32 %v2400, %v2401
  %v2403 = vand.u32 %v2402, 4294901760
  %2404 = vmatprep.subr.mxu0 %v2403
  %v2405 = vand.u32 %v2056, 4294901760
  %v2406 = vsub.f32 %v2056, %v2405
  %v2407 = vand.u32 %v2406, 4294901760
  %v2408 = vsub.f32 %v2406, %v2407
  %v2409 = vand.u32 %v2408, 4294901760
  %2410 = vmatpush1.msra.mxu0 %v2409
  %v2411 = vand.u32 %v2061, 4294901760
  %v2412 = vsub.f32 %v2061, %v2411
  %v2413 = vand.u32 %v2412, 4294901760
  %v2414 = vsub.f32 %v2412, %v2413
  %v2415 = vand.u32 %v2414, 4294901760
  %2416 = vmatprep.subr.mxu0 %v2415
  %v2417 = vand.u32 %v2060, 4294901760
  %v2418 = vsub.f32 %v2060, %v2417
  %v2419 = vand.u32 %v2418, 4294901760
  %v2420 = vsub.f32 %v2418, %v2419
  %v2421 = vand.u32 %v2420, 4294901760
  %2422 = vmatpush1.msra.mxu0 %v2421
  %v2423 = vand.u32 %v2089, 4294901760
  %v2424 = vsub.f32 %v2089, %v2423
  %v2425 = vand.u32 %v2424, 4294901760
  %v2426 = vsub.f32 %v2424, %v2425
  %v2427 = vand.u32 %v2426, 4294901760
  %2428 = vmatprep.subr.mxu0 %v2427
  %v2429 = vand.u32 %v2088, 4294901760
  %v2430 = vsub.f32 %v2088, %v2429
  %v2431 = vand.u32 %v2430, 4294901760
  %v2432 = vsub.f32 %v2430, %v2431
  %v2433 = vand.u32 %v2432, 4294901760
  %2434 = vmatpush1.msra.mxu0 %v2433
  %v2435 = vand.u32 %v2093, 4294901760
  %v2436 = vsub.f32 %v2093, %v2435
  %v2437 = vand.u32 %v2436, 4294901760
  %v2438 = vsub.f32 %v2436, %v2437
  %v2439 = vand.u32 %v2438, 4294901760
  %2440 = vmatprep.subr.mxu0 %v2439
  %v2441 = vand.u32 %v2092, 4294901760
  %v2442 = vsub.f32 %v2092, %v2441
  %v2443 = vand.u32 %v2442, 4294901760
  %v2444 = vsub.f32 %v2442, %v2443
  %v2445 = vand.u32 %v2444, 4294901760
  %2446 = vmatpush1.msra.mxu0 %v2445
  %v2447 = vand.u32 %v2121, 4294901760
  %v2448 = vsub.f32 %v2121, %v2447
  %v2449 = vand.u32 %v2448, 4294901760
  %v2450 = vsub.f32 %v2448, %v2449
  %v2451 = vand.u32 %v2450, 4294901760
  %2452 = vmatprep.subr.mxu0 %v2451
  %v2453 = vand.u32 %v2120, 4294901760
  %v2454 = vsub.f32 %v2120, %v2453
  %v2455 = vand.u32 %v2454, 4294901760
  %v2456 = vsub.f32 %v2454, %v2455
  %v2457 = vand.u32 %v2456, 4294901760
  %2458 = vmatpush1.msra.mxu0 %v2457
  %v2459 = vand.u32 %v2125, 4294901760
  %v2460 = vsub.f32 %v2125, %v2459
  %v2461 = vand.u32 %v2460, 4294901760
  %v2462 = vsub.f32 %v2460, %v2461
  %v2463 = vand.u32 %v2462, 4294901760
  %2464 = vmatprep.subr.mxu0 %v2463
  %v2465 = vand.u32 %v2124, 4294901760
  %v2466 = vsub.f32 %v2124, %v2465
  %v2467 = vand.u32 %v2466, 4294901760
  %v2468 = vsub.f32 %v2466, %v2467
  %v2469 = vand.u32 %v2468, 4294901760
  %2470 = vmatpush1.msra.mxu0 %v2469
  %2471 = vmatprep.subr.mxu0 0.0
  %2472 = vmatpush1.msra.mxu0 0.0
  %2473 = vmatprep.subr.mxu0 0.0
  %2474 = vmatpush1.msra.mxu0 0.0
  %2475 = vmatprep.subr.mxu0 0.0
  %2476 = vmatpush1.msra.mxu0 0.0
  %2477 = vmatprep.subr.mxu0 0.0
  %2478 = vmatpush1.msra.mxu0 0.0
  %2479 = vmatprep.subr.mxu0 0.0
  %2480 = vmatpush1.msra.mxu0 0.0
  %2481 = vmatprep.subr.mxu0 0.0
  %2482 = vmatpush1.msra.mxu0 0.0
  %2483 = vmatprep.subr.mxu0 0.0
  %2484 = vmatpush1.msra.mxu0 0.0
  %2485 = vmatprep.subr.mxu0 0.0
  %2486 = vmatpush1.msra.mxu0 0.0
  %2487 = vmatprep.subr.mxu0 0.0
  %2488 = vmatpush1.msra.mxu0 0.0
  %2489 = vmatprep.subr.mxu0 0.0
  %2490 = vmatpush1.msra.mxu0 0.0
  %2491 = vmatprep.subr.mxu0 0.0
  %2492 = vmatpush1.msra.mxu0 0.0
  %2493 = vmatprep.subr.mxu0 0.0
  %2494 = vmatpush1.msra.mxu0 0.0
  %2495 = vmatprep.subr.mxu0 0.0
  %2496 = vmatpush1.msra.mxu0 0.0
  %2497 = vmatprep.subr.mxu0 0.0
  %2498 = vmatpush1.msra.mxu0 0.0
  %v2499 = vand.u32 %v2136, 4294901760
  %2500 = vmatprep.mubr.f32.mxu0 %v2499
  %v2501 = vand.u32 %v1870, 4294901760
  %2502 = vmatmul.mubr.f32.gmra.mrb[0].mxu0 %v2501
  %v2503 = vpop.f32.mrb[0].mxu0
  %v2504 = vadd.f32 %v2251, %v2503
  %v2505 = vpop.f32.mrb[0].mxu0
  %v2506 = vadd.f32 %v2253, %v2505
  %2507 = vdwg.mxu0
  %v2508 = vand.u32 %v1897, 4294901760
  %v2509 = vsub.f32 %v1897, %v2508
  %2510 = vmatprep.subr.mxu0 %v2509
  %v2511 = vand.u32 %v1896, 4294901760
  %v2512 = vsub.f32 %v1896, %v2511
  %2513 = vmatpush1.msra.mxu0 %v2512
  %v2514 = vand.u32 %v1901, 4294901760
  %v2515 = vsub.f32 %v1901, %v2514
  %2516 = vmatprep.subr.mxu0 %v2515
  %v2517 = vand.u32 %v1900, 4294901760
  %v2518 = vsub.f32 %v1900, %v2517
  %2519 = vmatpush1.msra.mxu0 %v2518
  %v2520 = vand.u32 %v1929, 4294901760
  %v2521 = vsub.f32 %v1929, %v2520
  %2522 = vmatprep.subr.mxu0 %v2521
  %v2523 = vand.u32 %v1928, 4294901760
  %v2524 = vsub.f32 %v1928, %v2523
  %2525 = vmatpush1.msra.mxu0 %v2524
  %v2526 = vand.u32 %v1933, 4294901760
  %v2527 = vsub.f32 %v1933, %v2526
  %2528 = vmatprep.subr.mxu0 %v2527
  %v2529 = vand.u32 %v1932, 4294901760
  %v2530 = vsub.f32 %v1932, %v2529
  %2531 = vmatpush1.msra.mxu0 %v2530
  %v2532 = vand.u32 %v1961, 4294901760
  %v2533 = vsub.f32 %v1961, %v2532
  %2534 = vmatprep.subr.mxu0 %v2533
  %v2535 = vand.u32 %v1960, 4294901760
  %v2536 = vsub.f32 %v1960, %v2535
  %2537 = vmatpush1.msra.mxu0 %v2536
  %v2538 = vand.u32 %v1965, 4294901760
  %v2539 = vsub.f32 %v1965, %v2538
  %2540 = vmatprep.subr.mxu0 %v2539
  %v2541 = vand.u32 %v1964, 4294901760
  %v2542 = vsub.f32 %v1964, %v2541
  %2543 = vmatpush1.msra.mxu0 %v2542
  %v2544 = vand.u32 %v1993, 4294901760
  %v2545 = vsub.f32 %v1993, %v2544
  %2546 = vmatprep.subr.mxu0 %v2545
  %v2547 = vand.u32 %v1992, 4294901760
  %v2548 = vsub.f32 %v1992, %v2547
  %2549 = vmatpush1.msra.mxu0 %v2548
  %v2550 = vand.u32 %v1997, 4294901760
  %v2551 = vsub.f32 %v1997, %v2550
  %2552 = vmatprep.subr.mxu0 %v2551
  %v2553 = vand.u32 %v1996, 4294901760
  %v2554 = vsub.f32 %v1996, %v2553
  %2555 = vmatpush1.msra.mxu0 %v2554
  %v2556 = vand.u32 %v1863, 4294901760
  %v2557 = vsub.f32 %v1863, %v2556
  %2558 = vmatprep.subr.mxu0 %v2557
  %v2559 = vand.u32 %v1862, 4294901760
  %v2560 = vsub.f32 %v1862, %v2559
  %2561 = vmatpush1.msra.mxu0 %v2560
  %v2562 = vand.u32 %v1867, 4294901760
  %v2563 = vsub.f32 %v1867, %v2562
  %2564 = vmatprep.subr.mxu0 %v2563
  %v2565 = vand.u32 %v1866, 4294901760
  %v2566 = vsub.f32 %v1866, %v2565
  %2567 = vmatpush1.msra.mxu0 %v2566
  %v2568 = vand.u32 %v2025, 4294901760
  %v2569 = vsub.f32 %v2025, %v2568
  %2570 = vmatprep.subr.mxu0 %v2569
  %v2571 = vand.u32 %v2024, 4294901760
  %v2572 = vsub.f32 %v2024, %v2571
  %2573 = vmatpush1.msra.mxu0 %v2572
  %v2574 = vand.u32 %v2029, 4294901760
  %v2575 = vsub.f32 %v2029, %v2574
  %2576 = vmatprep.subr.mxu0 %v2575
  %v2577 = vand.u32 %v2028, 4294901760
  %v2578 = vsub.f32 %v2028, %v2577
  %2579 = vmatpush1.msra.mxu0 %v2578
  %v2580 = vand.u32 %v2057, 4294901760
  %v2581 = vsub.f32 %v2057, %v2580
  %2582 = vmatprep.subr.mxu0 %v2581
  %v2583 = vand.u32 %v2056, 4294901760
  %v2584 = vsub.f32 %v2056, %v2583
  %2585 = vmatpush1.msra.mxu0 %v2584
  %v2586 = vand.u32 %v2061, 4294901760
  %v2587 = vsub.f32 %v2061, %v2586
  %2588 = vmatprep.subr.mxu0 %v2587
  %v2589 = vand.u32 %v2060, 4294901760
  %v2590 = vsub.f32 %v2060, %v2589
  %2591 = vmatpush1.msra.mxu0 %v2590
  %v2592 = vand.u32 %v2089, 4294901760
  %v2593 = vsub.f32 %v2089, %v2592
  %2594 = vmatprep.subr.mxu0 %v2593
  %v2595 = vand.u32 %v2088, 4294901760
  %v2596 = vsub.f32 %v2088, %v2595
  %2597 = vmatpush1.msra.mxu0 %v2596
  %v2598 = vand.u32 %v2093, 4294901760
  %v2599 = vsub.f32 %v2093, %v2598
  %2600 = vmatprep.subr.mxu0 %v2599
  %v2601 = vand.u32 %v2092, 4294901760
  %v2602 = vsub.f32 %v2092, %v2601
  %2603 = vmatpush1.msra.mxu0 %v2602
  %v2604 = vand.u32 %v2121, 4294901760
  %v2605 = vsub.f32 %v2121, %v2604
  %2606 = vmatprep.subr.mxu0 %v2605
  %v2607 = vand.u32 %v2120, 4294901760
  %v2608 = vsub.f32 %v2120, %v2607
  %2609 = vmatpush1.msra.mxu0 %v2608
  %v2610 = vand.u32 %v2125, 4294901760
  %v2611 = vsub.f32 %v2125, %v2610
  %2612 = vmatprep.subr.mxu0 %v2611
  %v2613 = vand.u32 %v2124, 4294901760
  %v2614 = vsub.f32 %v2124, %v2613
  %2615 = vmatpush1.msra.mxu0 %v2614
  %2616 = vmatprep.subr.mxu0 0.0
  %2617 = vmatpush1.msra.mxu0 0.0
  %2618 = vmatprep.subr.mxu0 0.0
  %2619 = vmatpush1.msra.mxu0 0.0
  %2620 = vmatprep.subr.mxu0 0.0
  %2621 = vmatpush1.msra.mxu0 0.0
  %2622 = vmatprep.subr.mxu0 0.0
  %2623 = vmatpush1.msra.mxu0 0.0
  %2624 = vmatprep.subr.mxu0 0.0
  %2625 = vmatpush1.msra.mxu0 0.0
  %2626 = vmatprep.subr.mxu0 0.0
  %2627 = vmatpush1.msra.mxu0 0.0
  %2628 = vmatprep.subr.mxu0 0.0
  %2629 = vmatpush1.msra.mxu0 0.0
  %2630 = vmatprep.subr.mxu0 0.0
  %2631 = vmatpush1.msra.mxu0 0.0
  %2632 = vmatprep.subr.mxu0 0.0
  %2633 = vmatpush1.msra.mxu0 0.0
  %2634 = vmatprep.subr.mxu0 0.0
  %2635 = vmatpush1.msra.mxu0 0.0
  %2636 = vmatprep.subr.mxu0 0.0
  %2637 = vmatpush1.msra.mxu0 0.0
  %2638 = vmatprep.subr.mxu0 0.0
  %2639 = vmatpush1.msra.mxu0 0.0
  %2640 = vmatprep.subr.mxu0 0.0
  %2641 = vmatpush1.msra.mxu0 0.0
  %2642 = vmatprep.subr.mxu0 0.0
  %2643 = vmatpush1.msra.mxu0 0.0
  %v2644 = vand.u32 %v2136, 4294901760
  %v2645 = vsub.f32 %v2136, %v2644
  %2646 = vmatprep.mubr.f32.mxu0 %v2645
  %v2647 = vand.u32 %v1870, 4294901760
  %v2648 = vsub.f32 %v1870, %v2647
  %2649 = vmatmul.mubr.f32.gmra.mrb[0].mxu0 %v2648
  %v2650 = vpop.f32.mrb[0].mxu0
  %v2651 = vadd.f32 %v2504, %v2650
  %v2652 = vpop.f32.mrb[0].mxu0
  %v2653 = vadd.f32 %v2506, %v2652
  %2654 = vdwg.mxu0
  %v2655 = vand.u32 %v1897, 4294901760
  %2656 = vmatprep.subr.mxu0 %v2655
  %v2657 = vand.u32 %v1896, 4294901760
  %2658 = vmatpush1.msra.mxu0 %v2657
  %v2659 = vand.u32 %v1901, 4294901760
  %2660 = vmatprep.subr.mxu0 %v2659
  %v2661 = vand.u32 %v1900, 4294901760
  %2662 = vmatpush1.msra.mxu0 %v2661
  %v2663 = vand.u32 %v1929, 4294901760
  %2664 = vmatprep.subr.mxu0 %v2663
  %v2665 = vand.u32 %v1928, 4294901760
  %2666 = vmatpush1.msra.mxu0 %v2665
  %v2667 = vand.u32 %v1933, 4294901760
  %2668 = vmatprep.subr.mxu0 %v2667
  %v2669 = vand.u32 %v1932, 4294901760
  %2670 = vmatpush1.msra.mxu0 %v2669
  %v2671 = vand.u32 %v1961, 4294901760
  %2672 = vmatprep.subr.mxu0 %v2671
  %v2673 = vand.u32 %v1960, 4294901760
  %2674 = vmatpush1.msra.mxu0 %v2673
  %v2675 = vand.u32 %v1965, 4294901760
  %2676 = vmatprep.subr.mxu0 %v2675
  %v2677 = vand.u32 %v1964, 4294901760
  %2678 = vmatpush1.msra.mxu0 %v2677
  %v2679 = vand.u32 %v1993, 4294901760
  %2680 = vmatprep.subr.mxu0 %v2679
  %v2681 = vand.u32 %v1992, 4294901760
  %2682 = vmatpush1.msra.mxu0 %v2681
  %v2683 = vand.u32 %v1997, 4294901760
  %2684 = vmatprep.subr.mxu0 %v2683
  %v2685 = vand.u32 %v1996, 4294901760
  %2686 = vmatpush1.msra.mxu0 %v2685
  %v2687 = vand.u32 %v1863, 4294901760
  %2688 = vmatprep.subr.mxu0 %v2687
  %v2689 = vand.u32 %v1862, 4294901760
  %2690 = vmatpush1.msra.mxu0 %v2689
  %v2691 = vand.u32 %v1867, 4294901760
  %2692 = vmatprep.subr.mxu0 %v2691
  %v2693 = vand.u32 %v1866, 4294901760
  %2694 = vmatpush1.msra.mxu0 %v2693
  %v2695 = vand.u32 %v2025, 4294901760
  %2696 = vmatprep.subr.mxu0 %v2695
  %v2697 = vand.u32 %v2024, 4294901760
  %2698 = vmatpush1.msra.mxu0 %v2697
  %v2699 = vand.u32 %v2029, 4294901760
  %2700 = vmatprep.subr.mxu0 %v2699
  %v2701 = vand.u32 %v2028, 4294901760
  %2702 = vmatpush1.msra.mxu0 %v2701
  %v2703 = vand.u32 %v2057, 4294901760
  %2704 = vmatprep.subr.mxu0 %v2703
  %v2705 = vand.u32 %v2056, 4294901760
  %2706 = vmatpush1.msra.mxu0 %v2705
  %v2707 = vand.u32 %v2061, 4294901760
  %2708 = vmatprep.subr.mxu0 %v2707
  %v2709 = vand.u32 %v2060, 4294901760
  %2710 = vmatpush1.msra.mxu0 %v2709
  %v2711 = vand.u32 %v2089, 4294901760
  %2712 = vmatprep.subr.mxu0 %v2711
  %v2713 = vand.u32 %v2088, 4294901760
  %2714 = vmatpush1.msra.mxu0 %v2713
  %v2715 = vand.u32 %v2093, 4294901760
  %2716 = vmatprep.subr.mxu0 %v2715
  %v2717 = vand.u32 %v2092, 4294901760
  %2718 = vmatpush1.msra.mxu0 %v2717
  %v2719 = vand.u32 %v2121, 4294901760
  %2720 = vmatprep.subr.mxu0 %v2719
  %v2721 = vand.u32 %v2120, 4294901760
  %2722 = vmatpush1.msra.mxu0 %v2721
  %v2723 = vand.u32 %v2125, 4294901760
  %2724 = vmatprep.subr.mxu0 %v2723
  %v2725 = vand.u32 %v2124, 4294901760
  %2726 = vmatpush1.msra.mxu0 %v2725
  %2727 = vmatprep.subr.mxu0 0.0
  %2728 = vmatpush1.msra.mxu0 0.0
  %2729 = vmatprep.subr.mxu0 0.0
  %2730 = vmatpush1.msra.mxu0 0.0
  %2731 = vmatprep.subr.mxu0 0.0
  %2732 = vmatpush1.msra.mxu0 0.0
  %2733 = vmatprep.subr.mxu0 0.0
  %2734 = vmatpush1.msra.mxu0 0.0
  %2735 = vmatprep.subr.mxu0 0.0
  %2736 = vmatpush1.msra.mxu0 0.0
  %2737 = vmatprep.subr.mxu0 0.0
  %2738 = vmatpush1.msra.mxu0 0.0
  %2739 = vmatprep.subr.mxu0 0.0
  %2740 = vmatpush1.msra.mxu0 0.0
  %2741 = vmatprep.subr.mxu0 0.0
  %2742 = vmatpush1.msra.mxu0 0.0
  %2743 = vmatprep.subr.mxu0 0.0
  %2744 = vmatpush1.msra.mxu0 0.0
  %2745 = vmatprep.subr.mxu0 0.0
  %2746 = vmatpush1.msra.mxu0 0.0
  %2747 = vmatprep.subr.mxu0 0.0
  %2748 = vmatpush1.msra.mxu0 0.0
  %2749 = vmatprep.subr.mxu0 0.0
  %2750 = vmatpush1.msra.mxu0 0.0
  %2751 = vmatprep.subr.mxu0 0.0
  %2752 = vmatpush1.msra.mxu0 0.0
  %2753 = vmatprep.subr.mxu0 0.0
  %2754 = vmatpush1.msra.mxu0 0.0
  %v2755 = vand.u32 %v2136, 4294901760
  %v2756 = vsub.f32 %v2136, %v2755
  %v2757 = vand.u32 %v2756, 4294901760
  %2758 = vmatprep.mubr.f32.mxu0 %v2757
  %v2759 = vand.u32 %v1870, 4294901760
  %v2760 = vsub.f32 %v1870, %v2759
  %v2761 = vand.u32 %v2760, 4294901760
  %2762 = vmatmul.mubr.f32.gmra.mrb[0].mxu0 %v2761
  %v2763 = vpop.f32.mrb[0].mxu0
  %v2764 = vadd.f32 %v2651, %v2763
  %v2765 = vpop.f32.mrb[0].mxu0
  %v2766 = vadd.f32 %v2653, %v2765
  %2767 = vdwg.mxu0
  %v2768 = vand.u32 %v1897, 4294901760
  %v2769 = vsub.f32 %v1897, %v2768
  %v2770 = vand.u32 %v2769, 4294901760
  %2771 = vmatprep.subr.mxu0 %v2770
  %v2772 = vand.u32 %v1896, 4294901760
  %v2773 = vsub.f32 %v1896, %v2772
  %v2774 = vand.u32 %v2773, 4294901760
  %2775 = vmatpush1.msra.mxu0 %v2774
  %v2776 = vand.u32 %v1901, 4294901760
  %v2777 = vsub.f32 %v1901, %v2776
  %v2778 = vand.u32 %v2777, 4294901760
  %2779 = vmatprep.subr.mxu0 %v2778
  %v2780 = vand.u32 %v1900, 4294901760
  %v2781 = vsub.f32 %v1900, %v2780
  %v2782 = vand.u32 %v2781, 4294901760
  %2783 = vmatpush1.msra.mxu0 %v2782
  %v2784 = vand.u32 %v1929, 4294901760
  %v2785 = vsub.f32 %v1929, %v2784
  %v2786 = vand.u32 %v2785, 4294901760
  %2787 = vmatprep.subr.mxu0 %v2786
  %v2788 = vand.u32 %v1928, 4294901760
  %v2789 = vsub.f32 %v1928, %v2788
  %v2790 = vand.u32 %v2789, 4294901760
  %2791 = vmatpush1.msra.mxu0 %v2790
  %v2792 = vand.u32 %v1933, 4294901760
  %v2793 = vsub.f32 %v1933, %v2792
  %v2794 = vand.u32 %v2793, 4294901760
  %2795 = vmatprep.subr.mxu0 %v2794
  %v2796 = vand.u32 %v1932, 4294901760
  %v2797 = vsub.f32 %v1932, %v2796
  %v2798 = vand.u32 %v2797, 4294901760
  %2799 = vmatpush1.msra.mxu0 %v2798
  %v2800 = vand.u32 %v1961, 4294901760
  %v2801 = vsub.f32 %v1961, %v2800
  %v2802 = vand.u32 %v2801, 4294901760
  %2803 = vmatprep.subr.mxu0 %v2802
  %v2804 = vand.u32 %v1960, 4294901760
  %v2805 = vsub.f32 %v1960, %v2804
  %v2806 = vand.u32 %v2805, 4294901760
  %2807 = vmatpush1.msra.mxu0 %v2806
  %v2808 = vand.u32 %v1965, 4294901760
  %v2809 = vsub.f32 %v1965, %v2808
  %v2810 = vand.u32 %v2809, 4294901760
  %2811 = vmatprep.subr.mxu0 %v2810
  %v2812 = vand.u32 %v1964, 4294901760
  %v2813 = vsub.f32 %v1964, %v2812
  %v2814 = vand.u32 %v2813, 4294901760
  %2815 = vmatpush1.msra.mxu0 %v2814
  %v2816 = vand.u32 %v1993, 4294901760
  %v2817 = vsub.f32 %v1993, %v2816
  %v2818 = vand.u32 %v2817, 4294901760
  %2819 = vmatprep.subr.mxu0 %v2818
  %v2820 = vand.u32 %v1992, 4294901760
  %v2821 = vsub.f32 %v1992, %v2820
  %v2822 = vand.u32 %v2821, 4294901760
  %2823 = vmatpush1.msra.mxu0 %v2822
  %v2824 = vand.u32 %v1997, 4294901760
  %v2825 = vsub.f32 %v1997, %v2824
  %v2826 = vand.u32 %v2825, 4294901760
  %2827 = vmatprep.subr.mxu0 %v2826
  %v2828 = vand.u32 %v1996, 4294901760
  %v2829 = vsub.f32 %v1996, %v2828
  %v2830 = vand.u32 %v2829, 4294901760
  %2831 = vmatpush1.msra.mxu0 %v2830
  %v2832 = vand.u32 %v1863, 4294901760
  %v2833 = vsub.f32 %v1863, %v2832
  %v2834 = vand.u32 %v2833, 4294901760
  %2835 = vmatprep.subr.mxu0 %v2834
  %v2836 = vand.u32 %v1862, 4294901760
  %v2837 = vsub.f32 %v1862, %v2836
  %v2838 = vand.u32 %v2837, 4294901760
  %2839 = vmatpush1.msra.mxu0 %v2838
  %v2840 = vand.u32 %v1867, 4294901760
  %v2841 = vsub.f32 %v1867, %v2840
  %v2842 = vand.u32 %v2841, 4294901760
  %2843 = vmatprep.subr.mxu0 %v2842
  %v2844 = vand.u32 %v1866, 4294901760
  %v2845 = vsub.f32 %v1866, %v2844
  %v2846 = vand.u32 %v2845, 4294901760
  %2847 = vmatpush1.msra.mxu0 %v2846
  %v2848 = vand.u32 %v2025, 4294901760
  %v2849 = vsub.f32 %v2025, %v2848
  %v2850 = vand.u32 %v2849, 4294901760
  %2851 = vmatprep.subr.mxu0 %v2850
  %v2852 = vand.u32 %v2024, 4294901760
  %v2853 = vsub.f32 %v2024, %v2852
  %v2854 = vand.u32 %v2853, 4294901760
  %2855 = vmatpush1.msra.mxu0 %v2854
  %v2856 = vand.u32 %v2029, 4294901760
  %v2857 = vsub.f32 %v2029, %v2856
  %v2858 = vand.u32 %v2857, 4294901760
  %2859 = vmatprep.subr.mxu0 %v2858
  %v2860 = vand.u32 %v2028, 4294901760
  %v2861 = vsub.f32 %v2028, %v2860
  %v2862 = vand.u32 %v2861, 4294901760
  %2863 = vmatpush1.msra.mxu0 %v2862
  %v2864 = vand.u32 %v2057, 4294901760
  %v2865 = vsub.f32 %v2057, %v2864
  %v2866 = vand.u32 %v2865, 4294901760
  %2867 = vmatprep.subr.mxu0 %v2866
  %v2868 = vand.u32 %v2056, 4294901760
  %v2869 = vsub.f32 %v2056, %v2868
  %v2870 = vand.u32 %v2869, 4294901760
  %2871 = vmatpush1.msra.mxu0 %v2870
  %v2872 = vand.u32 %v2061, 4294901760
  %v2873 = vsub.f32 %v2061, %v2872
  %v2874 = vand.u32 %v2873, 4294901760
  %2875 = vmatprep.subr.mxu0 %v2874
  %v2876 = vand.u32 %v2060, 4294901760
  %v2877 = vsub.f32 %v2060, %v2876
  %v2878 = vand.u32 %v2877, 4294901760
  %2879 = vmatpush1.msra.mxu0 %v2878
  %v2880 = vand.u32 %v2089, 4294901760
  %v2881 = vsub.f32 %v2089, %v2880
  %v2882 = vand.u32 %v2881, 4294901760
  %2883 = vmatprep.subr.mxu0 %v2882
  %v2884 = vand.u32 %v2088, 4294901760
  %v2885 = vsub.f32 %v2088, %v2884
  %v2886 = vand.u32 %v2885, 4294901760
  %2887 = vmatpush1.msra.mxu0 %v2886
  %v2888 = vand.u32 %v2093, 4294901760
  %v2889 = vsub.f32 %v2093, %v2888
  %v2890 = vand.u32 %v2889, 4294901760
  %2891 = vmatprep.subr.mxu0 %v2890
  %v2892 = vand.u32 %v2092, 4294901760
  %v2893 = vsub.f32 %v2092, %v2892
  %v2894 = vand.u32 %v2893, 4294901760
  %2895 = vmatpush1.msra.mxu0 %v2894
  %v2896 = vand.u32 %v2121, 4294901760
  %v2897 = vsub.f32 %v2121, %v2896
  %v2898 = vand.u32 %v2897, 4294901760
  %2899 = vmatprep.subr.mxu0 %v2898
  %v2900 = vand.u32 %v2120, 4294901760
  %v2901 = vsub.f32 %v2120, %v2900
  %v2902 = vand.u32 %v2901, 4294901760
  %2903 = vmatpush1.msra.mxu0 %v2902
  %v2904 = vand.u32 %v2125, 4294901760
  %v2905 = vsub.f32 %v2125, %v2904
  %v2906 = vand.u32 %v2905, 4294901760
  %2907 = vmatprep.subr.mxu0 %v2906
  %v2908 = vand.u32 %v2124, 4294901760
  %v2909 = vsub.f32 %v2124, %v2908
  %v2910 = vand.u32 %v2909, 4294901760
  %2911 = vmatpush1.msra.mxu0 %v2910
  %2912 = vmatprep.subr.mxu0 0.0
  %2913 = vmatpush1.msra.mxu0 0.0
  %2914 = vmatprep.subr.mxu0 0.0
  %2915 = vmatpush1.msra.mxu0 0.0
  %2916 = vmatprep.subr.mxu0 0.0
  %2917 = vmatpush1.msra.mxu0 0.0
  %2918 = vmatprep.subr.mxu0 0.0
  %2919 = vmatpush1.msra.mxu0 0.0
  %2920 = vmatprep.subr.mxu0 0.0
  %2921 = vmatpush1.msra.mxu0 0.0
  %2922 = vmatprep.subr.mxu0 0.0
  %2923 = vmatpush1.msra.mxu0 0.0
  %2924 = vmatprep.subr.mxu0 0.0
  %2925 = vmatpush1.msra.mxu0 0.0
  %2926 = vmatprep.subr.mxu0 0.0
  %2927 = vmatpush1.msra.mxu0 0.0
  %2928 = vmatprep.subr.mxu0 0.0
  %2929 = vmatpush1.msra.mxu0 0.0
  %2930 = vmatprep.subr.mxu0 0.0
  %2931 = vmatpush1.msra.mxu0 0.0
  %2932 = vmatprep.subr.mxu0 0.0
  %2933 = vmatpush1.msra.mxu0 0.0
  %2934 = vmatprep.subr.mxu0 0.0
  %2935 = vmatpush1.msra.mxu0 0.0
  %2936 = vmatprep.subr.mxu0 0.0
  %2937 = vmatpush1.msra.mxu0 0.0
  %2938 = vmatprep.subr.mxu0 0.0
  %2939 = vmatpush1.msra.mxu0 0.0
  %v2940 = vand.u32 %v2136, 4294901760
  %2941 = vmatprep.mubr.f32.mxu0 %v2940
  %v2942 = vand.u32 %v1870, 4294901760
  %2943 = vmatmul.mubr.f32.gmra.mrb[0].mxu0 %v2942
  %v2944 = vpop.f32.mrb[0].mxu0
  %v2945 = vadd.f32 %v2764, %v2944
  %v2946 = vpop.f32.mrb[0].mxu0
  %v2947 = vadd.f32 %v2766, %v2946
  %2948 = vdwg.mxu0
  %v2949 = vand.u32 %v1897, 4294901760
  %2950 = vmatprep.subr.mxu0 %v2949
  %v2951 = vand.u32 %v1896, 4294901760
  %2952 = vmatpush1.msra.mxu0 %v2951
  %v2953 = vand.u32 %v1901, 4294901760
  %2954 = vmatprep.subr.mxu0 %v2953
  %v2955 = vand.u32 %v1900, 4294901760
  %2956 = vmatpush1.msra.mxu0 %v2955
  %v2957 = vand.u32 %v1929, 4294901760
  %2958 = vmatprep.subr.mxu0 %v2957
  %v2959 = vand.u32 %v1928, 4294901760
  %2960 = vmatpush1.msra.mxu0 %v2959
  %v2961 = vand.u32 %v1933, 4294901760
  %2962 = vmatprep.subr.mxu0 %v2961
  %v2963 = vand.u32 %v1932, 4294901760
  %2964 = vmatpush1.msra.mxu0 %v2963
  %v2965 = vand.u32 %v1961, 4294901760
  %2966 = vmatprep.subr.mxu0 %v2965
  %v2967 = vand.u32 %v1960, 4294901760
  %2968 = vmatpush1.msra.mxu0 %v2967
  %v2969 = vand.u32 %v1965, 4294901760
  %2970 = vmatprep.subr.mxu0 %v2969
  %v2971 = vand.u32 %v1964, 4294901760
  %2972 = vmatpush1.msra.mxu0 %v2971
  %v2973 = vand.u32 %v1993, 4294901760
  %2974 = vmatprep.subr.mxu0 %v2973
  %v2975 = vand.u32 %v1992, 4294901760
  %2976 = vmatpush1.msra.mxu0 %v2975
  %v2977 = vand.u32 %v1997, 4294901760
  %2978 = vmatprep.subr.mxu0 %v2977
  %v2979 = vand.u32 %v1996, 4294901760
  %2980 = vmatpush1.msra.mxu0 %v2979
  %v2981 = vand.u32 %v1863, 4294901760
  %2982 = vmatprep.subr.mxu0 %v2981
  %v2983 = vand.u32 %v1862, 4294901760
  %2984 = vmatpush1.msra.mxu0 %v2983
  %v2985 = vand.u32 %v1867, 4294901760
  %2986 = vmatprep.subr.mxu0 %v2985
  %v2987 = vand.u32 %v1866, 4294901760
  %2988 = vmatpush1.msra.mxu0 %v2987
  %v2989 = vand.u32 %v2025, 4294901760
  %2990 = vmatprep.subr.mxu0 %v2989
  %v2991 = vand.u32 %v2024, 4294901760
  %2992 = vmatpush1.msra.mxu0 %v2991
  %v2993 = vand.u32 %v2029, 4294901760
  %2994 = vmatprep.subr.mxu0 %v2993
  %v2995 = vand.u32 %v2028, 4294901760
  %2996 = vmatpush1.msra.mxu0 %v2995
  %v2997 = vand.u32 %v2057, 4294901760
  %2998 = vmatprep.subr.mxu0 %v2997
  %v2999 = vand.u32 %v2056, 4294901760
  %3000 = vmatpush1.msra.mxu0 %v2999
  %v3001 = vand.u32 %v2061, 4294901760
  %3002 = vmatprep.subr.mxu0 %v3001
  %v3003 = vand.u32 %v2060, 4294901760
  %3004 = vmatpush1.msra.mxu0 %v3003
  %v3005 = vand.u32 %v2089, 4294901760
  %3006 = vmatprep.subr.mxu0 %v3005
  %v3007 = vand.u32 %v2088, 4294901760
  %3008 = vmatpush1.msra.mxu0 %v3007
  %v3009 = vand.u32 %v2093, 4294901760
  %3010 = vmatprep.subr.mxu0 %v3009
  %v3011 = vand.u32 %v2092, 4294901760
  %3012 = vmatpush1.msra.mxu0 %v3011
  %v3013 = vand.u32 %v2121, 4294901760
  %3014 = vmatprep.subr.mxu0 %v3013
  %v3015 = vand.u32 %v2120, 4294901760
  %3016 = vmatpush1.msra.mxu0 %v3015
  %v3017 = vand.u32 %v2125, 4294901760
  %3018 = vmatprep.subr.mxu0 %v3017
  %v3019 = vand.u32 %v2124, 4294901760
  %3020 = vmatpush1.msra.mxu0 %v3019
  %3021 = vmatprep.subr.mxu0 0.0
  %3022 = vmatpush1.msra.mxu0 0.0
  %3023 = vmatprep.subr.mxu0 0.0
  %3024 = vmatpush1.msra.mxu0 0.0
  %3025 = vmatprep.subr.mxu0 0.0
  %3026 = vmatpush1.msra.mxu0 0.0
  %3027 = vmatprep.subr.mxu0 0.0
  %3028 = vmatpush1.msra.mxu0 0.0
  %3029 = vmatprep.subr.mxu0 0.0
  %3030 = vmatpush1.msra.mxu0 0.0
  %3031 = vmatprep.subr.mxu0 0.0
  %3032 = vmatpush1.msra.mxu0 0.0
  %3033 = vmatprep.subr.mxu0 0.0
  %3034 = vmatpush1.msra.mxu0 0.0
  %3035 = vmatprep.subr.mxu0 0.0
  %3036 = vmatpush1.msra.mxu0 0.0
  %3037 = vmatprep.subr.mxu0 0.0
  %3038 = vmatpush1.msra.mxu0 0.0
  %3039 = vmatprep.subr.mxu0 0.0
  %3040 = vmatpush1.msra.mxu0 0.0
  %3041 = vmatprep.subr.mxu0 0.0
  %3042 = vmatpush1.msra.mxu0 0.0
  %3043 = vmatprep.subr.mxu0 0.0
  %3044 = vmatpush1.msra.mxu0 0.0
  %3045 = vmatprep.subr.mxu0 0.0
  %3046 = vmatpush1.msra.mxu0 0.0
  %3047 = vmatprep.subr.mxu0 0.0
  %3048 = vmatpush1.msra.mxu0 0.0
  %v3049 = vand.u32 %v2136, 4294901760
  %3050 = vmatprep.mubr.f32.mxu0 %v3049
  %v3051 = vand.u32 %v1870, 4294901760
  %3052 = vmatmul.mubr.f32.gmra.mrb[0].mxu0 %v3051
  %v3053 = vpop.f32.mrb[0].mxu0
  %v3054 = vadd.f32 %v2945, %v3053
  %v3055 = vpop.f32.mrb[0].mxu0
  %v3056 = vadd.f32 %v2947, %v3055
  %3057 = vdwg.mxu0
  %v3058 = vand.u32 %v1899, 4294901760
  %3059 = vmatprep.subr.mxu0 %v3058
  %v3060 = vand.u32 %v1898, 4294901760
  %3061 = vmatpush1.msra.mxu0 %v3060
  %v3062 = vand.u32 %v1903, 4294901760
  %3063 = vmatprep.subr.mxu0 %v3062
  %v3064 = vand.u32 %v1902, 4294901760
  %3065 = vmatpush1.msra.mxu0 %v3064
  %v3066 = vand.u32 %v1931, 4294901760
  %3067 = vmatprep.subr.mxu0 %v3066
  %v3068 = vand.u32 %v1930, 4294901760
  %3069 = vmatpush1.msra.mxu0 %v3068
  %v3070 = vand.u32 %v1935, 4294901760
  %3071 = vmatprep.subr.mxu0 %v3070
  %v3072 = vand.u32 %v1934, 4294901760
  %3073 = vmatpush1.msra.mxu0 %v3072
  %v3074 = vand.u32 %v1963, 4294901760
  %3075 = vmatprep.subr.mxu0 %v3074
  %v3076 = vand.u32 %v1962, 4294901760
  %3077 = vmatpush1.msra.mxu0 %v3076
  %v3078 = vand.u32 %v1967, 4294901760
  %3079 = vmatprep.subr.mxu0 %v3078
  %v3080 = vand.u32 %v1966, 4294901760
  %3081 = vmatpush1.msra.mxu0 %v3080
  %v3082 = vand.u32 %v1995, 4294901760
  %3083 = vmatprep.subr.mxu0 %v3082
  %v3084 = vand.u32 %v1994, 4294901760
  %3085 = vmatpush1.msra.mxu0 %v3084
  %v3086 = vand.u32 %v1999, 4294901760
  %3087 = vmatprep.subr.mxu0 %v3086
  %v3088 = vand.u32 %v1998, 4294901760
  %3089 = vmatpush1.msra.mxu0 %v3088
  %v3090 = vand.u32 %v1865, 4294901760
  %3091 = vmatprep.subr.mxu0 %v3090
  %v3092 = vand.u32 %v1864, 4294901760
  %3093 = vmatpush1.msra.mxu0 %v3092
  %v3094 = vand.u32 %v1869, 4294901760
  %3095 = vmatprep.subr.mxu0 %v3094
  %v3096 = vand.u32 %v1868, 4294901760
  %3097 = vmatpush1.msra.mxu0 %v3096
  %v3098 = vand.u32 %v2027, 4294901760
  %3099 = vmatprep.subr.mxu0 %v3098
  %v3100 = vand.u32 %v2026, 4294901760
  %3101 = vmatpush1.msra.mxu0 %v3100
  %v3102 = vand.u32 %v2031, 4294901760
  %3103 = vmatprep.subr.mxu0 %v3102
  %v3104 = vand.u32 %v2030, 4294901760
  %3105 = vmatpush1.msra.mxu0 %v3104
  %v3106 = vand.u32 %v2059, 4294901760
  %3107 = vmatprep.subr.mxu0 %v3106
  %v3108 = vand.u32 %v2058, 4294901760
  %3109 = vmatpush1.msra.mxu0 %v3108
  %v3110 = vand.u32 %v2063, 4294901760
  %3111 = vmatprep.subr.mxu0 %v3110
  %v3112 = vand.u32 %v2062, 4294901760
  %3113 = vmatpush1.msra.mxu0 %v3112
  %v3114 = vand.u32 %v2091, 4294901760
  %3115 = vmatprep.subr.mxu0 %v3114
  %v3116 = vand.u32 %v2090, 4294901760
  %3117 = vmatpush1.msra.mxu0 %v3116
  %v3118 = vand.u32 %v2095, 4294901760
  %3119 = vmatprep.subr.mxu0 %v3118
  %v3120 = vand.u32 %v2094, 4294901760
  %3121 = vmatpush1.msra.mxu0 %v3120
  %v3122 = vand.u32 %v2123, 4294901760
  %3123 = vmatprep.subr.mxu0 %v3122
  %v3124 = vand.u32 %v2122, 4294901760
  %3125 = vmatpush1.msra.mxu0 %v3124
  %v3126 = vand.u32 %v2127, 4294901760
  %3127 = vmatprep.subr.mxu0 %v3126
  %v3128 = vand.u32 %v2126, 4294901760
  %3129 = vmatpush1.msra.mxu0 %v3128
  %3130 = vmatprep.subr.mxu0 0.0
  %3131 = vmatpush1.msra.mxu0 0.0
  %3132 = vmatprep.subr.mxu0 0.0
  %3133 = vmatpush1.msra.mxu0 0.0
  %3134 = vmatprep.subr.mxu0 0.0
  %3135 = vmatpush1.msra.mxu0 0.0
  %3136 = vmatprep.subr.mxu0 0.0
  %3137 = vmatpush1.msra.mxu0 0.0
  %3138 = vmatprep.subr.mxu0 0.0
  %3139 = vmatpush1.msra.mxu0 0.0
  %3140 = vmatprep.subr.mxu0 0.0
  %3141 = vmatpush1.msra.mxu0 0.0
  %3142 = vmatprep.subr.mxu0 0.0
  %3143 = vmatpush1.msra.mxu0 0.0
  %3144 = vmatprep.subr.mxu0 0.0
  %3145 = vmatpush1.msra.mxu0 0.0
  %3146 = vmatprep.subr.mxu0 0.0
  %3147 = vmatpush1.msra.mxu0 0.0
  %3148 = vmatprep.subr.mxu0 0.0
  %3149 = vmatpush1.msra.mxu0 0.0
  %3150 = vmatprep.subr.mxu0 0.0
  %3151 = vmatpush1.msra.mxu0 0.0
  %3152 = vmatprep.subr.mxu0 0.0
  %3153 = vmatpush1.msra.mxu0 0.0
  %3154 = vmatprep.subr.mxu0 0.0
  %3155 = vmatpush1.msra.mxu0 0.0
  %3156 = vmatprep.subr.mxu0 0.0
  %3157 = vmatpush1.msra.mxu0 0.0
  %v3158 = vand.u32 %v2136, 4294901760
  %v3159 = vsub.f32 %v2136, %v3158
  %v3160 = vand.u32 %v3159, 4294901760
  %v3161 = vsub.f32 %v3159, %v3160
  %v3162 = vand.u32 %v3161, 4294901760
  %3163 = vmatprep.mubr.f32.mxu0 %v3162
  %v3164 = vand.u32 %v1870, 4294901760
  %v3165 = vsub.f32 %v1870, %v3164
  %v3166 = vand.u32 %v3165, 4294901760
  %v3167 = vsub.f32 %v3165, %v3166
  %v3168 = vand.u32 %v3167, 4294901760
  %3169 = vmatmul.mubr.f32.gmra.mrb[0].mxu0 %v3168
  %v3170 = vpop.f32.mrb[0].mxu0
  %v3171 = vadd.f32 %v2132, %v3170
  %v3172 = vpop.f32.mrb[0].mxu0
  %v3173 = vadd.f32 %v2132, %v3172
  %3174 = vdwg.mxu0
  %v3175 = vand.u32 %v1899, 4294901760
  %v3176 = vsub.f32 %v1899, %v3175
  %v3177 = vand.u32 %v3176, 4294901760
  %v3178 = vsub.f32 %v3176, %v3177
  %v3179 = vand.u32 %v3178, 4294901760
  %3180 = vmatprep.subr.mxu0 %v3179
  %v3181 = vand.u32 %v1898, 4294901760
  %v3182 = vsub.f32 %v1898, %v3181
  %v3183 = vand.u32 %v3182, 4294901760
  %v3184 = vsub.f32 %v3182, %v3183
  %v3185 = vand.u32 %v3184, 4294901760
  %3186 = vmatpush1.msra.mxu0 %v3185
  %v3187 = vand.u32 %v1903, 4294901760
  %v3188 = vsub.f32 %v1903, %v3187
  %v3189 = vand.u32 %v3188, 4294901760
  %v3190 = vsub.f32 %v3188, %v3189
  %v3191 = vand.u32 %v3190, 4294901760
  %3192 = vmatprep.subr.mxu0 %v3191
  %v3193 = vand.u32 %v1902, 4294901760
  %v3194 = vsub.f32 %v1902, %v3193
  %v3195 = vand.u32 %v3194, 4294901760
  %v3196 = vsub.f32 %v3194, %v3195
  %v3197 = vand.u32 %v3196, 4294901760
  %3198 = vmatpush1.msra.mxu0 %v3197
  %v3199 = vand.u32 %v1931, 4294901760
  %v3200 = vsub.f32 %v1931, %v3199
  %v3201 = vand.u32 %v3200, 4294901760
  %v3202 = vsub.f32 %v3200, %v3201
  %v3203 = vand.u32 %v3202, 4294901760
  %3204 = vmatprep.subr.mxu0 %v3203
  %v3205 = vand.u32 %v1930, 4294901760
  %v3206 = vsub.f32 %v1930, %v3205
  %v3207 = vand.u32 %v3206, 4294901760
  %v3208 = vsub.f32 %v3206, %v3207
  %v3209 = vand.u32 %v3208, 4294901760
  %3210 = vmatpush1.msra.mxu0 %v3209
  %v3211 = vand.u32 %v1935, 4294901760
  %v3212 = vsub.f32 %v1935, %v3211
  %v3213 = vand.u32 %v3212, 4294901760
  %v3214 = vsub.f32 %v3212, %v3213
  %v3215 = vand.u32 %v3214, 4294901760
  %3216 = vmatprep.subr.mxu0 %v3215
  %v3217 = vand.u32 %v1934, 4294901760
  %v3218 = vsub.f32 %v1934, %v3217
  %v3219 = vand.u32 %v3218, 4294901760
  %v3220 = vsub.f32 %v3218, %v3219
  %v3221 = vand.u32 %v3220, 4294901760
  %3222 = vmatpush1.msra.mxu0 %v3221
  %v3223 = vand.u32 %v1963, 4294901760
  %v3224 = vsub.f32 %v1963, %v3223
  %v3225 = vand.u32 %v3224, 4294901760
  %v3226 = vsub.f32 %v3224, %v3225
  %v3227 = vand.u32 %v3226, 4294901760
  %3228 = vmatprep.subr.mxu0 %v3227
  %v3229 = vand.u32 %v1962, 4294901760
  %v3230 = vsub.f32 %v1962, %v3229
  %v3231 = vand.u32 %v3230, 4294901760
  %v3232 = vsub.f32 %v3230, %v3231
  %v3233 = vand.u32 %v3232, 4294901760
  %3234 = vmatpush1.msra.mxu0 %v3233
  %v3235 = vand.u32 %v1967, 4294901760
  %v3236 = vsub.f32 %v1967, %v3235
  %v3237 = vand.u32 %v3236, 4294901760
  %v3238 = vsub.f32 %v3236, %v3237
  %v3239 = vand.u32 %v3238, 4294901760
  %3240 = vmatprep.subr.mxu0 %v3239
  %v3241 = vand.u32 %v1966, 4294901760
  %v3242 = vsub.f32 %v1966, %v3241
  %v3243 = vand.u32 %v3242, 4294901760
  %v3244 = vsub.f32 %v3242, %v3243
  %v3245 = vand.u32 %v3244, 4294901760
  %3246 = vmatpush1.msra.mxu0 %v3245
  %v3247 = vand.u32 %v1995, 4294901760
  %v3248 = vsub.f32 %v1995, %v3247
  %v3249 = vand.u32 %v3248, 4294901760
  %v3250 = vsub.f32 %v3248, %v3249
  %v3251 = vand.u32 %v3250, 4294901760
  %3252 = vmatprep.subr.mxu0 %v3251
  %v3253 = vand.u32 %v1994, 4294901760
  %v3254 = vsub.f32 %v1994, %v3253
  %v3255 = vand.u32 %v3254, 4294901760
  %v3256 = vsub.f32 %v3254, %v3255
  %v3257 = vand.u32 %v3256, 4294901760
  %3258 = vmatpush1.msra.mxu0 %v3257
  %v3259 = vand.u32 %v1999, 4294901760
  %v3260 = vsub.f32 %v1999, %v3259
  %v3261 = vand.u32 %v3260, 4294901760
  %v3262 = vsub.f32 %v3260, %v3261
  %v3263 = vand.u32 %v3262, 4294901760
  %3264 = vmatprep.subr.mxu0 %v3263
  %v3265 = vand.u32 %v1998, 4294901760
  %v3266 = vsub.f32 %v1998, %v3265
  %v3267 = vand.u32 %v3266, 4294901760
  %v3268 = vsub.f32 %v3266, %v3267
  %v3269 = vand.u32 %v3268, 4294901760
  %3270 = vmatpush1.msra.mxu0 %v3269
  %v3271 = vand.u32 %v1865, 4294901760
  %v3272 = vsub.f32 %v1865, %v3271
  %v3273 = vand.u32 %v3272, 4294901760
  %v3274 = vsub.f32 %v3272, %v3273
  %v3275 = vand.u32 %v3274, 4294901760
  %3276 = vmatprep.subr.mxu0 %v3275
  %v3277 = vand.u32 %v1864, 4294901760
  %v3278 = vsub.f32 %v1864, %v3277
  %v3279 = vand.u32 %v3278, 4294901760
  %v3280 = vsub.f32 %v3278, %v3279
  %v3281 = vand.u32 %v3280, 4294901760
  %3282 = vmatpush1.msra.mxu0 %v3281
  %v3283 = vand.u32 %v1869, 4294901760
  %v3284 = vsub.f32 %v1869, %v3283
  %v3285 = vand.u32 %v3284, 4294901760
  %v3286 = vsub.f32 %v3284, %v3285
  %v3287 = vand.u32 %v3286, 4294901760
  %3288 = vmatprep.subr.mxu0 %v3287
  %v3289 = vand.u32 %v1868, 4294901760
  %v3290 = vsub.f32 %v1868, %v3289
  %v3291 = vand.u32 %v3290, 4294901760
  %v3292 = vsub.f32 %v3290, %v3291
  %v3293 = vand.u32 %v3292, 4294901760
  %3294 = vmatpush1.msra.mxu0 %v3293
  %v3295 = vand.u32 %v2027, 4294901760
  %v3296 = vsub.f32 %v2027, %v3295
  %v3297 = vand.u32 %v3296, 4294901760
  %v3298 = vsub.f32 %v3296, %v3297
  %v3299 = vand.u32 %v3298, 4294901760
  %3300 = vmatprep.subr.mxu0 %v3299
  %v3301 = vand.u32 %v2026, 4294901760
  %v3302 = vsub.f32 %v2026, %v3301
  %v3303 = vand.u32 %v3302, 4294901760
  %v3304 = vsub.f32 %v3302, %v3303
  %v3305 = vand.u32 %v3304, 4294901760
  %3306 = vmatpush1.msra.mxu0 %v3305
  %v3307 = vand.u32 %v2031, 4294901760
  %v3308 = vsub.f32 %v2031, %v3307
  %v3309 = vand.u32 %v3308, 4294901760
  %v3310 = vsub.f32 %v3308, %v3309
  %v3311 = vand.u32 %v3310, 4294901760
  %3312 = vmatprep.subr.mxu0 %v3311
  %v3313 = vand.u32 %v2030, 4294901760
  %v3314 = vsub.f32 %v2030, %v3313
  %v3315 = vand.u32 %v3314, 4294901760
  %v3316 = vsub.f32 %v3314, %v3315
  %v3317 = vand.u32 %v3316, 4294901760
  %3318 = vmatpush1.msra.mxu0 %v3317
  %v3319 = vand.u32 %v2059, 4294901760
  %v3320 = vsub.f32 %v2059, %v3319
  %v3321 = vand.u32 %v3320, 4294901760
  %v3322 = vsub.f32 %v3320, %v3321
  %v3323 = vand.u32 %v3322, 4294901760
  %3324 = vmatprep.subr.mxu0 %v3323
  %v3325 = vand.u32 %v2058, 4294901760
  %v3326 = vsub.f32 %v2058, %v3325
  %v3327 = vand.u32 %v3326, 4294901760
  %v3328 = vsub.f32 %v3326, %v3327
  %v3329 = vand.u32 %v3328, 4294901760
  %3330 = vmatpush1.msra.mxu0 %v3329
  %v3331 = vand.u32 %v2063, 4294901760
  %v3332 = vsub.f32 %v2063, %v3331
  %v3333 = vand.u32 %v3332, 4294901760
  %v3334 = vsub.f32 %v3332, %v3333
  %v3335 = vand.u32 %v3334, 4294901760
  %3336 = vmatprep.subr.mxu0 %v3335
  %v3337 = vand.u32 %v2062, 4294901760
  %v3338 = vsub.f32 %v2062, %v3337
  %v3339 = vand.u32 %v3338, 4294901760
  %v3340 = vsub.f32 %v3338, %v3339
  %v3341 = vand.u32 %v3340, 4294901760
  %3342 = vmatpush1.msra.mxu0 %v3341
  %v3343 = vand.u32 %v2091, 4294901760
  %v3344 = vsub.f32 %v2091, %v3343
  %v3345 = vand.u32 %v3344, 4294901760
  %v3346 = vsub.f32 %v3344, %v3345
  %v3347 = vand.u32 %v3346, 4294901760
  %3348 = vmatprep.subr.mxu0 %v3347
  %v3349 = vand.u32 %v2090, 4294901760
  %v3350 = vsub.f32 %v2090, %v3349
  %v3351 = vand.u32 %v3350, 4294901760
  %v3352 = vsub.f32 %v3350, %v3351
  %v3353 = vand.u32 %v3352, 4294901760
  %3354 = vmatpush1.msra.mxu0 %v3353
  %v3355 = vand.u32 %v2095, 4294901760
  %v3356 = vsub.f32 %v2095, %v3355
  %v3357 = vand.u32 %v3356, 4294901760
  %v3358 = vsub.f32 %v3356, %v3357
  %v3359 = vand.u32 %v3358, 4294901760
  %3360 = vmatprep.subr.mxu0 %v3359
  %v3361 = vand.u32 %v2094, 4294901760
  %v3362 = vsub.f32 %v2094, %v3361
  %v3363 = vand.u32 %v3362, 4294901760
  %v3364 = vsub.f32 %v3362, %v3363
  %v3365 = vand.u32 %v3364, 4294901760
  %3366 = vmatpush1.msra.mxu0 %v3365
  %v3367 = vand.u32 %v2123, 4294901760
  %v3368 = vsub.f32 %v2123, %v3367
  %v3369 = vand.u32 %v3368, 4294901760
  %v3370 = vsub.f32 %v3368, %v3369
  %v3371 = vand.u32 %v3370, 4294901760
  %3372 = vmatprep.subr.mxu0 %v3371
  %v3373 = vand.u32 %v2122, 4294901760
  %v3374 = vsub.f32 %v2122, %v3373
  %v3375 = vand.u32 %v3374, 4294901760
  %v3376 = vsub.f32 %v3374, %v3375
  %v3377 = vand.u32 %v3376, 4294901760
  %3378 = vmatpush1.msra.mxu0 %v3377
  %v3379 = vand.u32 %v2127, 4294901760
  %v3380 = vsub.f32 %v2127, %v3379
  %v3381 = vand.u32 %v3380, 4294901760
  %v3382 = vsub.f32 %v3380, %v3381
  %v3383 = vand.u32 %v3382, 4294901760
  %3384 = vmatprep.subr.mxu0 %v3383
  %v3385 = vand.u32 %v2126, 4294901760
  %v3386 = vsub.f32 %v2126, %v3385
  %v3387 = vand.u32 %v3386, 4294901760
  %v3388 = vsub.f32 %v3386, %v3387
  %v3389 = vand.u32 %v3388, 4294901760
  %3390 = vmatpush1.msra.mxu0 %v3389
  %3391 = vmatprep.subr.mxu0 0.0
  %3392 = vmatpush1.msra.mxu0 0.0
  %3393 = vmatprep.subr.mxu0 0.0
  %3394 = vmatpush1.msra.mxu0 0.0
  %3395 = vmatprep.subr.mxu0 0.0
  %3396 = vmatpush1.msra.mxu0 0.0
  %3397 = vmatprep.subr.mxu0 0.0
  %3398 = vmatpush1.msra.mxu0 0.0
  %3399 = vmatprep.subr.mxu0 0.0
  %3400 = vmatpush1.msra.mxu0 0.0
  %3401 = vmatprep.subr.mxu0 0.0
  %3402 = vmatpush1.msra.mxu0 0.0
  %3403 = vmatprep.subr.mxu0 0.0
  %3404 = vmatpush1.msra.mxu0 0.0
  %3405 = vmatprep.subr.mxu0 0.0
  %3406 = vmatpush1.msra.mxu0 0.0
  %3407 = vmatprep.subr.mxu0 0.0
  %3408 = vmatpush1.msra.mxu0 0.0
  %3409 = vmatprep.subr.mxu0 0.0
  %3410 = vmatpush1.msra.mxu0 0.0
  %3411 = vmatprep.subr.mxu0 0.0
  %3412 = vmatpush1.msra.mxu0 0.0
  %3413 = vmatprep.subr.mxu0 0.0
  %3414 = vmatpush1.msra.mxu0 0.0
  %3415 = vmatprep.subr.mxu0 0.0
  %3416 = vmatpush1.msra.mxu0 0.0
  %3417 = vmatprep.subr.mxu0 0.0
  %3418 = vmatpush1.msra.mxu0 0.0
  %v3419 = vand.u32 %v2136, 4294901760
  %3420 = vmatprep.mubr.f32.mxu0 %v3419
  %v3421 = vand.u32 %v1870, 4294901760
  %3422 = vmatmul.mubr.f32.gmra.mrb[0].mxu0 %v3421
  %v3423 = vpop.f32.mrb[0].mxu0
  %v3424 = vadd.f32 %v3171, %v3423
  %v3425 = vpop.f32.mrb[0].mxu0
  %v3426 = vadd.f32 %v3173, %v3425
  %3427 = vdwg.mxu0
  %v3428 = vand.u32 %v1899, 4294901760
  %v3429 = vsub.f32 %v1899, %v3428
  %3430 = vmatprep.subr.mxu0 %v3429
  %v3431 = vand.u32 %v1898, 4294901760
  %v3432 = vsub.f32 %v1898, %v3431
  %3433 = vmatpush1.msra.mxu0 %v3432
  %v3434 = vand.u32 %v1903, 4294901760
  %v3435 = vsub.f32 %v1903, %v3434
  %3436 = vmatprep.subr.mxu0 %v3435
  %v3437 = vand.u32 %v1902, 4294901760
  %v3438 = vsub.f32 %v1902, %v3437
  %3439 = vmatpush1.msra.mxu0 %v3438
  %v3440 = vand.u32 %v1931, 4294901760
  %v3441 = vsub.f32 %v1931, %v3440
  %3442 = vmatprep.subr.mxu0 %v3441
  %v3443 = vand.u32 %v1930, 4294901760
  %v3444 = vsub.f32 %v1930, %v3443
  %3445 = vmatpush1.msra.mxu0 %v3444
  %v3446 = vand.u32 %v1935, 4294901760
  %v3447 = vsub.f32 %v1935, %v3446
  %3448 = vmatprep.subr.mxu0 %v3447
  %v3449 = vand.u32 %v1934, 4294901760
  %v3450 = vsub.f32 %v1934, %v3449
  %3451 = vmatpush1.msra.mxu0 %v3450
  %v3452 = vand.u32 %v1963, 4294901760
  %v3453 = vsub.f32 %v1963, %v3452
  %3454 = vmatprep.subr.mxu0 %v3453
  %v3455 = vand.u32 %v1962, 4294901760
  %v3456 = vsub.f32 %v1962, %v3455
  %3457 = vmatpush1.msra.mxu0 %v3456
  %v3458 = vand.u32 %v1967, 4294901760
  %v3459 = vsub.f32 %v1967, %v3458
  %3460 = vmatprep.subr.mxu0 %v3459
  %v3461 = vand.u32 %v1966, 4294901760
  %v3462 = vsub.f32 %v1966, %v3461
  %3463 = vmatpush1.msra.mxu0 %v3462
  %v3464 = vand.u32 %v1995, 4294901760
  %v3465 = vsub.f32 %v1995, %v3464
  %3466 = vmatprep.subr.mxu0 %v3465
  %v3467 = vand.u32 %v1994, 4294901760
  %v3468 = vsub.f32 %v1994, %v3467
  %3469 = vmatpush1.msra.mxu0 %v3468
  %v3470 = vand.u32 %v1999, 4294901760
  %v3471 = vsub.f32 %v1999, %v3470
  %3472 = vmatprep.subr.mxu0 %v3471
  %v3473 = vand.u32 %v1998, 4294901760
  %v3474 = vsub.f32 %v1998, %v3473
  %3475 = vmatpush1.msra.mxu0 %v3474
  %v3476 = vand.u32 %v1865, 4294901760
  %v3477 = vsub.f32 %v1865, %v3476
  %3478 = vmatprep.subr.mxu0 %v3477
  %v3479 = vand.u32 %v1864, 4294901760
  %v3480 = vsub.f32 %v1864, %v3479
  %3481 = vmatpush1.msra.mxu0 %v3480
  %v3482 = vand.u32 %v1869, 4294901760
  %v3483 = vsub.f32 %v1869, %v3482
  %3484 = vmatprep.subr.mxu0 %v3483
  %v3485 = vand.u32 %v1868, 4294901760
  %v3486 = vsub.f32 %v1868, %v3485
  %3487 = vmatpush1.msra.mxu0 %v3486
  %v3488 = vand.u32 %v2027, 4294901760
  %v3489 = vsub.f32 %v2027, %v3488
  %3490 = vmatprep.subr.mxu0 %v3489
  %v3491 = vand.u32 %v2026, 4294901760
  %v3492 = vsub.f32 %v2026, %v3491
  %3493 = vmatpush1.msra.mxu0 %v3492
  %v3494 = vand.u32 %v2031, 4294901760
  %v3495 = vsub.f32 %v2031, %v3494
  %3496 = vmatprep.subr.mxu0 %v3495
  %v3497 = vand.u32 %v2030, 4294901760
  %v3498 = vsub.f32 %v2030, %v3497
  %3499 = vmatpush1.msra.mxu0 %v3498
  %v3500 = vand.u32 %v2059, 4294901760
  %v3501 = vsub.f32 %v2059, %v3500
  %3502 = vmatprep.subr.mxu0 %v3501
  %v3503 = vand.u32 %v2058, 4294901760
  %v3504 = vsub.f32 %v2058, %v3503
  %3505 = vmatpush1.msra.mxu0 %v3504
  %v3506 = vand.u32 %v2063, 4294901760
  %v3507 = vsub.f32 %v2063, %v3506
  %3508 = vmatprep.subr.mxu0 %v3507
  %v3509 = vand.u32 %v2062, 4294901760
  %v3510 = vsub.f32 %v2062, %v3509
  %3511 = vmatpush1.msra.mxu0 %v3510
  %v3512 = vand.u32 %v2091, 4294901760
  %v3513 = vsub.f32 %v2091, %v3512
  %3514 = vmatprep.subr.mxu0 %v3513
  %v3515 = vand.u32 %v2090, 4294901760
  %v3516 = vsub.f32 %v2090, %v3515
  %3517 = vmatpush1.msra.mxu0 %v3516
  %v3518 = vand.u32 %v2095, 4294901760
  %v3519 = vsub.f32 %v2095, %v3518
  %3520 = vmatprep.subr.mxu0 %v3519
  %v3521 = vand.u32 %v2094, 4294901760
  %v3522 = vsub.f32 %v2094, %v3521
  %3523 = vmatpush1.msra.mxu0 %v3522
  %v3524 = vand.u32 %v2123, 4294901760
  %v3525 = vsub.f32 %v2123, %v3524
  %3526 = vmatprep.subr.mxu0 %v3525
  %v3527 = vand.u32 %v2122, 4294901760
  %v3528 = vsub.f32 %v2122, %v3527
  %3529 = vmatpush1.msra.mxu0 %v3528
  %v3530 = vand.u32 %v2127, 4294901760
  %v3531 = vsub.f32 %v2127, %v3530
  %3532 = vmatprep.subr.mxu0 %v3531
  %v3533 = vand.u32 %v2126, 4294901760
  %v3534 = vsub.f32 %v2126, %v3533
  %3535 = vmatpush1.msra.mxu0 %v3534
  %3536 = vmatprep.subr.mxu0 0.0
  %3537 = vmatpush1.msra.mxu0 0.0
  %3538 = vmatprep.subr.mxu0 0.0
  %3539 = vmatpush1.msra.mxu0 0.0
  %3540 = vmatprep.subr.mxu0 0.0
  %3541 = vmatpush1.msra.mxu0 0.0
  %3542 = vmatprep.subr.mxu0 0.0
  %3543 = vmatpush1.msra.mxu0 0.0
  %3544 = vmatprep.subr.mxu0 0.0
  %3545 = vmatpush1.msra.mxu0 0.0
  %3546 = vmatprep.subr.mxu0 0.0
  %3547 = vmatpush1.msra.mxu0 0.0
  %3548 = vmatprep.subr.mxu0 0.0
  %3549 = vmatpush1.msra.mxu0 0.0
  %3550 = vmatprep.subr.mxu0 0.0
  %3551 = vmatpush1.msra.mxu0 0.0
  %3552 = vmatprep.subr.mxu0 0.0
  %3553 = vmatpush1.msra.mxu0 0.0
  %3554 = vmatprep.subr.mxu0 0.0
  %3555 = vmatpush1.msra.mxu0 0.0
  %3556 = vmatprep.subr.mxu0 0.0
  %3557 = vmatpush1.msra.mxu0 0.0
  %3558 = vmatprep.subr.mxu0 0.0
  %3559 = vmatpush1.msra.mxu0 0.0
  %3560 = vmatprep.subr.mxu0 0.0
  %3561 = vmatpush1.msra.mxu0 0.0
  %3562 = vmatprep.subr.mxu0 0.0
  %3563 = vmatpush1.msra.mxu0 0.0
  %v3564 = vand.u32 %v2136, 4294901760
  %v3565 = vsub.f32 %v2136, %v3564
  %3566 = vmatprep.mubr.f32.mxu0 %v3565
  %v3567 = vand.u32 %v1870, 4294901760
  %v3568 = vsub.f32 %v1870, %v3567
  %3569 = vmatmul.mubr.f32.gmra.mrb[0].mxu0 %v3568
  %v3570 = vpop.f32.mrb[0].mxu0
  %v3571 = vadd.f32 %v3424, %v3570
  %v3572 = vpop.f32.mrb[0].mxu0
  %v3573 = vadd.f32 %v3426, %v3572
  %3574 = vdwg.mxu0
  %v3575 = vand.u32 %v1899, 4294901760
  %3576 = vmatprep.subr.mxu0 %v3575
  %v3577 = vand.u32 %v1898, 4294901760
  %3578 = vmatpush1.msra.mxu0 %v3577
  %v3579 = vand.u32 %v1903, 4294901760
  %3580 = vmatprep.subr.mxu0 %v3579
  %v3581 = vand.u32 %v1902, 4294901760
  %3582 = vmatpush1.msra.mxu0 %v3581
  %v3583 = vand.u32 %v1931, 4294901760
  %3584 = vmatprep.subr.mxu0 %v3583
  %v3585 = vand.u32 %v1930, 4294901760
  %3586 = vmatpush1.msra.mxu0 %v3585
  %v3587 = vand.u32 %v1935, 4294901760
  %3588 = vmatprep.subr.mxu0 %v3587
  %v3589 = vand.u32 %v1934, 4294901760
  %3590 = vmatpush1.msra.mxu0 %v3589
  %v3591 = vand.u32 %v1963, 4294901760
  %3592 = vmatprep.subr.mxu0 %v3591
  %v3593 = vand.u32 %v1962, 4294901760
  %3594 = vmatpush1.msra.mxu0 %v3593
  %v3595 = vand.u32 %v1967, 4294901760
  %3596 = vmatprep.subr.mxu0 %v3595
  %v3597 = vand.u32 %v1966, 4294901760
  %3598 = vmatpush1.msra.mxu0 %v3597
  %v3599 = vand.u32 %v1995, 4294901760
  %3600 = vmatprep.subr.mxu0 %v3599
  %v3601 = vand.u32 %v1994, 4294901760
  %3602 = vmatpush1.msra.mxu0 %v3601
  %v3603 = vand.u32 %v1999, 4294901760
  %3604 = vmatprep.subr.mxu0 %v3603
  %v3605 = vand.u32 %v1998, 4294901760
  %3606 = vmatpush1.msra.mxu0 %v3605
  %v3607 = vand.u32 %v1865, 4294901760
  %3608 = vmatprep.subr.mxu0 %v3607
  %v3609 = vand.u32 %v1864, 4294901760
  %3610 = vmatpush1.msra.mxu0 %v3609
  %v3611 = vand.u32 %v1869, 4294901760
  %3612 = vmatprep.subr.mxu0 %v3611
  %v3613 = vand.u32 %v1868, 4294901760
  %3614 = vmatpush1.msra.mxu0 %v3613
  %v3615 = vand.u32 %v2027, 4294901760
  %3616 = vmatprep.subr.mxu0 %v3615
  %v3617 = vand.u32 %v2026, 4294901760
  %3618 = vmatpush1.msra.mxu0 %v3617
  %v3619 = vand.u32 %v2031, 4294901760
  %3620 = vmatprep.subr.mxu0 %v3619
  %v3621 = vand.u32 %v2030, 4294901760
  %3622 = vmatpush1.msra.mxu0 %v3621
  %v3623 = vand.u32 %v2059, 4294901760
  %3624 = vmatprep.subr.mxu0 %v3623
  %v3625 = vand.u32 %v2058, 4294901760
  %3626 = vmatpush1.msra.mxu0 %v3625
  %v3627 = vand.u32 %v2063, 4294901760
  %3628 = vmatprep.subr.mxu0 %v3627
  %v3629 = vand.u32 %v2062, 4294901760
  %3630 = vmatpush1.msra.mxu0 %v3629
  %v3631 = vand.u32 %v2091, 4294901760
  %3632 = vmatprep.subr.mxu0 %v3631
  %v3633 = vand.u32 %v2090, 4294901760
  %3634 = vmatpush1.msra.mxu0 %v3633
  %v3635 = vand.u32 %v2095, 4294901760
  %3636 = vmatprep.subr.mxu0 %v3635
  %v3637 = vand.u32 %v2094, 4294901760
  %3638 = vmatpush1.msra.mxu0 %v3637
  %v3639 = vand.u32 %v2123, 4294901760
  %3640 = vmatprep.subr.mxu0 %v3639
  %v3641 = vand.u32 %v2122, 4294901760
  %3642 = vmatpush1.msra.mxu0 %v3641
  %v3643 = vand.u32 %v2127, 4294901760
  %3644 = vmatprep.subr.mxu0 %v3643
  %v3645 = vand.u32 %v2126, 4294901760
  %3646 = vmatpush1.msra.mxu0 %v3645
  %3647 = vmatprep.subr.mxu0 0.0
  %3648 = vmatpush1.msra.mxu0 0.0
  %3649 = vmatprep.subr.mxu0 0.0
  %3650 = vmatpush1.msra.mxu0 0.0
  %3651 = vmatprep.subr.mxu0 0.0
  %3652 = vmatpush1.msra.mxu0 0.0
  %3653 = vmatprep.subr.mxu0 0.0
  %3654 = vmatpush1.msra.mxu0 0.0
  %3655 = vmatprep.subr.mxu0 0.0
  %3656 = vmatpush1.msra.mxu0 0.0
  %3657 = vmatprep.subr.mxu0 0.0
  %3658 = vmatpush1.msra.mxu0 0.0
  %3659 = vmatprep.subr.mxu0 0.0
  %3660 = vmatpush1.msra.mxu0 0.0
  %3661 = vmatprep.subr.mxu0 0.0
  %3662 = vmatpush1.msra.mxu0 0.0
  %3663 = vmatprep.subr.mxu0 0.0
  %3664 = vmatpush1.msra.mxu0 0.0
  %3665 = vmatprep.subr.mxu0 0.0
  %3666 = vmatpush1.msra.mxu0 0.0
  %3667 = vmatprep.subr.mxu0 0.0
  %3668 = vmatpush1.msra.mxu0 0.0
  %3669 = vmatprep.subr.mxu0 0.0
  %3670 = vmatpush1.msra.mxu0 0.0
  %3671 = vmatprep.subr.mxu0 0.0
  %3672 = vmatpush1.msra.mxu0 0.0
  %3673 = vmatprep.subr.mxu0 0.0
  %3674 = vmatpush1.msra.mxu0 0.0
  %v3675 = vand.u32 %v2136, 4294901760
  %v3676 = vsub.f32 %v2136, %v3675
  %v3677 = vand.u32 %v3676, 4294901760
  %3678 = vmatprep.mubr.f32.mxu0 %v3677
  %v3679 = vand.u32 %v1870, 4294901760
  %v3680 = vsub.f32 %v1870, %v3679
  %v3681 = vand.u32 %v3680, 4294901760
  %3682 = vmatmul.mubr.f32.gmra.mrb[0].mxu0 %v3681
  %v3683 = vpop.f32.mrb[0].mxu0
  %v3684 = vadd.f32 %v3571, %v3683
  %v3685 = vpop.f32.mrb[0].mxu0
  %v3686 = vadd.f32 %v3573, %v3685
  %3687 = vdwg.mxu0
  %v3688 = vand.u32 %v1899, 4294901760
  %v3689 = vsub.f32 %v1899, %v3688
  %v3690 = vand.u32 %v3689, 4294901760
  %3691 = vmatprep.subr.mxu0 %v3690
  %v3692 = vand.u32 %v1898, 4294901760
  %v3693 = vsub.f32 %v1898, %v3692
  %v3694 = vand.u32 %v3693, 4294901760
  %3695 = vmatpush1.msra.mxu0 %v3694
  %v3696 = vand.u32 %v1903, 4294901760
  %v3697 = vsub.f32 %v1903, %v3696
  %v3698 = vand.u32 %v3697, 4294901760
  %3699 = vmatprep.subr.mxu0 %v3698
  %v3700 = vand.u32 %v1902, 4294901760
  %v3701 = vsub.f32 %v1902, %v3700
  %v3702 = vand.u32 %v3701, 4294901760
  %3703 = vmatpush1.msra.mxu0 %v3702
  %v3704 = vand.u32 %v1931, 4294901760
  %v3705 = vsub.f32 %v1931, %v3704
  %v3706 = vand.u32 %v3705, 4294901760
  %3707 = vmatprep.subr.mxu0 %v3706
  %v3708 = vand.u32 %v1930, 4294901760
  %v3709 = vsub.f32 %v1930, %v3708
  %v3710 = vand.u32 %v3709, 4294901760
  %3711 = vmatpush1.msra.mxu0 %v3710
  %v3712 = vand.u32 %v1935, 4294901760
  %v3713 = vsub.f32 %v1935, %v3712
  %v3714 = vand.u32 %v3713, 4294901760
  %3715 = vmatprep.subr.mxu0 %v3714
  %v3716 = vand.u32 %v1934, 4294901760
  %v3717 = vsub.f32 %v1934, %v3716
  %v3718 = vand.u32 %v3717, 4294901760
  %3719 = vmatpush1.msra.mxu0 %v3718
  %v3720 = vand.u32 %v1963, 4294901760
  %v3721 = vsub.f32 %v1963, %v3720
  %v3722 = vand.u32 %v3721, 4294901760
  %3723 = vmatprep.subr.mxu0 %v3722
  %v3724 = vand.u32 %v1962, 4294901760
  %v3725 = vsub.f32 %v1962, %v3724
  %v3726 = vand.u32 %v3725, 4294901760
  %3727 = vmatpush1.msra.mxu0 %v3726
  %v3728 = vand.u32 %v1967, 4294901760
  %v3729 = vsub.f32 %v1967, %v3728
  %v3730 = vand.u32 %v3729, 4294901760
  %3731 = vmatprep.subr.mxu0 %v3730
  %v3732 = vand.u32 %v1966, 4294901760
  %v3733 = vsub.f32 %v1966, %v3732
  %v3734 = vand.u32 %v3733, 4294901760
  %3735 = vmatpush1.msra.mxu0 %v3734
  %v3736 = vand.u32 %v1995, 4294901760
  %v3737 = vsub.f32 %v1995, %v3736
  %v3738 = vand.u32 %v3737, 4294901760
  %3739 = vmatprep.subr.mxu0 %v3738
  %v3740 = vand.u32 %v1994, 4294901760
  %v3741 = vsub.f32 %v1994, %v3740
  %v3742 = vand.u32 %v3741, 4294901760
  %3743 = vmatpush1.msra.mxu0 %v3742
  %v3744 = vand.u32 %v1999, 4294901760
  %v3745 = vsub.f32 %v1999, %v3744
  %v3746 = vand.u32 %v3745, 4294901760
  %3747 = vmatprep.subr.mxu0 %v3746
  %v3748 = vand.u32 %v1998, 4294901760
  %v3749 = vsub.f32 %v1998, %v3748
  %v3750 = vand.u32 %v3749, 4294901760
  %3751 = vmatpush1.msra.mxu0 %v3750
  %v3752 = vand.u32 %v1865, 4294901760
  %v3753 = vsub.f32 %v1865, %v3752
  %v3754 = vand.u32 %v3753, 4294901760
  %3755 = vmatprep.subr.mxu0 %v3754
  %v3756 = vand.u32 %v1864, 4294901760
  %v3757 = vsub.f32 %v1864, %v3756
  %v3758 = vand.u32 %v3757, 4294901760
  %3759 = vmatpush1.msra.mxu0 %v3758
  %v3760 = vand.u32 %v1869, 4294901760
  %v3761 = vsub.f32 %v1869, %v3760
  %v3762 = vand.u32 %v3761, 4294901760
  %3763 = vmatprep.subr.mxu0 %v3762
  %v3764 = vand.u32 %v1868, 4294901760
  %v3765 = vsub.f32 %v1868, %v3764
  %v3766 = vand.u32 %v3765, 4294901760
  %3767 = vmatpush1.msra.mxu0 %v3766
  %v3768 = vand.u32 %v2027, 4294901760
  %v3769 = vsub.f32 %v2027, %v3768
  %v3770 = vand.u32 %v3769, 4294901760
  %3771 = vmatprep.subr.mxu0 %v3770
  %v3772 = vand.u32 %v2026, 4294901760
  %v3773 = vsub.f32 %v2026, %v3772
  %v3774 = vand.u32 %v3773, 4294901760
  %3775 = vmatpush1.msra.mxu0 %v3774
  %v3776 = vand.u32 %v2031, 4294901760
  %v3777 = vsub.f32 %v2031, %v3776
  %v3778 = vand.u32 %v3777, 4294901760
  %3779 = vmatprep.subr.mxu0 %v3778
  %v3780 = vand.u32 %v2030, 4294901760
  %v3781 = vsub.f32 %v2030, %v3780
  %v3782 = vand.u32 %v3781, 4294901760
  %3783 = vmatpush1.msra.mxu0 %v3782
  %v3784 = vand.u32 %v2059, 4294901760
  %v3785 = vsub.f32 %v2059, %v3784
  %v3786 = vand.u32 %v3785, 4294901760
  %3787 = vmatprep.subr.mxu0 %v3786
  %v3788 = vand.u32 %v2058, 4294901760
  %v3789 = vsub.f32 %v2058, %v3788
  %v3790 = vand.u32 %v3789, 4294901760
  %3791 = vmatpush1.msra.mxu0 %v3790
  %v3792 = vand.u32 %v2063, 4294901760
  %v3793 = vsub.f32 %v2063, %v3792
  %v3794 = vand.u32 %v3793, 4294901760
  %3795 = vmatprep.subr.mxu0 %v3794
  %v3796 = vand.u32 %v2062, 4294901760
  %v3797 = vsub.f32 %v2062, %v3796
  %v3798 = vand.u32 %v3797, 4294901760
  %3799 = vmatpush1.msra.mxu0 %v3798
  %v3800 = vand.u32 %v2091, 4294901760
  %v3801 = vsub.f32 %v2091, %v3800
  %v3802 = vand.u32 %v3801, 4294901760
  %3803 = vmatprep.subr.mxu0 %v3802
  %v3804 = vand.u32 %v2090, 4294901760
  %v3805 = vsub.f32 %v2090, %v3804
  %v3806 = vand.u32 %v3805, 4294901760
  %3807 = vmatpush1.msra.mxu0 %v3806
  %v3808 = vand.u32 %v2095, 4294901760
  %v3809 = vsub.f32 %v2095, %v3808
  %v3810 = vand.u32 %v3809, 4294901760
  %3811 = vmatprep.subr.mxu0 %v3810
  %v3812 = vand.u32 %v2094, 4294901760
  %v3813 = vsub.f32 %v2094, %v3812
  %v3814 = vand.u32 %v3813, 4294901760
  %3815 = vmatpush1.msra.mxu0 %v3814
  %v3816 = vand.u32 %v2123, 4294901760
  %v3817 = vsub.f32 %v2123, %v3816
  %v3818 = vand.u32 %v3817, 4294901760
  %3819 = vmatprep.subr.mxu0 %v3818
  %v3820 = vand.u32 %v2122, 4294901760
  %v3821 = vsub.f32 %v2122, %v3820
  %v3822 = vand.u32 %v3821, 4294901760
  %3823 = vmatpush1.msra.mxu0 %v3822
  %v3824 = vand.u32 %v2127, 4294901760
  %v3825 = vsub.f32 %v2127, %v3824
  %v3826 = vand.u32 %v3825, 4294901760
  %3827 = vmatprep.subr.mxu0 %v3826
  %v3828 = vand.u32 %v2126, 4294901760
  %v3829 = vsub.f32 %v2126, %v3828
  %v3830 = vand.u32 %v3829, 4294901760
  %3831 = vmatpush1.msra.mxu0 %v3830
  %3832 = vmatprep.subr.mxu0 0.0
  %3833 = vmatpush1.msra.mxu0 0.0
  %3834 = vmatprep.subr.mxu0 0.0
  %3835 = vmatpush1.msra.mxu0 0.0
  %3836 = vmatprep.subr.mxu0 0.0
  %3837 = vmatpush1.msra.mxu0 0.0
  %3838 = vmatprep.subr.mxu0 0.0
  %3839 = vmatpush1.msra.mxu0 0.0
  %3840 = vmatprep.subr.mxu0 0.0
  %3841 = vmatpush1.msra.mxu0 0.0
  %3842 = vmatprep.subr.mxu0 0.0
  %3843 = vmatpush1.msra.mxu0 0.0
  %3844 = vmatprep.subr.mxu0 0.0
  %3845 = vmatpush1.msra.mxu0 0.0
  %3846 = vmatprep.subr.mxu0 0.0
  %3847 = vmatpush1.msra.mxu0 0.0
  %3848 = vmatprep.subr.mxu0 0.0
  %3849 = vmatpush1.msra.mxu0 0.0
  %3850 = vmatprep.subr.mxu0 0.0
  %3851 = vmatpush1.msra.mxu0 0.0
  %3852 = vmatprep.subr.mxu0 0.0
  %3853 = vmatpush1.msra.mxu0 0.0
  %3854 = vmatprep.subr.mxu0 0.0
  %3855 = vmatpush1.msra.mxu0 0.0
  %3856 = vmatprep.subr.mxu0 0.0
  %3857 = vmatpush1.msra.mxu0 0.0
  %3858 = vmatprep.subr.mxu0 0.0
  %3859 = vmatpush1.msra.mxu0 0.0
  %v3860 = vand.u32 %v2136, 4294901760
  %3861 = vmatprep.mubr.f32.mxu0 %v3860
  %v3862 = vand.u32 %v1870, 4294901760
  %3863 = vmatmul.mubr.f32.gmra.mrb[0].mxu0 %v3862
  %v3864 = vpop.f32.mrb[0].mxu0
  %v3865 = vadd.f32 %v3684, %v3864
  %v3866 = vpop.f32.mrb[0].mxu0
  %v3867 = vadd.f32 %v3686, %v3866
  %3868 = vdwg.mxu0
  %v3869 = vand.u32 %v1899, 4294901760
  %3870 = vmatprep.subr.mxu0 %v3869
  %v3871 = vand.u32 %v1898, 4294901760
  %3872 = vmatpush1.msra.mxu0 %v3871
  %v3873 = vand.u32 %v1903, 4294901760
  %3874 = vmatprep.subr.mxu0 %v3873
  %v3875 = vand.u32 %v1902, 4294901760
  %3876 = vmatpush1.msra.mxu0 %v3875
  %v3877 = vand.u32 %v1931, 4294901760
  %3878 = vmatprep.subr.mxu0 %v3877
  %v3879 = vand.u32 %v1930, 4294901760
  %3880 = vmatpush1.msra.mxu0 %v3879
  %v3881 = vand.u32 %v1935, 4294901760
  %3882 = vmatprep.subr.mxu0 %v3881
  %v3883 = vand.u32 %v1934, 4294901760
  %3884 = vmatpush1.msra.mxu0 %v3883
  %v3885 = vand.u32 %v1963, 4294901760
  %3886 = vmatprep.subr.mxu0 %v3885
  %v3887 = vand.u32 %v1962, 4294901760
  %3888 = vmatpush1.msra.mxu0 %v3887
  %v3889 = vand.u32 %v1967, 4294901760
  %3890 = vmatprep.subr.mxu0 %v3889
  %v3891 = vand.u32 %v1966, 4294901760
  %3892 = vmatpush1.msra.mxu0 %v3891
  %v3893 = vand.u32 %v1995, 4294901760
  %3894 = vmatprep.subr.mxu0 %v3893
  %v3895 = vand.u32 %v1994, 4294901760
  %3896 = vmatpush1.msra.mxu0 %v3895
  %v3897 = vand.u32 %v1999, 4294901760
  %3898 = vmatprep.subr.mxu0 %v3897
  %v3899 = vand.u32 %v1998, 4294901760
  %3900 = vmatpush1.msra.mxu0 %v3899
  %v3901 = vand.u32 %v1865, 4294901760
  %3902 = vmatprep.subr.mxu0 %v3901
  %v3903 = vand.u32 %v1864, 4294901760
  %3904 = vmatpush1.msra.mxu0 %v3903
  %v3905 = vand.u32 %v1869, 4294901760
  %3906 = vmatprep.subr.mxu0 %v3905
  %v3907 = vand.u32 %v1868, 4294901760
  %3908 = vmatpush1.msra.mxu0 %v3907
  %v3909 = vand.u32 %v2027, 4294901760
  %3910 = vmatprep.subr.mxu0 %v3909
  %v3911 = vand.u32 %v2026, 4294901760
  %3912 = vmatpush1.msra.mxu0 %v3911
  %v3913 = vand.u32 %v2031, 4294901760
  %3914 = vmatprep.subr.mxu0 %v3913
  %v3915 = vand.u32 %v2030, 4294901760
  %3916 = vmatpush1.msra.mxu0 %v3915
  %v3917 = vand.u32 %v2059, 4294901760
  %3918 = vmatprep.subr.mxu0 %v3917
  %v3919 = vand.u32 %v2058, 4294901760
  %3920 = vmatpush1.msra.mxu0 %v3919
  %v3921 = vand.u32 %v2063, 4294901760
  %3922 = vmatprep.subr.mxu0 %v3921
  %v3923 = vand.u32 %v2062, 4294901760
  %3924 = vmatpush1.msra.mxu0 %v3923
  %v3925 = vand.u32 %v2091, 4294901760
  %3926 = vmatprep.subr.mxu0 %v3925
  %v3927 = vand.u32 %v2090, 4294901760
  %3928 = vmatpush1.msra.mxu0 %v3927
  %v3929 = vand.u32 %v2095, 4294901760
  %3930 = vmatprep.subr.mxu0 %v3929
  %v3931 = vand.u32 %v2094, 4294901760
  %3932 = vmatpush1.msra.mxu0 %v3931
  %v3933 = vand.u32 %v2123, 4294901760
  %3934 = vmatprep.subr.mxu0 %v3933
  %v3935 = vand.u32 %v2122, 4294901760
  %3936 = vmatpush1.msra.mxu0 %v3935
  %v3937 = vand.u32 %v2127, 4294901760
  %3938 = vmatprep.subr.mxu0 %v3937
  %v3939 = vand.u32 %v2126, 4294901760
  %3940 = vmatpush1.msra.mxu0 %v3939
  %3941 = vmatprep.subr.mxu0 0.0
  %3942 = vmatpush1.msra.mxu0 0.0
  %3943 = vmatprep.subr.mxu0 0.0
  %3944 = vmatpush1.msra.mxu0 0.0
  %3945 = vmatprep.subr.mxu0 0.0
  %3946 = vmatpush1.msra.mxu0 0.0
  %3947 = vmatprep.subr.mxu0 0.0
  %3948 = vmatpush1.msra.mxu0 0.0
  %3949 = vmatprep.subr.mxu0 0.0
  %3950 = vmatpush1.msra.mxu0 0.0
  %3951 = vmatprep.subr.mxu0 0.0
  %3952 = vmatpush1.msra.mxu0 0.0
  %3953 = vmatprep.subr.mxu0 0.0
  %3954 = vmatpush1.msra.mxu0 0.0
  %3955 = vmatprep.subr.mxu0 0.0
  %3956 = vmatpush1.msra.mxu0 0.0
  %3957 = vmatprep.subr.mxu0 0.0
  %3958 = vmatpush1.msra.mxu0 0.0
  %3959 = vmatprep.subr.mxu0 0.0
  %3960 = vmatpush1.msra.mxu0 0.0
  %3961 = vmatprep.subr.mxu0 0.0
  %3962 = vmatpush1.msra.mxu0 0.0
  %3963 = vmatprep.subr.mxu0 0.0
  %3964 = vmatpush1.msra.mxu0 0.0
  %3965 = vmatprep.subr.mxu0 0.0
  %3966 = vmatpush1.msra.mxu0 0.0
  %3967 = vmatprep.subr.mxu0 0.0
  %3968 = vmatpush1.msra.mxu0 0.0
  %v3969 = vand.u32 %v2136, 4294901760
  %3970 = vmatprep.mubr.f32.mxu0 %v3969
  %v3971 = vand.u32 %v1870, 4294901760
  %3972 = vmatmul.mubr.f32.gmra.mrb[0].mxu0 %v3971
  %v3973 = vpop.f32.mrb[0].mxu0
  %v3974 = vadd.f32 %v3865, %v3973
  %v3975 = vpop.f32.mrb[0].mxu0
  %v3976 = vadd.f32 %v3867, %v3975
  %3977 = vdwg.mxu0
  %v3980 = vcombine.low %v3054, %v3056
  %3982 = vst [vmem:[%s6] sm:$0xff] %v3980
  %v3985 = vcombine.low %v3974, %v3976
  %s3987 = scalar_lea.vmem %s6, 8
  %3988 = vst [vmem:[%s3987] sm:$0xff] %v3985
  // Predicated region
  $region26: #{inverted_bottleneck.1} parent=0 // pred_check
    _
  $region27: #{inverted_bottleneck.1} parent=0 // pred_check_branch
    %3990 = sbr.rel (0) target = $region29
  $region28: #{inverted_bottleneck.1} parent=0 // pred_region
    _
  $region29: #{inverted_bottleneck.1} parent=0 // pred_fallthru
    _
  // Predicated region
  $region30: #{inverted_bottleneck.1} parent=0 // pred_check
    _
  $region31: #{inverted_bottleneck.1} parent=0 // pred_check_branch
    %3992 = sbr.rel (0) target = $region33
  $region32: #{inverted_bottleneck.1} parent=0 // pred_region
    _
  $region33: #{inverted_bottleneck.1} parent=0 // pred_fallthru
    _

</llo_original>
